<compile_context>
chip_gen: v7x
topology: tpu7x:2x2x1
jax: 0.10.0
libtpu: 0.0.40
codegen_flags: <defaults>
</compile_context>

<pallas_src>
import math

import jax
import jax.numpy as jnp
from jax.experimental import pallas as pl
from jax.experimental.pallas import tpu as pltpu

# bf16 MXU operands (918/996 TF/s on v6e/v7x); all statistics / accumulation in f32.
MATMUL_DTYPE = jnp.bfloat16
NEG_INF = -1e30      # finite sentinel: keeps softmax NaN-free even for fully-masked rows
LN_EPS = 1e-5
VMEM_LIMIT = 32 * 1024 * 1024   # explicit scoped-VMEM request (safe on v5e/v6e/v7x)


def _row_tile(n):
    """Row tile (multiple of 8) dividing n.  Prefer >=8 grid steps (4 per TC on
    v7x) with 256-512 row tiles; fall back to >=2 steps; else the full extent."""
    for tm in (512, 256, 128, 64, 32, 16, 8):
        if n % tm == 0 and n // tm >= 8:
            return tm
    for tm in (512, 256, 128, 64, 32, 16, 8):
        if n % tm == 0 and n // tm >= 2:
            return tm
    return n


def _ff_tile(f):
    """Tile of the feed-forward hidden dim (lane-dense multiple of 128, or full)."""
    if f <= 1024:
        return f
    for tf in (1024, 512, 256, 128):
        if f % tf == 0:
            return tf
    return f


def _mosaic(sem):
    return pltpu.CompilerParams(dimension_semantics=sem, vmem_limit_bytes=VMEM_LIMIT)


# ----------------------------------------------------------------------------
# Fused matmul kernels
# ----------------------------------------------------------------------------
def _linear(x, w, b):
    """y = x @ w + b   (w already [Din, Dout], bf16); row-tiled, weights resident.
    TODO(synk): pipeline_mode=pl.Buffered(1) on the constant weight/bias blocks
    would halve their resident VMEM (matters on v7x); left off for portability."""
    N, Din = x.shape
    Dout = w.shape[1]
    tm = _row_tile(N)

    def kernel(x_ref, w_ref, b_ref, o_ref):
        y = jnp.dot(x_ref[...].astype(MATMUL_DTYPE),
                    w_ref[...].astype(MATMUL_DTYPE),
                    preferred_element_type=jnp.float32)
        o_ref[...] = y + b_ref[...]

    return pl.pallas_call(
        kernel,
        grid=(N // tm,),
        in_specs=[
            pl.BlockSpec((tm, Din), lambda i: (i, 0)),
            pl.BlockSpec((Din, Dout), lambda i: (0, 0)),
            pl.BlockSpec((1, Dout), lambda i: (0, 0)),
        ],
        out_specs=pl.BlockSpec((tm, Dout), lambda i: (i, 0)),
        out_shape=jax.ShapeDtypeStruct((N, Dout), jnp.float32),
        compiler_params=_mosaic(("parallel",)),
    )(x, w, b.reshape(1, Dout))


def _layernorm(z, g, b):
    mean = jnp.mean(z, axis=-1, keepdims=True)
    var = jnp.mean((z - mean) ** 2, axis=-1, keepdims=True)
    return (z - mean) * jax.lax.rsqrt(var + LN_EPS) * g + b


def _linear_residual_ln(x, res, w, b, gamma, beta):
    """out = LayerNorm(res + x @ w + b)  — matmul, residual add and LN fused (f32 stats)."""
    N, Din = x.shape
    Dout = w.shape[1]
    tm = _row_tile(N)

    def kernel(x_ref, r_ref, w_ref, b_ref, g_ref, be_ref, o_ref):
        y = jnp.dot(x_ref[...].astype(MATMUL_DTYPE),
                    w_ref[...].astype(MATMUL_DTYPE),
                    preferred_element_type=jnp.float32) + b_ref[...]
        o_ref[...] = _layernorm(r_ref[...] + y, g_ref[...], be_ref[...])

    return pl.pallas_call(
        kernel,
        grid=(N // tm,),
        in_specs=[
            pl.BlockSpec((tm, Din), lambda i: (i, 0)),
            pl.BlockSpec((tm, Dout), lambda i: (i, 0)),
            pl.BlockSpec((Din, Dout), lambda i: (0, 0)),
            pl.BlockSpec((1, Dout), lambda i: (0, 0)),
            pl.BlockSpec((1, Dout), lambda i: (0, 0)),
            pl.BlockSpec((1, Dout), lambda i: (0, 0)),
        ],
        out_specs=pl.BlockSpec((tm, Dout), lambda i: (i, 0)),
        out_shape=jax.ShapeDtypeStruct((N, Dout), jnp.float32),
        compiler_params=_mosaic(("parallel",)),
    )(x, res, w, b.reshape(1, Dout), gamma.reshape(1, Dout), beta.reshape(1, Dout))


def _ffn_residual_ln(x, w1, b1, w2, b2, gamma, beta):
    """out = LayerNorm(x + ReLU(x@w1+b1)@w2+b2).
    ff_dim is tiled on a trailing "arbitrary" grid axis with an f32 accumulator,
    so per-step VMEM holds only a (D,tf)/(tf,D) weight slab and a (tm,tf) hidden."""
    N, D = x.shape
    F = w1.shape[1]
    tm = _row_tile(N)
    tf = _ff_tile(F)
    nf = F // tf

    def kernel(x_ref, w1_ref, b1_ref, w2_ref, b2_ref, g_ref, be_ref, o_ref, acc_ref):
        j = pl.program_id(1)

        @pl.when(j == 0)
        def _():
            acc_ref[...] = jnp.zeros_like(acc_ref)

        xv = x_ref[...]
        h = jnp.dot(xv.astype(MATMUL_DTYPE), w1_ref[...].astype(MATMUL_DTYPE),
                    preferred_element_type=jnp.float32) + b1_ref[...]
        h = jnp.maximum(h, 0.0)
        acc_ref[...] += jnp.dot(h.astype(MATMUL_DTYPE), w2_ref[...].astype(MATMUL_DTYPE),
                                preferred_element_type=jnp.float32)

        @pl.when(j == nf - 1)
        def _():
            y = acc_ref[...] + b2_ref[...]
            o_ref[...] = _layernorm(xv + y, g_ref[...], be_ref[...])

    return pl.pallas_call(
        kernel,
        grid=(N // tm, nf),
        in_specs=[
            pl.BlockSpec((tm, D), lambda i, j: (i, 0)),
            pl.BlockSpec((D, tf), lambda i, j: (0, j)),
            pl.BlockSpec((1, tf), lambda i, j: (0, j)),
            pl.BlockSpec((tf, D), lambda i, j: (j, 0)),
            pl.BlockSpec((1, D), lambda i, j: (0, 0)),
            pl.BlockSpec((1, D), lambda i, j: (0, 0)),
            pl.BlockSpec((1, D), lambda i, j: (0, 0)),
        ],
        out_specs=pl.BlockSpec((tm, D), lambda i, j: (i, 0)),
        out_shape=jax.ShapeDtypeStruct((N, D), jnp.float32),
        scratch_shapes=[pltpu.VMEM((tm, D), jnp.float32)],
        compiler_params=_mosaic(("parallel", "arbitrary")),
    )(x, w1, b1.reshape(1, F), w2, b2.reshape(1, D),
      gamma.reshape(1, D), beta.reshape(1, D))


# ----------------------------------------------------------------------------
# Attention kernels (all heads of one batch element per grid step)
# ----------------------------------------------------------------------------
def _self_attention(qkv, pad_add, num_heads):
    """Masked self-attention.  qkv: [B,T,3D] fused projection (Q already scaled);
    pad_add: [B,1,T] additive key-padding mask.  Causal mask is generated in-kernel
    from iota compares.  Returns [B,T,D] only (reference discards the weights).
    TODO(synk): switch to a 2-axis (B, kv_chunk) flash-style grid for long T."""
    B, T, D3 = qkv.shape
    D = D3 // 3
    H = num_heads
    dh = D // H

    def kernel(qkv_ref, p_ref, o_ref):
        xb = qkv_ref[0]                              # [T, 3D] f32
        row = jax.lax.broadcasted_iota(jnp.int32, (T, T), 0)
        col = jax.lax.broadcasted_iota(jnp.int32, (T, T), 1)
        mb = jnp.where(col > row, NEG_INF, 0.0) + p_ref[0]   # [T, T] additive mask
        for h in range(H):                           # static unroll over heads
            qh = xb[:, h * dh:(h + 1) * dh].astype(MATMUL_DTYPE)
            kh = xb[:, D + h * dh:D + (h + 1) * dh].astype(MATMUL_DTYPE)
            vh = xb[:, 2 * D + h * dh:2 * D + (h + 1) * dh].astype(MATMUL_DTYPE)
            s = jax.lax.dot_general(qh, kh, (((1,), (1,)), ((), ())),
                                    preferred_element_type=jnp.float32) + mb
            mx = jnp.max(s, axis=-1, keepdims=True)
            e = jnp.exp(s - mx)
            inv = pl.reciprocal(jnp.sum(e, axis=-1, keepdims=True), approx=True)
            p = e * inv
            # direct per-head store: only one head's [T, dh] result live at a time
            o_ref[0, :, h * dh:(h + 1) * dh] = jnp.dot(
                p.astype(MATMUL_DTYPE), vh, preferred_element_type=jnp.float32)

    return pl.pallas_call(
        kernel,
        grid=(B,),
        in_specs=[
            pl.BlockSpec((1, T, D3), lambda b: (b, 0, 0)),
            pl.BlockSpec((1, 1, T), lambda b: (b, 0, 0)),
        ],
        out_specs=pl.BlockSpec((1, T, D), lambda b: (b, 0, 0)),
        out_shape=jax.ShapeDtypeStruct((B, T, D), jnp.float32),
        compiler_params=_mosaic(("parallel",)),
    )(qkv, pad_add)


def _cross_attention(q, kv, num_heads):
    """Unmasked cross-attention.  q: [B,T,D] (already scaled); kv: [B,S,2D] fused
    K/V projection.  Returns ([B,T,D], weights [B,H,T,S])."""
    B, T, D = q.shape
    S = kv.shape[1]
    H = num_heads
    dh = D // H

    def kernel(q_ref, kv_ref, o_ref, w_ref):
        qb = q_ref[0]                                # [T, D]
        kvb = kv_ref[0]                              # [S, 2D]
        for h in range(H):
            qh = qb[:, h * dh:(h + 1) * dh].astype(MATMUL_DTYPE)
            kh = kvb[:, h * dh:(h + 1) * dh].astype(MATMUL_DTYPE)
            vh = kvb[:, D + h * dh:D + (h + 1) * dh].astype(MATMUL_DTYPE)
            s = jax.lax.dot_general(qh, kh, (((1,), (1,)), ((), ())),
                                    preferred_element_type=jnp.float32)
            mx = jnp.max(s, axis=-1, keepdims=True)
            e = jnp.exp(s - mx)
            inv = pl.reciprocal(jnp.sum(e, axis=-1, keepdims=True), approx=True)
            p = e * inv
            w_ref[0, h] = p
            o_ref[0, :, h * dh:(h + 1) * dh] = jnp.dot(
                p.astype(MATMUL_DTYPE), vh, preferred_element_type=jnp.float32)

    return pl.pallas_call(
        kernel,
        grid=(B,),
        in_specs=[
            pl.BlockSpec((1, T, D), lambda b: (b, 0, 0)),
            pl.BlockSpec((1, S, 2 * D), lambda b: (b, 0, 0)),
        ],
        out_specs=(
            pl.BlockSpec((1, T, D), lambda b: (b, 0, 0)),
            pl.BlockSpec((1, H, T, S), lambda b: (b, 0, 0, 0)),
        ),
        out_shape=(
            jax.ShapeDtypeStruct((B, T, D), jnp.float32),
            jax.ShapeDtypeStruct((B, H, T, S), jnp.float32),
        ),
        compiler_params=_mosaic(("parallel",)),
    )(q, kv)


# ----------------------------------------------------------------------------
# Model pieces (glue in plain JAX, hot paths in the kernels above)
# ----------------------------------------------------------------------------
def _decoder_layer(lp, x_flat, src_flat, pad_add, num_heads, B, T, S, D):
    """x_flat: [B*T, D] batch-major; src_flat: [B*S, D] batch-major encoder features."""
    H = num_heads
    dh = D // H
    scale = 1.0 / math.sqrt(dh)

    # ---- masked self-attention (weights discarded -> no weights output) ----
    sp = lp["self_attn"]
    w_in, b_in = sp["in_proj_weight"], sp["in_proj_bias"]
    # Fold 1/sqrt(dh) into the Q rows; one tiny weight-prep op, not per-token work.
    w_qkv = jnp.concatenate([w_in[:D] * scale, w_in[D:]], axis=0).T.astype(MATMUL_DTYPE)
    b_qkv = jnp.concatenate([b_in[:D] * scale, b_in[D:]])
    qkv = _linear(x_flat, w_qkv, b_qkv).reshape(B, T, 3 * D)          # no transpose
    sa = _self_attention(qkv, pad_add, H).reshape(B * T, D)           # no transpose
    x_flat = _linear_residual_ln(sa, x_flat,
                                 sp["out_proj_weight"].T.astype(MATMUL_DTYPE),
                                 sp["out_proj_bias"],
                                 lp["self_attn_norm"]["gamma"],
                                 lp["self_attn_norm"]["beta"])

    # ---- cross-attention over encoder outputs (weights returned) ----
    cp = lp["cross_attn"]
    w_in, b_in = cp["in_proj_weight"], cp["in_proj_bias"]
    w_q = (w_in[:D] * scale).T.astype(MATMUL_DTYPE)
    b_q = b_in[:D] * scale
    w_kv = w_in[D:].T.astype(MATMUL_DTYPE)
    b_kv = b_in[D:]
    q = _linear(x_flat, w_q, b_q).reshape(B, T, D)                    # no transpose
    kv = _linear(src_flat, w_kv, b_kv).reshape(B, S, 2 * D)           # no transpose
    ca, attns = _cross_attention(q, kv, H)                            # [B,T,D],[B,H,T,S]
    x_flat = _linear_residual_ln(ca.reshape(B * T, D), x_flat,
                                 cp["out_proj_weight"].T.astype(MATMUL_DTYPE),
                                 cp["out_proj_bias"],
                                 lp["multihead_norm"]["gamma"],
                                 lp["multihead_norm"]["beta"])

    # ---- feed-forward, fused with residual + LN (dropout = identity) ----
    x_flat = _ffn_residual_ln(x_flat,
                              lp["ff1_w"].T.astype(MATMUL_DTYPE), lp["ff1_b"],
                              lp["ff2_w"].T.astype(MATMUL_DTYPE), lp["ff2_b"],
                              lp["ff_norm"]["gamma"], lp["ff_norm"]["beta"])
    return x_flat, attns


def decoder_forward(params, tgt_cptn, src_img, num_heads, pad_id):
    """tgt_cptn: [B, T] int32 tokens.  src_img: [S, B, D] encoder features.
    Returns ([T, B, D], [L, B, H, T, S]) matching the PyTorch reference."""
    B, T = tgt_cptn.shape
    D = params["cptn_emb"].shape[1]
    S = src_img.shape[0]

    # Finite sentinel instead of -inf keeps fully-masked softmax rows NaN-free.
    pad_add = jnp.where(tgt_cptn == pad_id, NEG_INF, 0.0).astype(jnp.float32)  # [B, T]
    pad_add = pad_add[:, None, :]                                              # [B, 1, T]

    emb = jnp.take(params["cptn_emb"], tgt_cptn, axis=0)                       # [B, T, D]
    # NOTE: reproduces the reference exactly — PositionalEncoding is applied AFTER
    # the permute, so pe[:, :x.size(1)] indexes the table by the BATCH index.
    x = emb * math.sqrt(D) + params["pos_pe"][:B][:, None, :]                  # [B, T, D]
    x_flat = x.reshape(B * T, D)
    # dropout = identity (eval-mode)

    # One-time layout change of encoder features (instead of once per layer).
    src_flat = jnp.transpose(src_img, (1, 0, 2)).reshape(B * S, D)             # [B*S, D]

    attns_all = []
    for lp in params["layers"]:
        x_flat, attns = _decoder_layer(lp, x_flat, src_flat, pad_add,
                                       num_heads, B, T, S, D)
        attns_all.append(attns)

    out = x_flat.reshape(B, T, D).transpose(1, 0, 2)                           # [T, B, D]
    # TODO(synk): write per-layer attns into a preallocated [L,...] buffer via
    # input_output_aliases to avoid the extra jnp.stack copy at large shapes.
    return out, jnp.stack(attns_all)


# ----------------------------------------------------------------------------
# Deterministic parameter construction (torch-layout f32 weights)
# ----------------------------------------------------------------------------
def init_params(key, vocab_size, d_model, num_heads, ff_dim, num_layers,
                max_len, pad_id):
    del num_heads
    keys = jax.random.split(key, 1 + num_layers)

    emb = 0.1 * jax.random.normal(keys[0], (vocab_size, d_model), jnp.float32)
    emb = emb.at[pad_id].set(0.0)   # padding_idx row is zero

    position = jnp.arange(max_len, dtype=jnp.float32)[:, None]
    div_term = jnp.exp(jnp.arange(0, d_model, 2, dtype=jnp.float32)
                       * (-math.log(10000.0) / d_model))
    pe = jnp.zeros((max_len, d_model), jnp.float32)
    pe = pe.at[:, 0::2].set(jnp.sin(position * div_term))
    pe = pe.at[:, 1::2].set(jnp.cos(position * div_term))

    def mha_params(k):
        k1, k2 = jax.random.split(k)
        return {
            "in_proj_weight": 0.05 * jax.random.normal(k1, (3 * d_model, d_model), jnp.float32),
            "in_proj_bias": jnp.zeros((3 * d_model,), jnp.float32),
            "out_proj_weight": 0.05 * jax.random.normal(k2, (d_model, d_model), jnp.float32),
            "out_proj_bias": jnp.zeros((d_model,), jnp.float32),
        }

    def ln_params():
        return {"gamma": jnp.ones((d_model,), jnp.float32),
                "beta": jnp.zeros((d_model,), jnp.float32)}

    layers = []
    for l in range(num_layers):
        ks = jax.random.split(keys[1 + l], 4)
        layers.append({
            "self_attn": mha_params(ks[0]),
            "cross_attn": mha_params(ks[1]),
            "self_attn_norm": ln_params(),
            "multihead_norm": ln_params(),
            "ff1_w": 0.05 * jax.random.normal(ks[2], (ff_dim, d_model), jnp.float32),
            "ff1_b": jnp.zeros((ff_dim,), jnp.float32),
            "ff2_w": 0.05 * jax.random.normal(ks[3], (d_model, ff_dim), jnp.float32),
            "ff2_b": jnp.zeros((d_model,), jnp.float32),
            "ff_norm": ln_params(),
        })

    return {"cptn_emb": emb, "pos_pe": pe, "layers": layers}


# ----------------------------------------------------------------------------
if __name__ == "__main__":
    B, T, S = 2, 8, 16
    d_model, num_heads, ff_dim = 32, 4, 64
    num_layers, vocab_size, max_len, pad_id = 2, 50, 64, 0

    root = jax.random.PRNGKey(0)
    kp, kt, ks = jax.random.split(root, 3)

    params = init_params(kp, vocab_size, d_model, num_heads, ff_dim,
                         num_layers, max_len, pad_id)

    tgt_cptn = jax.random.randint(kt, (B, T), 1, vocab_size, dtype=jnp.int32)
    tgt_cptn = tgt_cptn.at[0, T - 1].set(pad_id)        # exercise padding mask
    src_img = jax.random.normal(ks, (S, B, d_model), jnp.float32)

    fwd = jax.jit(decoder_forward, static_argnums=(3, 4))
    out, attns_all = fwd(params, tgt_cptn, src_img, num_heads, pad_id)
    jax.block_until_ready((out, attns_all))

    assert out.shape == (T, B, d_model)
    assert attns_all.shape == (num_layers, B, num_heads, T, S)
    assert bool(jnp.all(jnp.isfinite(out)))
    assert bool(jnp.all(jnp.isfinite(attns_all)))
    print("KERNEL_OK")
</pallas_src>

<mosaic_0001>
module attributes {stable_mosaic.version = 11 : i64} {
  func.func @kernel(%arg0: i32, %arg1: memref<1x8x96xf32, #tpu.memory_space<vmem>>, %arg2: memref<1x1x8xf32, #tpu.memory_space<vmem>>, %arg3: memref<1x8x32xf32, #tpu.memory_space<vmem>>) attributes {dimension_semantics = [#tpu.dimension_semantics<parallel>], iteration_bounds = array<i64: 2>, scalar_prefetch = 0 : i64, scratch_operands = 0 : i64, tpu.core_type = #tpu.core_type<tc>, window_params = [{transform_indices = @transform_0, window_bounds = array<i64: 1, 8, 96>}, {transform_indices = @transform_1, window_bounds = array<i64: 1, 1, 8>}, {transform_indices = @transform_2, window_bounds = array<i64: 1, 8, 32>}]} {
    %c0 = arith.constant 0 : index
    %c0_0 = arith.constant 0 : index
    %c0_1 = arith.constant 0 : index
    %0 = vector.load %arg1[%c0, %c0_0, %c0_1] : memref<1x8x96xf32, #tpu.memory_space<vmem>>, vector<1x8x96xf32>
    %1 = vector.shape_cast %0 : vector<1x8x96xf32> to vector<8x96xf32>
    %2 = tpu.iota {dimensions = array<i32: 0>} : vector<8x8xi32>
    %3 = tpu.iota {dimensions = array<i32: 1>} : vector<8x8xi32>
    %4 = arith.cmpi sgt, %3, %2 : vector<8x8xi32>
    %cst = arith.constant -1.000000e+30 : f32
    %cst_2 = arith.constant 0.000000e+00 : f32
    %5 = vector.broadcast %cst : f32 to vector<8x8xf32>
    %6 = vector.broadcast %cst_2 : f32 to vector<8x8xf32>
    %7 = arith.select %4, %5, %6 : vector<8x8xi1>, vector<8x8xf32>
    %c0_3 = arith.constant 0 : index
    %c0_4 = arith.constant 0 : index
    %c0_5 = arith.constant 0 : index
    %8 = vector.load %arg2[%c0_3, %c0_4, %c0_5] : memref<1x1x8xf32, #tpu.memory_space<vmem>>, vector<1x1x8xf32>
    %9 = vector.shape_cast %8 : vector<1x1x8xf32> to vector<1x8xf32>
    %10 = vector.broadcast %9 : vector<1x8xf32> to vector<8x8xf32>
    %11 = arith.addf %7, %10 : vector<8x8xf32>
    %12 = vector.extract_strided_slice %1 {offsets = [0, 0], sizes = [8, 8], strides = [1, 1]} : vector<8x96xf32> to vector<8x8xf32>
    %13 = arith.truncf %12 : vector<8x8xf32> to vector<8x8xbf16>
    %14 = vector.extract_strided_slice %1 {offsets = [0, 32], sizes = [8, 8], strides = [1, 1]} : vector<8x96xf32> to vector<8x8xf32>
    %15 = arith.truncf %14 : vector<8x8xf32> to vector<8x8xbf16>
    %16 = vector.extract_strided_slice %1 {offsets = [0, 64], sizes = [8, 8], strides = [1, 1]} : vector<8x96xf32> to vector<8x8xf32>
    %17 = arith.truncf %16 : vector<8x8xf32> to vector<8x8xbf16>
    %cst_6 = arith.constant dense<0.000000e+00> : vector<8x8xf32>
    %18 = tpu.matmul %13, %15, %cst_6 {dimension_numbers = #tpu.dot_dimension_numbers<[1], [1], [0], [0], [0, 0, 1, 0], [], []>} : vector<8x8xbf16>, vector<8x8xbf16>, vector<8x8xf32> -> vector<8x8xf32>
    %19 = arith.addf %18, %11 : vector<8x8xf32>
    %cst_7 = arith.constant dense<0xFF800000> : vector<8xf32>
    %20 = vector.multi_reduction <maximumf>, %19, %cst_7 [1] : vector<8x8xf32> to vector<8xf32>
    %21 = vector.shape_cast %20 : vector<8xf32> to vector<8x1xf32>
    %22 = vector.broadcast %21 : vector<8x1xf32> to vector<8x8xf32>
    %23 = arith.subf %19, %22 : vector<8x8xf32>
    %24 = math.exp %23 : vector<8x8xf32>
    %cst_8 = arith.constant dense<0.000000e+00> : vector<8xf32>
    %25 = vector.multi_reduction <add>, %24, %cst_8 [1] : vector<8x8xf32> to vector<8xf32>
    %26 = vector.shape_cast %25 : vector<8xf32> to vector<8x1xf32>
    %27 = tpu.reciprocal %26 {approx = true} : vector<8x1xf32> -> vector<8x1xf32>
    %28 = vector.broadcast %27 : vector<8x1xf32> to vector<8x8xf32>
    %29 = arith.mulf %24, %28 : vector<8x8xf32>
    %30 = arith.truncf %29 : vector<8x8xf32> to vector<8x8xbf16>
    %cst_9 = arith.constant dense<0.000000e+00> : vector<8x8xf32>
    %31 = tpu.matmul %30, %17, %cst_9 {dimension_numbers = #tpu.dot_dimension_numbers<[1], [0], [0], [1], [0, 0, 1, 1], [], []>} : vector<8x8xbf16>, vector<8x8xbf16>, vector<8x8xf32> -> vector<8x8xf32>
    %c0_10 = arith.constant 0 : index
    %c0_11 = arith.constant 0 : index
    %c0_12 = arith.constant 0 : index
    %32 = vector.load %arg3[%c0_10, %c0_11, %c0_12] : memref<1x8x32xf32, #tpu.memory_space<vmem>>, vector<1x8x8xf32>
    %33 = vector.shape_cast %32 : vector<1x8x8xf32> to vector<8x8xf32>
    %34 = vector.shape_cast %31 : vector<8x8xf32> to vector<1x8x8xf32>
    tpu.vector_store %arg3[%c0_10, %c0_11, %c0_12], %34 {strides = array<i32>} : memref<1x8x32xf32, #tpu.memory_space<vmem>>, vector<1x8x8xf32>,
    %35 = vector.extract_strided_slice %1 {offsets = [0, 8], sizes = [8, 8], strides = [1, 1]} : vector<8x96xf32> to vector<8x8xf32>
    %36 = arith.truncf %35 : vector<8x8xf32> to vector<8x8xbf16>
    %37 = vector.extract_strided_slice %1 {offsets = [0, 40], sizes = [8, 8], strides = [1, 1]} : vector<8x96xf32> to vector<8x8xf32>
    %38 = arith.truncf %37 : vector<8x8xf32> to vector<8x8xbf16>
    %39 = vector.extract_strided_slice %1 {offsets = [0, 72], sizes = [8, 8], strides = [1, 1]} : vector<8x96xf32> to vector<8x8xf32>
    %40 = arith.truncf %39 : vector<8x8xf32> to vector<8x8xbf16>
    %cst_13 = arith.constant dense<0.000000e+00> : vector<8x8xf32>
    %41 = tpu.matmul %36, %38, %cst_13 {dimension_numbers = #tpu.dot_dimension_numbers<[1], [1], [0], [0], [0, 0, 1, 0], [], []>} : vector<8x8xbf16>, vector<8x8xbf16>, vector<8x8xf32> -> vector<8x8xf32>
    %42 = arith.addf %41, %11 : vector<8x8xf32>
    %cst_14 = arith.constant dense<0xFF800000> : vector<8xf32>
    %43 = vector.multi_reduction <maximumf>, %42, %cst_14 [1] : vector<8x8xf32> to vector<8xf32>
    %44 = vector.shape_cast %43 : vector<8xf32> to vector<8x1xf32>
    %45 = vector.broadcast %44 : vector<8x1xf32> to vector<8x8xf32>
    %46 = arith.subf %42, %45 : vector<8x8xf32>
    %47 = math.exp %46 : vector<8x8xf32>
    %cst_15 = arith.constant dense<0.000000e+00> : vector<8xf32>
    %48 = vector.multi_reduction <add>, %47, %cst_15 [1] : vector<8x8xf32> to vector<8xf32>
    %49 = vector.shape_cast %48 : vector<8xf32> to vector<8x1xf32>
    %50 = tpu.reciprocal %49 {approx = true} : vector<8x1xf32> -> vector<8x1xf32>
    %51 = vector.broadcast %50 : vector<8x1xf32> to vector<8x8xf32>
    %52 = arith.mulf %47, %51 : vector<8x8xf32>
    %53 = arith.truncf %52 : vector<8x8xf32> to vector<8x8xbf16>
    %cst_16 = arith.constant dense<0.000000e+00> : vector<8x8xf32>
    %54 = tpu.matmul %53, %40, %cst_16 {dimension_numbers = #tpu.dot_dimension_numbers<[1], [0], [0], [1], [0, 0, 1, 1], [], []>} : vector<8x8xbf16>, vector<8x8xbf16>, vector<8x8xf32> -> vector<8x8xf32>
    %c0_17 = arith.constant 0 : index
    %c0_18 = arith.constant 0 : index
    %c8 = arith.constant 8 : index
    %55 = vector.load %arg3[%c0_17, %c0_18, %c8] : memref<1x8x32xf32, #tpu.memory_space<vmem>>, vector<1x8x8xf32>
    %56 = vector.shape_cast %55 : vector<1x8x8xf32> to vector<8x8xf32>
    %57 = vector.shape_cast %54 : vector<8x8xf32> to vector<1x8x8xf32>
    tpu.vector_store %arg3[%c0_17, %c0_18, %c8], %57 {strides = array<i32>} : memref<1x8x32xf32, #tpu.memory_space<vmem>>, vector<1x8x8xf32>,
    %58 = vector.extract_strided_slice %1 {offsets = [0, 16], sizes = [8, 8], strides = [1, 1]} : vector<8x96xf32> to vector<8x8xf32>
    %59 = arith.truncf %58 : vector<8x8xf32> to vector<8x8xbf16>
    %60 = vector.extract_strided_slice %1 {offsets = [0, 48], sizes = [8, 8], strides = [1, 1]} : vector<8x96xf32> to vector<8x8xf32>
    %61 = arith.truncf %60 : vector<8x8xf32> to vector<8x8xbf16>
    %62 = vector.extract_strided_slice %1 {offsets = [0, 80], sizes = [8, 8], strides = [1, 1]} : vector<8x96xf32> to vector<8x8xf32>
    %63 = arith.truncf %62 : vector<8x8xf32> to vector<8x8xbf16>
    %cst_19 = arith.constant dense<0.000000e+00> : vector<8x8xf32>
    %64 = tpu.matmul %59, %61, %cst_19 {dimension_numbers = #tpu.dot_dimension_numbers<[1], [1], [0], [0], [0, 0, 1, 0], [], []>} : vector<8x8xbf16>, vector<8x8xbf16>, vector<8x8xf32> -> vector<8x8xf32>
    %65 = arith.addf %64, %11 : vector<8x8xf32>
    %cst_20 = arith.constant dense<0xFF800000> : vector<8xf32>
    %66 = vector.multi_reduction <maximumf>, %65, %cst_20 [1] : vector<8x8xf32> to vector<8xf32>
    %67 = vector.shape_cast %66 : vector<8xf32> to vector<8x1xf32>
    %68 = vector.broadcast %67 : vector<8x1xf32> to vector<8x8xf32>
    %69 = arith.subf %65, %68 : vector<8x8xf32>
    %70 = math.exp %69 : vector<8x8xf32>
    %cst_21 = arith.constant dense<0.000000e+00> : vector<8xf32>
    %71 = vector.multi_reduction <add>, %70, %cst_21 [1] : vector<8x8xf32> to vector<8xf32>
    %72 = vector.shape_cast %71 : vector<8xf32> to vector<8x1xf32>
    %73 = tpu.reciprocal %72 {approx = true} : vector<8x1xf32> -> vector<8x1xf32>
    %74 = vector.broadcast %73 : vector<8x1xf32> to vector<8x8xf32>
    %75 = arith.mulf %70, %74 : vector<8x8xf32>
    %76 = arith.truncf %75 : vector<8x8xf32> to vector<8x8xbf16>
    %cst_22 = arith.constant dense<0.000000e+00> : vector<8x8xf32>
    %77 = tpu.matmul %76, %63, %cst_22 {dimension_numbers = #tpu.dot_dimension_numbers<[1], [0], [0], [1], [0, 0, 1, 1], [], []>} : vector<8x8xbf16>, vector<8x8xbf16>, vector<8x8xf32> -> vector<8x8xf32>
    %c0_23 = arith.constant 0 : index
    %c0_24 = arith.constant 0 : index
    %c16 = arith.constant 16 : index
    %78 = vector.load %arg3[%c0_23, %c0_24, %c16] : memref<1x8x32xf32, #tpu.memory_space<vmem>>, vector<1x8x8xf32>
    %79 = vector.shape_cast %78 : vector<1x8x8xf32> to vector<8x8xf32>
    %80 = vector.shape_cast %77 : vector<8x8xf32> to vector<1x8x8xf32>
    tpu.vector_store %arg3[%c0_23, %c0_24, %c16], %80 {strides = array<i32>} : memref<1x8x32xf32, #tpu.memory_space<vmem>>, vector<1x8x8xf32>,
    %81 = vector.extract_strided_slice %1 {offsets = [0, 24], sizes = [8, 8], strides = [1, 1]} : vector<8x96xf32> to vector<8x8xf32>
    %82 = arith.truncf %81 : vector<8x8xf32> to vector<8x8xbf16>
    %83 = vector.extract_strided_slice %1 {offsets = [0, 56], sizes = [8, 8], strides = [1, 1]} : vector<8x96xf32> to vector<8x8xf32>
    %84 = arith.truncf %83 : vector<8x8xf32> to vector<8x8xbf16>
    %85 = vector.extract_strided_slice %1 {offsets = [0, 88], sizes = [8, 8], strides = [1, 1]} : vector<8x96xf32> to vector<8x8xf32>
    %86 = arith.truncf %85 : vector<8x8xf32> to vector<8x8xbf16>
    %cst_25 = arith.constant dense<0.000000e+00> : vector<8x8xf32>
    %87 = tpu.matmul %82, %84, %cst_25 {dimension_numbers = #tpu.dot_dimension_numbers<[1], [1], [0], [0], [0, 0, 1, 0], [], []>} : vector<8x8xbf16>, vector<8x8xbf16>, vector<8x8xf32> -> vector<8x8xf32>
    %88 = arith.addf %87, %11 : vector<8x8xf32>
    %cst_26 = arith.constant dense<0xFF800000> : vector<8xf32>
    %89 = vector.multi_reduction <maximumf>, %88, %cst_26 [1] : vector<8x8xf32> to vector<8xf32>
    %90 = vector.shape_cast %89 : vector<8xf32> to vector<8x1xf32>
    %91 = vector.broadcast %90 : vector<8x1xf32> to vector<8x8xf32>
    %92 = arith.subf %88, %91 : vector<8x8xf32>
    %93 = math.exp %92 : vector<8x8xf32>
    %cst_27 = arith.constant dense<0.000000e+00> : vector<8xf32>
    %94 = vector.multi_reduction <add>, %93, %cst_27 [1] : vector<8x8xf32> to vector<8xf32>
    %95 = vector.shape_cast %94 : vector<8xf32> to vector<8x1xf32>
    %96 = tpu.reciprocal %95 {approx = true} : vector<8x1xf32> -> vector<8x1xf32>
    %97 = vector.broadcast %96 : vector<8x1xf32> to vector<8x8xf32>
    %98 = arith.mulf %93, %97 : vector<8x8xf32>
    %99 = arith.truncf %98 : vector<8x8xf32> to vector<8x8xbf16>
    %cst_28 = arith.constant dense<0.000000e+00> : vector<8x8xf32>
    %100 = tpu.matmul %99, %86, %cst_28 {dimension_numbers = #tpu.dot_dimension_numbers<[1], [0], [0], [1], [0, 0, 1, 1], [], []>} : vector<8x8xbf16>, vector<8x8xbf16>, vector<8x8xf32> -> vector<8x8xf32>
    %c0_29 = arith.constant 0 : index
    %c0_30 = arith.constant 0 : index
    %c24 = arith.constant 24 : index
    %101 = vector.load %arg3[%c0_29, %c0_30, %c24] : memref<1x8x32xf32, #tpu.memory_space<vmem>>, vector<1x8x8xf32>
    %102 = vector.shape_cast %101 : vector<1x8x8xf32> to vector<8x8xf32>
    %103 = vector.shape_cast %100 : vector<8x8xf32> to vector<1x8x8xf32>
    tpu.vector_store %arg3[%c0_29, %c0_30, %c24], %103 {strides = array<i32>} : memref<1x8x32xf32, #tpu.memory_space<vmem>>, vector<1x8x8xf32>,
    return
  }
  func.func @transform_0(%arg0: i32) -> (i32, i32, i32) {
    %c0_i32 = arith.constant 0 : i32
    %c0_i32_0 = arith.constant 0 : i32
    %c0_i32_1 = arith.constant 0 : i32
    return %arg0, %c0_i32, %c0_i32_0 : i32, i32, i32
  }
  func.func @transform_1(%arg0: i32) -> (i32, i32, i32) {
    %c0_i32 = arith.constant 0 : i32
    %c0_i32_0 = arith.constant 0 : i32
    %c0_i32_1 = arith.constant 0 : i32
    return %arg0, %c0_i32, %c0_i32_0 : i32, i32, i32
  }
  func.func @transform_2(%arg0: i32) -> (i32, i32, i32) {
    %c0_i32 = arith.constant 0 : i32
    %c0_i32_0 = arith.constant 0 : i32
    %c0_i32_1 = arith.constant 0 : i32
    return %arg0, %c0_i32, %c0_i32_0 : i32, i32, i32
  }
}

module attributes {stable_mosaic.version = 11 : i64} {
  func.func @kernel(%arg0: i32, %arg1: memref<8x32xf32, #tpu.memory_space<vmem>>, %arg2: memref<32x96xbf16, #tpu.memory_space<vmem>>, %arg3: memref<1x96xf32, #tpu.memory_space<vmem>>, %arg4: memref<8x96xf32, #tpu.memory_space<vmem>>) attributes {dimension_semantics = [#tpu.dimension_semantics<parallel>], iteration_bounds = array<i64: 2>, scalar_prefetch = 0 : i64, scratch_operands = 0 : i64, tpu.core_type = #tpu.core_type<tc>, window_params = [{transform_indices = @transform_0, window_bounds = array<i64: 8, 32>}, {pipeline_mode = #tpu.pipeline_mode<synchronous>, transform_indices = @transform_1, window_bounds = array<i64: 32, 96>}, {pipeline_mode = #tpu.pipeline_mode<synchronous>, transform_indices = @transform_2, window_bounds = array<i64: 1, 96>}, {transform_indices = @transform_3, window_bounds = array<i64: 8, 96>}]} {
    %c0 = arith.constant 0 : index
    %c0_0 = arith.constant 0 : index
    %0 = vector.load %arg1[%c0, %c0_0] : memref<8x32xf32, #tpu.memory_space<vmem>>, vector<8x32xf32>
    %1 = arith.truncf %0 : vector<8x32xf32> to vector<8x32xbf16>
    %c0_1 = arith.constant 0 : index
    %c0_2 = arith.constant 0 : index
    %2 = vector.load %arg2[%c0_1, %c0_2] : memref<32x96xbf16, #tpu.memory_space<vmem>>, vector<32x96xbf16>
    %cst = arith.constant dense<0.000000e+00> : vector<8x96xf32>
    %3 = tpu.matmul %1, %2, %cst {dimension_numbers = #tpu.dot_dimension_numbers<[1], [0], [0], [1], [0, 0, 1, 1], [], []>} : vector<8x32xbf16>, vector<32x96xbf16>, vector<8x96xf32> -> vector<8x96xf32>
    %c0_3 = arith.constant 0 : index
    %c0_4 = arith.constant 0 : index
    %4 = vector.load %arg3[%c0_3, %c0_4] : memref<1x96xf32, #tpu.memory_space<vmem>>, vector<1x96xf32>
    %5 = vector.broadcast %4 : vector<1x96xf32> to vector<8x96xf32>
    %6 = arith.addf %3, %5 : vector<8x96xf32>
    %c0_5 = arith.constant 0 : index
    %c0_6 = arith.constant 0 : index
    %7 = vector.load %arg4[%c0_5, %c0_6] : memref<8x96xf32, #tpu.memory_space<vmem>>, vector<8x96xf32>
    tpu.vector_store %arg4[%c0_5, %c0_6], %6 {strides = array<i32>} : memref<8x96xf32, #tpu.memory_space<vmem>>, vector<8x96xf32>,
    return
  }
  func.func @transform_0(%arg0: i32) -> (i32, i32) {
    %c0_i32 = arith.constant 0 : i32
    %c0_i32_0 = arith.constant 0 : i32
    return %arg0, %c0_i32 : i32, i32
  }
  func.func @transform_1(%arg0: i32) -> (i32, i32) {
    %c0_i32 = arith.constant 0 : i32
    %c0_i32_0 = arith.constant 0 : i32
    %c0_i32_1 = arith.constant 0 : i32
    return %c0_i32, %c0_i32_0 : i32, i32
  }
  func.func @transform_2(%arg0: i32) -> (i32, i32) {
    %c0_i32 = arith.constant 0 : i32
    %c0_i32_0 = arith.constant 0 : i32
    %c0_i32_1 = arith.constant 0 : i32
    return %c0_i32, %c0_i32_0 : i32, i32
  }
  func.func @transform_3(%arg0: i32) -> (i32, i32) {
    %c0_i32 = arith.constant 0 : i32
    %c0_i32_0 = arith.constant 0 : i32
    return %arg0, %c0_i32 : i32, i32
  }
}

module attributes {stable_mosaic.version = 11 : i64} {
  func.func @kernel(%arg0: i32, %arg1: memref<8x32xf32, #tpu.memory_space<vmem>>, %arg2: memref<8x32xf32, #tpu.memory_space<vmem>>, %arg3: memref<32x32xbf16, #tpu.memory_space<vmem>>, %arg4: memref<1x32xf32, #tpu.memory_space<vmem>>, %arg5: memref<1x32xf32, #tpu.memory_space<vmem>>, %arg6: memref<1x32xf32, #tpu.memory_space<vmem>>, %arg7: memref<8x32xf32, #tpu.memory_space<vmem>>) attributes {dimension_semantics = [#tpu.dimension_semantics<parallel>], iteration_bounds = array<i64: 2>, scalar_prefetch = 0 : i64, scratch_operands = 0 : i64, tpu.core_type = #tpu.core_type<tc>, window_params = [{transform_indices = @transform_0, window_bounds = array<i64: 8, 32>}, {transform_indices = @transform_1, window_bounds = array<i64: 8, 32>}, {pipeline_mode = #tpu.pipeline_mode<synchronous>, transform_indices = @transform_2, window_bounds = array<i64: 32, 32>}, {pipeline_mode = #tpu.pipeline_mode<synchronous>, transform_indices = @transform_3, window_bounds = array<i64: 1, 32>}, {pipeline_mode = #tpu.pipeline_mode<synchronous>, transform_indices = @transform_4, window_bounds = array<i64: 1, 32>}, {pipeline_mode = #tpu.pipeline_mode<synchronous>, transform_indices = @transform_5, window_bounds = array<i64: 1, 32>}, {transform_indices = @transform_6, window_bounds = array<i64: 8, 32>}]} {
    %c0 = arith.constant 0 : index
    %c0_0 = arith.constant 0 : index
    %0 = vector.load %arg1[%c0, %c0_0] : memref<8x32xf32, #tpu.memory_space<vmem>>, vector<8x32xf32>
    %1 = arith.truncf %0 : vector<8x32xf32> to vector<8x32xbf16>
    %c0_1 = arith.constant 0 : index
    %c0_2 = arith.constant 0 : index
    %2 = vector.load %arg3[%c0_1, %c0_2] : memref<32x32xbf16, #tpu.memory_space<vmem>>, vector<32x32xbf16>
    %cst = arith.constant dense<0.000000e+00> : vector<8x32xf32>
    %3 = tpu.matmul %1, %2, %cst {dimension_numbers = #tpu.dot_dimension_numbers<[1], [0], [0], [1], [0, 0, 1, 1], [], []>} : vector<8x32xbf16>, vector<32x32xbf16>, vector<8x32xf32> -> vector<8x32xf32>
    %c0_3 = arith.constant 0 : index
    %c0_4 = arith.constant 0 : index
    %4 = vector.load %arg4[%c0_3, %c0_4] : memref<1x32xf32, #tpu.memory_space<vmem>>, vector<1x32xf32>
    %5 = vector.broadcast %4 : vector<1x32xf32> to vector<8x32xf32>
    %6 = arith.addf %3, %5 : vector<8x32xf32>
    %c0_5 = arith.constant 0 : index
    %c0_6 = arith.constant 0 : index
    %7 = vector.load %arg2[%c0_5, %c0_6] : memref<8x32xf32, #tpu.memory_space<vmem>>, vector<8x32xf32>
    %8 = arith.addf %7, %6 : vector<8x32xf32>
    %c0_7 = arith.constant 0 : index
    %c0_8 = arith.constant 0 : index
    %9 = vector.load %arg5[%c0_7, %c0_8] : memref<1x32xf32, #tpu.memory_space<vmem>>, vector<1x32xf32>
    %c0_9 = arith.constant 0 : index
    %c0_10 = arith.constant 0 : index
    %10 = vector.load %arg6[%c0_9, %c0_10] : memref<1x32xf32, #tpu.memory_space<vmem>>, vector<1x32xf32>
    %cst_11 = arith.constant dense<0.000000e+00> : vector<8xf32>
    %11 = vector.multi_reduction <add>, %8, %cst_11 [1] : vector<8x32xf32> to vector<8xf32>
    %12 = vector.shape_cast %11 : vector<8xf32> to vector<8x1xf32>
    %cst_12 = arith.constant 3.200000e+01 : f32
    %13 = vector.broadcast %cst_12 : f32 to vector<8x1xf32>
    %14 = arith.divf %12, %13 : vector<8x1xf32>
    %15 = vector.broadcast %14 : vector<8x1xf32> to vector<8x32xf32>
    %16 = arith.subf %8, %15 : vector<8x32xf32>
    %17 = arith.mulf %16, %16 : vector<8x32xf32>
    %cst_13 = arith.constant dense<0.000000e+00> : vector<8xf32>
    %18 = vector.multi_reduction <add>, %17, %cst_13 [1] : vector<8x32xf32> to vector<8xf32>
    %19 = vector.shape_cast %18 : vector<8xf32> to vector<8x1xf32>
    %cst_14 = arith.constant 3.200000e+01 : f32
    %20 = vector.broadcast %cst_14 : f32 to vector<8x1xf32>
    %21 = arith.divf %19, %20 : vector<8x1xf32>
    %22 = vector.broadcast %14 : vector<8x1xf32> to vector<8x32xf32>
    %23 = arith.subf %8, %22 : vector<8x32xf32>
    %cst_15 = arith.constant 9.99999974E-6 : f32
    %24 = vector.broadcast %cst_15 : f32 to vector<8x1xf32>
    %25 = arith.addf %21, %24 : vector<8x1xf32>
    %26 = math.rsqrt %25 : vector<8x1xf32>
    %27 = vector.broadcast %26 : vector<8x1xf32> to vector<8x32xf32>
    %28 = arith.mulf %23, %27 : vector<8x32xf32>
    %29 = vector.broadcast %9 : vector<1x32xf32> to vector<8x32xf32>
    %30 = arith.mulf %28, %29 : vector<8x32xf32>
    %31 = vector.broadcast %10 : vector<1x32xf32> to vector<8x32xf32>
    %32 = arith.addf %30, %31 : vector<8x32xf32>
    %c0_16 = arith.constant 0 : index
    %c0_17 = arith.constant 0 : index
    %33 = vector.load %arg7[%c0_16, %c0_17] : memref<8x32xf32, #tpu.memory_space<vmem>>, vector<8x32xf32>
    tpu.vector_store %arg7[%c0_16, %c0_17], %32 {strides = array<i32>} : memref<8x32xf32, #tpu.memory_space<vmem>>, vector<8x32xf32>,
    return
  }
  func.func @transform_0(%arg0: i32) -> (i32, i32) {
    %c0_i32 = arith.constant 0 : i32
    %c0_i32_0 = arith.constant 0 : i32
    return %arg0, %c0_i32 : i32, i32
  }
  func.func @transform_1(%arg0: i32) -> (i32, i32) {
    %c0_i32 = arith.constant 0 : i32
    %c0_i32_0 = arith.constant 0 : i32
    return %arg0, %c0_i32 : i32, i32
  }
  func.func @transform_2(%arg0: i32) -> (i32, i32) {
    %c0_i32 = arith.constant 0 : i32
    %c0_i32_0 = arith.constant 0 : i32
    %c0_i32_1 = arith.constant 0 : i32
    return %c0_i32, %c0_i32_0 : i32, i32
  }
  func.func @transform_3(%arg0: i32) -> (i32, i32) {
    %c0_i32 = arith.constant 0 : i32
    %c0_i32_0 = arith.constant 0 : i32
    %c0_i32_1 = arith.constant 0 : i32
    return %c0_i32, %c0_i32_0 : i32, i32
  }
  func.func @transform_4(%arg0: i32) -> (i32, i32) {
    %c0_i32 = arith.constant 0 : i32
    %c0_i32_0 = arith.constant 0 : i32
    %c0_i32_1 = arith.constant 0 : i32
    return %c0_i32, %c0_i32_0 : i32, i32
  }
  func.func @transform_5(%arg0: i32) -> (i32, i32) {
    %c0_i32 = arith.constant 0 : i32
    %c0_i32_0 = arith.constant 0 : i32
    %c0_i32_1 = arith.constant 0 : i32
    return %c0_i32, %c0_i32_0 : i32, i32
  }
  func.func @transform_6(%arg0: i32) -> (i32, i32) {
    %c0_i32 = arith.constant 0 : i32
    %c0_i32_0 = arith.constant 0 : i32
    return %arg0, %c0_i32 : i32, i32
  }
}

module attributes {stable_mosaic.version = 11 : i64} {
  func.func @kernel(%arg0: i32, %arg1: memref<8x32xf32, #tpu.memory_space<vmem>>, %arg2: memref<32x32xbf16, #tpu.memory_space<vmem>>, %arg3: memref<1x32xf32, #tpu.memory_space<vmem>>, %arg4: memref<8x32xf32, #tpu.memory_space<vmem>>) attributes {dimension_semantics = [#tpu.dimension_semantics<parallel>], iteration_bounds = array<i64: 2>, scalar_prefetch = 0 : i64, scratch_operands = 0 : i64, tpu.core_type = #tpu.core_type<tc>, window_params = [{transform_indices = @transform_0, window_bounds = array<i64: 8, 32>}, {pipeline_mode = #tpu.pipeline_mode<synchronous>, transform_indices = @transform_1, window_bounds = array<i64: 32, 32>}, {pipeline_mode = #tpu.pipeline_mode<synchronous>, transform_indices = @transform_2, window_bounds = array<i64: 1, 32>}, {transform_indices = @transform_3, window_bounds = array<i64: 8, 32>}]} {
    %c0 = arith.constant 0 : index
    %c0_0 = arith.constant 0 : index
    %0 = vector.load %arg1[%c0, %c0_0] : memref<8x32xf32, #tpu.memory_space<vmem>>, vector<8x32xf32>
    %1 = arith.truncf %0 : vector<8x32xf32> to vector<8x32xbf16>
    %c0_1 = arith.constant 0 : index
    %c0_2 = arith.constant 0 : index
    %2 = vector.load %arg2[%c0_1, %c0_2] : memref<32x32xbf16, #tpu.memory_space<vmem>>, vector<32x32xbf16>
    %cst = arith.constant dense<0.000000e+00> : vector<8x32xf32>
    %3 = tpu.matmul %1, %2, %cst {dimension_numbers = #tpu.dot_dimension_numbers<[1], [0], [0], [1], [0, 0, 1, 1], [], []>} : vector<8x32xbf16>, vector<32x32xbf16>, vector<8x32xf32> -> vector<8x32xf32>
    %c0_3 = arith.constant 0 : index
    %c0_4 = arith.constant 0 : index
    %4 = vector.load %arg3[%c0_3, %c0_4] : memref<1x32xf32, #tpu.memory_space<vmem>>, vector<1x32xf32>
    %5 = vector.broadcast %4 : vector<1x32xf32> to vector<8x32xf32>
    %6 = arith.addf %3, %5 : vector<8x32xf32>
    %c0_5 = arith.constant 0 : index
    %c0_6 = arith.constant 0 : index
    %7 = vector.load %arg4[%c0_5, %c0_6] : memref<8x32xf32, #tpu.memory_space<vmem>>, vector<8x32xf32>
    tpu.vector_store %arg4[%c0_5, %c0_6], %6 {strides = array<i32>} : memref<8x32xf32, #tpu.memory_space<vmem>>, vector<8x32xf32>,
    return
  }
  func.func @transform_0(%arg0: i32) -> (i32, i32) {
    %c0_i32 = arith.constant 0 : i32
    %c0_i32_0 = arith.constant 0 : i32
    return %arg0, %c0_i32 : i32, i32
  }
  func.func @transform_1(%arg0: i32) -> (i32, i32) {
    %c0_i32 = arith.constant 0 : i32
    %c0_i32_0 = arith.constant 0 : i32
    %c0_i32_1 = arith.constant 0 : i32
    return %c0_i32, %c0_i32_0 : i32, i32
  }
  func.func @transform_2(%arg0: i32) -> (i32, i32) {
    %c0_i32 = arith.constant 0 : i32
    %c0_i32_0 = arith.constant 0 : i32
    %c0_i32_1 = arith.constant 0 : i32
    return %c0_i32, %c0_i32_0 : i32, i32
  }
  func.func @transform_3(%arg0: i32) -> (i32, i32) {
    %c0_i32 = arith.constant 0 : i32
    %c0_i32_0 = arith.constant 0 : i32
    return %arg0, %c0_i32 : i32, i32
  }
}

module attributes {stable_mosaic.version = 11 : i64} {
  func.func @kernel(%arg0: i32, %arg1: memref<16x32xf32, #tpu.memory_space<vmem>>, %arg2: memref<32x64xbf16, #tpu.memory_space<vmem>>, %arg3: memref<1x64xf32, #tpu.memory_space<vmem>>, %arg4: memref<16x64xf32, #tpu.memory_space<vmem>>) attributes {dimension_semantics = [#tpu.dimension_semantics<parallel>], iteration_bounds = array<i64: 2>, scalar_prefetch = 0 : i64, scratch_operands = 0 : i64, tpu.core_type = #tpu.core_type<tc>, window_params = [{transform_indices = @transform_0, window_bounds = array<i64: 16, 32>}, {pipeline_mode = #tpu.pipeline_mode<synchronous>, transform_indices = @transform_1, window_bounds = array<i64: 32, 64>}, {pipeline_mode = #tpu.pipeline_mode<synchronous>, transform_indices = @transform_2, window_bounds = array<i64: 1, 64>}, {transform_indices = @transform_3, window_bounds = array<i64: 16, 64>}]} {
    %c0 = arith.constant 0 : index
    %c0_0 = arith.constant 0 : index
    %0 = vector.load %arg1[%c0, %c0_0] : memref<16x32xf32, #tpu.memory_space<vmem>>, vector<16x32xf32>
    %1 = arith.truncf %0 : vector<16x32xf32> to vector<16x32xbf16>
    %c0_1 = arith.constant 0 : index
    %c0_2 = arith.constant 0 : index
    %2 = vector.load %arg2[%c0_1, %c0_2] : memref<32x64xbf16, #tpu.memory_space<vmem>>, vector<32x64xbf16>
    %cst = arith.constant dense<0.000000e+00> : vector<16x64xf32>
    %3 = tpu.matmul %1, %2, %cst {dimension_numbers = #tpu.dot_dimension_numbers<[1], [0], [0], [1], [0, 0, 1, 1], [], []>} : vector<16x32xbf16>, vector<32x64xbf16>, vector<16x64xf32> -> vector<16x64xf32>
    %c0_3 = arith.constant 0 : index
    %c0_4 = arith.constant 0 : index
    %4 = vector.load %arg3[%c0_3, %c0_4] : memref<1x64xf32, #tpu.memory_space<vmem>>, vector<1x64xf32>
    %5 = vector.broadcast %4 : vector<1x64xf32> to vector<16x64xf32>
    %6 = arith.addf %3, %5 : vector<16x64xf32>
    %c0_5 = arith.constant 0 : index
    %c0_6 = arith.constant 0 : index
    %7 = vector.load %arg4[%c0_5, %c0_6] : memref<16x64xf32, #tpu.memory_space<vmem>>, vector<16x64xf32>
    tpu.vector_store %arg4[%c0_5, %c0_6], %6 {strides = array<i32>} : memref<16x64xf32, #tpu.memory_space<vmem>>, vector<16x64xf32>,
    return
  }
  func.func @transform_0(%arg0: i32) -> (i32, i32) {
    %c0_i32 = arith.constant 0 : i32
    %c0_i32_0 = arith.constant 0 : i32
    return %arg0, %c0_i32 : i32, i32
  }
  func.func @transform_1(%arg0: i32) -> (i32, i32) {
    %c0_i32 = arith.constant 0 : i32
    %c0_i32_0 = arith.constant 0 : i32
    %c0_i32_1 = arith.constant 0 : i32
    return %c0_i32, %c0_i32_0 : i32, i32
  }
  func.func @transform_2(%arg0: i32) -> (i32, i32) {
    %c0_i32 = arith.constant 0 : i32
    %c0_i32_0 = arith.constant 0 : i32
    %c0_i32_1 = arith.constant 0 : i32
    return %c0_i32, %c0_i32_0 : i32, i32
  }
  func.func @transform_3(%arg0: i32) -> (i32, i32) {
    %c0_i32 = arith.constant 0 : i32
    %c0_i32_0 = arith.constant 0 : i32
    return %arg0, %c0_i32 : i32, i32
  }
}

module attributes {stable_mosaic.version = 11 : i64} {
  func.func @kernel(%arg0: i32, %arg1: memref<1x8x32xf32, #tpu.memory_space<vmem>>, %arg2: memref<1x16x64xf32, #tpu.memory_space<vmem>>, %arg3: memref<1x8x32xf32, #tpu.memory_space<vmem>>, %arg4: memref<1x4x8x16xf32, #tpu.memory_space<vmem>>) attributes {dimension_semantics = [#tpu.dimension_semantics<parallel>], iteration_bounds = array<i64: 2>, scalar_prefetch = 0 : i64, scratch_operands = 0 : i64, tpu.core_type = #tpu.core_type<tc>, window_params = [{transform_indices = @transform_0, window_bounds = array<i64: 1, 8, 32>}, {transform_indices = @transform_1, window_bounds = array<i64: 1, 16, 64>}, {transform_indices = @transform_2, window_bounds = array<i64: 1, 8, 32>}, {transform_indices = @transform_3, window_bounds = array<i64: 1, 4, 8, 16>}]} {
    %c0 = arith.constant 0 : index
    %c0_0 = arith.constant 0 : index
    %c0_1 = arith.constant 0 : index
    %0 = vector.load %arg1[%c0, %c0_0, %c0_1] : memref<1x8x32xf32, #tpu.memory_space<vmem>>, vector<1x8x32xf32>
    %1 = vector.shape_cast %0 : vector<1x8x32xf32> to vector<8x32xf32>
    %c0_2 = arith.constant 0 : index
    %c0_3 = arith.constant 0 : index
    %c0_4 = arith.constant 0 : index
    %2 = vector.load %arg2[%c0_2, %c0_3, %c0_4] : memref<1x16x64xf32, #tpu.memory_space<vmem>>, vector<1x16x64xf32>
    %3 = vector.shape_cast %2 : vector<1x16x64xf32> to vector<16x64xf32>
    %4 = vector.extract_strided_slice %1 {offsets = [0, 0], sizes = [8, 8], strides = [1, 1]} : vector<8x32xf32> to vector<8x8xf32>
    %5 = arith.truncf %4 : vector<8x8xf32> to vector<8x8xbf16>
    %6 = vector.extract_strided_slice %3 {offsets = [0, 0], sizes = [16, 8], strides = [1, 1]} : vector<16x64xf32> to vector<16x8xf32>
    %7 = arith.truncf %6 : vector<16x8xf32> to vector<16x8xbf16>
    %8 = vector.extract_strided_slice %3 {offsets = [0, 32], sizes = [16, 8], strides = [1, 1]} : vector<16x64xf32> to vector<16x8xf32>
    %9 = arith.truncf %8 : vector<16x8xf32> to vector<16x8xbf16>
    %cst = arith.constant dense<0.000000e+00> : vector<8x16xf32>
    %10 = tpu.matmul %5, %7, %cst {dimension_numbers = #tpu.dot_dimension_numbers<[1], [1], [0], [0], [0, 0, 1, 0], [], []>} : vector<8x8xbf16>, vector<16x8xbf16>, vector<8x16xf32> -> vector<8x16xf32>
    %cst_5 = arith.constant dense<0xFF800000> : vector<8xf32>
    %11 = vector.multi_reduction <maximumf>, %10, %cst_5 [1] : vector<8x16xf32> to vector<8xf32>
    %12 = vector.shape_cast %11 : vector<8xf32> to vector<8x1xf32>
    %13 = vector.broadcast %12 : vector<8x1xf32> to vector<8x16xf32>
    %14 = arith.subf %10, %13 : vector<8x16xf32>
    %15 = math.exp %14 : vector<8x16xf32>
    %cst_6 = arith.constant dense<0.000000e+00> : vector<8xf32>
    %16 = vector.multi_reduction <add>, %15, %cst_6 [1] : vector<8x16xf32> to vector<8xf32>
    %17 = vector.shape_cast %16 : vector<8xf32> to vector<8x1xf32>
    %18 = tpu.reciprocal %17 {approx = true} : vector<8x1xf32> -> vector<8x1xf32>
    %19 = vector.broadcast %18 : vector<8x1xf32> to vector<8x16xf32>
    %20 = arith.mulf %15, %19 : vector<8x16xf32>
    %c0_7 = arith.constant 0 : index
    %c0_8 = arith.constant 0 : index
    %c0_9 = arith.constant 0 : index
    %c0_10 = arith.constant 0 : index
    %21 = vector.load %arg4[%c0_7, %c0_8, %c0_9, %c0_10] : memref<1x4x8x16xf32, #tpu.memory_space<vmem>>, vector<1x1x8x16xf32>
    %22 = vector.shape_cast %21 : vector<1x1x8x16xf32> to vector<8x16xf32>
    %23 = vector.shape_cast %20 : vector<8x16xf32> to vector<1x1x8x16xf32>
    tpu.vector_store %arg4[%c0_7, %c0_8, %c0_9, %c0_10], %23 {strides = array<i32>} : memref<1x4x8x16xf32, #tpu.memory_space<vmem>>, vector<1x1x8x16xf32>,
    %24 = arith.truncf %20 : vector<8x16xf32> to vector<8x16xbf16>
    %cst_11 = arith.constant dense<0.000000e+00> : vector<8x8xf32>
    %25 = tpu.matmul %24, %9, %cst_11 {dimension_numbers = #tpu.dot_dimension_numbers<[1], [0], [0], [1], [0, 0, 1, 1], [], []>} : vector<8x16xbf16>, vector<16x8xbf16>, vector<8x8xf32> -> vector<8x8xf32>
    %c0_12 = arith.constant 0 : index
    %c0_13 = arith.constant 0 : index
    %c0_14 = arith.constant 0 : index
    %26 = vector.load %arg3[%c0_12, %c0_13, %c0_14] : memref<1x8x32xf32, #tpu.memory_space<vmem>>, vector<1x8x8xf32>
    %27 = vector.shape_cast %26 : vector<1x8x8xf32> to vector<8x8xf32>
    %28 = vector.shape_cast %25 : vector<8x8xf32> to vector<1x8x8xf32>
    tpu.vector_store %arg3[%c0_12, %c0_13, %c0_14], %28 {strides = array<i32>} : memref<1x8x32xf32, #tpu.memory_space<vmem>>, vector<1x8x8xf32>,
    %29 = vector.extract_strided_slice %1 {offsets = [0, 8], sizes = [8, 8], strides = [1, 1]} : vector<8x32xf32> to vector<8x8xf32>
    %30 = arith.truncf %29 : vector<8x8xf32> to vector<8x8xbf16>
    %31 = vector.extract_strided_slice %3 {offsets = [0, 8], sizes = [16, 8], strides = [1, 1]} : vector<16x64xf32> to vector<16x8xf32>
    %32 = arith.truncf %31 : vector<16x8xf32> to vector<16x8xbf16>
    %33 = vector.extract_strided_slice %3 {offsets = [0, 40], sizes = [16, 8], strides = [1, 1]} : vector<16x64xf32> to vector<16x8xf32>
    %34 = arith.truncf %33 : vector<16x8xf32> to vector<16x8xbf16>
    %cst_15 = arith.constant dense<0.000000e+00> : vector<8x16xf32>
    %35 = tpu.matmul %30, %32, %cst_15 {dimension_numbers = #tpu.dot_dimension_numbers<[1], [1], [0], [0], [0, 0, 1, 0], [], []>} : vector<8x8xbf16>, vector<16x8xbf16>, vector<8x16xf32> -> vector<8x16xf32>
    %cst_16 = arith.constant dense<0xFF800000> : vector<8xf32>
    %36 = vector.multi_reduction <maximumf>, %35, %cst_16 [1] : vector<8x16xf32> to vector<8xf32>
    %37 = vector.shape_cast %36 : vector<8xf32> to vector<8x1xf32>
    %38 = vector.broadcast %37 : vector<8x1xf32> to vector<8x16xf32>
    %39 = arith.subf %35, %38 : vector<8x16xf32>
    %40 = math.exp %39 : vector<8x16xf32>
    %cst_17 = arith.constant dense<0.000000e+00> : vector<8xf32>
    %41 = vector.multi_reduction <add>, %40, %cst_17 [1] : vector<8x16xf32> to vector<8xf32>
    %42 = vector.shape_cast %41 : vector<8xf32> to vector<8x1xf32>
    %43 = tpu.reciprocal %42 {approx = true} : vector<8x1xf32> -> vector<8x1xf32>
    %44 = vector.broadcast %43 : vector<8x1xf32> to vector<8x16xf32>
    %45 = arith.mulf %40, %44 : vector<8x16xf32>
    %c0_18 = arith.constant 0 : index
    %c1 = arith.constant 1 : index
    %c0_19 = arith.constant 0 : index
    %c0_20 = arith.constant 0 : index
    %46 = vector.load %arg4[%c0_18, %c1, %c0_19, %c0_20] : memref<1x4x8x16xf32, #tpu.memory_space<vmem>>, vector<1x1x8x16xf32>
    %47 = vector.shape_cast %46 : vector<1x1x8x16xf32> to vector<8x16xf32>
    %48 = vector.shape_cast %45 : vector<8x16xf32> to vector<1x1x8x16xf32>
    tpu.vector_store %arg4[%c0_18, %c1, %c0_19, %c0_20], %48 {strides = array<i32>} : memref<1x4x8x16xf32, #tpu.memory_space<vmem>>, vector<1x1x8x16xf32>,
    %49 = arith.truncf %45 : vector<8x16xf32> to vector<8x16xbf16>
    %cst_21 = arith.constant dense<0.000000e+00> : vector<8x8xf32>
    %50 = tpu.matmul %49, %34, %cst_21 {dimension_numbers = #tpu.dot_dimension_numbers<[1], [0], [0], [1], [0, 0, 1, 1], [], []>} : vector<8x16xbf16>, vector<16x8xbf16>, vector<8x8xf32> -> vector<8x8xf32>
    %c0_22 = arith.constant 0 : index
    %c0_23 = arith.constant 0 : index
    %c8 = arith.constant 8 : index
    %51 = vector.load %arg3[%c0_22, %c0_23, %c8] : memref<1x8x32xf32, #tpu.memory_space<vmem>>, vector<1x8x8xf32>
    %52 = vector.shape_cast %51 : vector<1x8x8xf32> to vector<8x8xf32>
    %53 = vector.shape_cast %50 : vector<8x8xf32> to vector<1x8x8xf32>
    tpu.vector_store %arg3[%c0_22, %c0_23, %c8], %53 {strides = array<i32>} : memref<1x8x32xf32, #tpu.memory_space<vmem>>, vector<1x8x8xf32>,
    %54 = vector.extract_strided_slice %1 {offsets = [0, 16], sizes = [8, 8], strides = [1, 1]} : vector<8x32xf32> to vector<8x8xf32>
    %55 = arith.truncf %54 : vector<8x8xf32> to vector<8x8xbf16>
    %56 = vector.extract_strided_slice %3 {offsets = [0, 16], sizes = [16, 8], strides = [1, 1]} : vector<16x64xf32> to vector<16x8xf32>
    %57 = arith.truncf %56 : vector<16x8xf32> to vector<16x8xbf16>
    %58 = vector.extract_strided_slice %3 {offsets = [0, 48], sizes = [16, 8], strides = [1, 1]} : vector<16x64xf32> to vector<16x8xf32>
    %59 = arith.truncf %58 : vector<16x8xf32> to vector<16x8xbf16>
    %cst_24 = arith.constant dense<0.000000e+00> : vector<8x16xf32>
    %60 = tpu.matmul %55, %57, %cst_24 {dimension_numbers = #tpu.dot_dimension_numbers<[1], [1], [0], [0], [0, 0, 1, 0], [], []>} : vector<8x8xbf16>, vector<16x8xbf16>, vector<8x16xf32> -> vector<8x16xf32>
    %cst_25 = arith.constant dense<0xFF800000> : vector<8xf32>
    %61 = vector.multi_reduction <maximumf>, %60, %cst_25 [1] : vector<8x16xf32> to vector<8xf32>
    %62 = vector.shape_cast %61 : vector<8xf32> to vector<8x1xf32>
    %63 = vector.broadcast %62 : vector<8x1xf32> to vector<8x16xf32>
    %64 = arith.subf %60, %63 : vector<8x16xf32>
    %65 = math.exp %64 : vector<8x16xf32>
    %cst_26 = arith.constant dense<0.000000e+00> : vector<8xf32>
    %66 = vector.multi_reduction <add>, %65, %cst_26 [1] : vector<8x16xf32> to vector<8xf32>
    %67 = vector.shape_cast %66 : vector<8xf32> to vector<8x1xf32>
    %68 = tpu.reciprocal %67 {approx = true} : vector<8x1xf32> -> vector<8x1xf32>
    %69 = vector.broadcast %68 : vector<8x1xf32> to vector<8x16xf32>
    %70 = arith.mulf %65, %69 : vector<8x16xf32>
    %c0_27 = arith.constant 0 : index
    %c2 = arith.constant 2 : index
    %c0_28 = arith.constant 0 : index
    %c0_29 = arith.constant 0 : index
    %71 = vector.load %arg4[%c0_27, %c2, %c0_28, %c0_29] : memref<1x4x8x16xf32, #tpu.memory_space<vmem>>, vector<1x1x8x16xf32>
    %72 = vector.shape_cast %71 : vector<1x1x8x16xf32> to vector<8x16xf32>
    %73 = vector.shape_cast %70 : vector<8x16xf32> to vector<1x1x8x16xf32>
    tpu.vector_store %arg4[%c0_27, %c2, %c0_28, %c0_29], %73 {strides = array<i32>} : memref<1x4x8x16xf32, #tpu.memory_space<vmem>>, vector<1x1x8x16xf32>,
    %74 = arith.truncf %70 : vector<8x16xf32> to vector<8x16xbf16>
    %cst_30 = arith.constant dense<0.000000e+00> : vector<8x8xf32>
    %75 = tpu.matmul %74, %59, %cst_30 {dimension_numbers = #tpu.dot_dimension_numbers<[1], [0], [0], [1], [0, 0, 1, 1], [], []>} : vector<8x16xbf16>, vector<16x8xbf16>, vector<8x8xf32> -> vector<8x8xf32>
    %c0_31 = arith.constant 0 : index
    %c0_32 = arith.constant 0 : index
    %c16 = arith.constant 16 : index
    %76 = vector.load %arg3[%c0_31, %c0_32, %c16] : memref<1x8x32xf32, #tpu.memory_space<vmem>>, vector<1x8x8xf32>
    %77 = vector.shape_cast %76 : vector<1x8x8xf32> to vector<8x8xf32>
    %78 = vector.shape_cast %75 : vector<8x8xf32> to vector<1x8x8xf32>
    tpu.vector_store %arg3[%c0_31, %c0_32, %c16], %78 {strides = array<i32>} : memref<1x8x32xf32, #tpu.memory_space<vmem>>, vector<1x8x8xf32>,
    %79 = vector.extract_strided_slice %1 {offsets = [0, 24], sizes = [8, 8], strides = [1, 1]} : vector<8x32xf32> to vector<8x8xf32>
    %80 = arith.truncf %79 : vector<8x8xf32> to vector<8x8xbf16>
    %81 = vector.extract_strided_slice %3 {offsets = [0, 24], sizes = [16, 8], strides = [1, 1]} : vector<16x64xf32> to vector<16x8xf32>
    %82 = arith.truncf %81 : vector<16x8xf32> to vector<16x8xbf16>
    %83 = vector.extract_strided_slice %3 {offsets = [0, 56], sizes = [16, 8], strides = [1, 1]} : vector<16x64xf32> to vector<16x8xf32>
    %84 = arith.truncf %83 : vector<16x8xf32> to vector<16x8xbf16>
    %cst_33 = arith.constant dense<0.000000e+00> : vector<8x16xf32>
    %85 = tpu.matmul %80, %82, %cst_33 {dimension_numbers = #tpu.dot_dimension_numbers<[1], [1], [0], [0], [0, 0, 1, 0], [], []>} : vector<8x8xbf16>, vector<16x8xbf16>, vector<8x16xf32> -> vector<8x16xf32>
    %cst_34 = arith.constant dense<0xFF800000> : vector<8xf32>
    %86 = vector.multi_reduction <maximumf>, %85, %cst_34 [1] : vector<8x16xf32> to vector<8xf32>
    %87 = vector.shape_cast %86 : vector<8xf32> to vector<8x1xf32>
    %88 = vector.broadcast %87 : vector<8x1xf32> to vector<8x16xf32>
    %89 = arith.subf %85, %88 : vector<8x16xf32>
    %90 = math.exp %89 : vector<8x16xf32>
    %cst_35 = arith.constant dense<0.000000e+00> : vector<8xf32>
    %91 = vector.multi_reduction <add>, %90, %cst_35 [1] : vector<8x16xf32> to vector<8xf32>
    %92 = vector.shape_cast %91 : vector<8xf32> to vector<8x1xf32>
    %93 = tpu.reciprocal %92 {approx = true} : vector<8x1xf32> -> vector<8x1xf32>
    %94 = vector.broadcast %93 : vector<8x1xf32> to vector<8x16xf32>
    %95 = arith.mulf %90, %94 : vector<8x16xf32>
    %c0_36 = arith.constant 0 : index
    %c3 = arith.constant 3 : index
    %c0_37 = arith.constant 0 : index
    %c0_38 = arith.constant 0 : index
    %96 = vector.load %arg4[%c0_36, %c3, %c0_37, %c0_38] : memref<1x4x8x16xf32, #tpu.memory_space<vmem>>, vector<1x1x8x16xf32>
    %97 = vector.shape_cast %96 : vector<1x1x8x16xf32> to vector<8x16xf32>
    %98 = vector.shape_cast %95 : vector<8x16xf32> to vector<1x1x8x16xf32>
    tpu.vector_store %arg4[%c0_36, %c3, %c0_37, %c0_38], %98 {strides = array<i32>} : memref<1x4x8x16xf32, #tpu.memory_space<vmem>>, vector<1x1x8x16xf32>,
    %99 = arith.truncf %95 : vector<8x16xf32> to vector<8x16xbf16>
    %cst_39 = arith.constant dense<0.000000e+00> : vector<8x8xf32>
    %100 = tpu.matmul %99, %84, %cst_39 {dimension_numbers = #tpu.dot_dimension_numbers<[1], [0], [0], [1], [0, 0, 1, 1], [], []>} : vector<8x16xbf16>, vector<16x8xbf16>, vector<8x8xf32> -> vector<8x8xf32>
    %c0_40 = arith.constant 0 : index
    %c0_41 = arith.constant 0 : index
    %c24 = arith.constant 24 : index
    %101 = vector.load %arg3[%c0_40, %c0_41, %c24] : memref<1x8x32xf32, #tpu.memory_space<vmem>>, vector<1x8x8xf32>
    %102 = vector.shape_cast %101 : vector<1x8x8xf32> to vector<8x8xf32>
    %103 = vector.shape_cast %100 : vector<8x8xf32> to vector<1x8x8xf32>
    tpu.vector_store %arg3[%c0_40, %c0_41, %c24], %103 {strides = array<i32>} : memref<1x8x32xf32, #tpu.memory_space<vmem>>, vector<1x8x8xf32>,
    return
  }
  func.func @transform_0(%arg0: i32) -> (i32, i32, i32) {
    %c0_i32 = arith.constant 0 : i32
    %c0_i32_0 = arith.constant 0 : i32
    %c0_i32_1 = arith.constant 0 : i32
    return %arg0, %c0_i32, %c0_i32_0 : i32, i32, i32
  }
  func.func @transform_1(%arg0: i32) -> (i32, i32, i32) {
    %c0_i32 = arith.constant 0 : i32
    %c0_i32_0 = arith.constant 0 : i32
    %c0_i32_1 = arith.constant 0 : i32
    return %arg0, %c0_i32, %c0_i32_0 : i32, i32, i32
  }
  func.func @transform_2(%arg0: i32) -> (i32, i32, i32) {
    %c0_i32 = arith.constant 0 : i32
    %c0_i32_0 = arith.constant 0 : i32
    %c0_i32_1 = arith.constant 0 : i32
    return %arg0, %c0_i32, %c0_i32_0 : i32, i32, i32
  }
  func.func @transform_3(%arg0: i32) -> (i32, i32, i32, i32) {
    %c0_i32 = arith.constant 0 : i32
    %c0_i32_0 = arith.constant 0 : i32
    %c0_i32_1 = arith.constant 0 : i32
    %c0_i32_2 = arith.constant 0 : i32
    return %arg0, %c0_i32, %c0_i32_0, %c0_i32_1 : i32, i32, i32, i32
  }
}

module attributes {stable_mosaic.version = 11 : i64} {
  func.func @kernel(%arg0: i32, %arg1: i32, %arg2: memref<8x32xf32, #tpu.memory_space<vmem>>, %arg3: memref<32x64xbf16, #tpu.memory_space<vmem>>, %arg4: memref<1x64xf32, #tpu.memory_space<vmem>>, %arg5: memref<64x32xbf16, #tpu.memory_space<vmem>>, %arg6: memref<1x32xf32, #tpu.memory_space<vmem>>, %arg7: memref<1x32xf32, #tpu.memory_space<vmem>>, %arg8: memref<1x32xf32, #tpu.memory_space<vmem>>, %arg9: memref<8x32xf32, #tpu.memory_space<vmem>>, %arg10: memref<8x32xf32, #tpu.memory_space<vmem>>) attributes {dimension_semantics = [#tpu.dimension_semantics<parallel>, #tpu.dimension_semantics<arbitrary>], iteration_bounds = array<i64: 2, 1>, scalar_prefetch = 0 : i64, scratch_operands = 1 : i64, tpu.core_type = #tpu.core_type<tc>, window_params = [{transform_indices = @transform_0, window_bounds = array<i64: 8, 32>}, {transform_indices = @transform_1, window_bounds = array<i64: 32, 64>}, {transform_indices = @transform_2, window_bounds = array<i64: 1, 64>}, {transform_indices = @transform_3, window_bounds = array<i64: 64, 32>}, {pipeline_mode = #tpu.pipeline_mode<synchronous>, transform_indices = @transform_4, window_bounds = array<i64: 1, 32>}, {pipeline_mode = #tpu.pipeline_mode<synchronous>, transform_indices = @transform_5, window_bounds = array<i64: 1, 32>}, {pipeline_mode = #tpu.pipeline_mode<synchronous>, transform_indices = @transform_6, window_bounds = array<i64: 1, 32>}, {transform_indices = @transform_7, window_bounds = array<i64: 8, 32>}]} {
    %c0_i32 = arith.constant 0 : i32
    %0 = arith.cmpi eq, %arg1, %c0_i32 : i32
    %1 = arith.extui %0 : i1 to i32
    %c0_i32_0 = arith.constant 0 : i32
    %2 = arith.cmpi ne, %1, %c0_i32_0 : i32
    scf.if %2 {
      %cst_16 = arith.constant 0.000000e+00 : f32
      %21 = vector.broadcast %cst_16 : f32 to vector<8x32xf32>
      %c0_17 = arith.constant 0 : index
      %c0_18 = arith.constant 0 : index
      %22 = vector.load %arg10[%c0_17, %c0_18] : memref<8x32xf32, #tpu.memory_space<vmem>>, vector<8x32xf32>
      tpu.vector_store %arg10[%c0_17, %c0_18], %21 {strides = array<i32>} : memref<8x32xf32, #tpu.memory_space<vmem>>, vector<8x32xf32>,
    } else {
    }
    %c0 = arith.constant 0 : index
    %c0_1 = arith.constant 0 : index
    %3 = vector.load %arg2[%c0, %c0_1] : memref<8x32xf32, #tpu.memory_space<vmem>>, vector<8x32xf32>
    %4 = arith.truncf %3 : vector<8x32xf32> to vector<8x32xbf16>
    %c0_2 = arith.constant 0 : index
    %c0_3 = arith.constant 0 : index
    %5 = vector.load %arg3[%c0_2, %c0_3] : memref<32x64xbf16, #tpu.memory_space<vmem>>, vector<32x64xbf16>
    %cst = arith.constant dense<0.000000e+00> : vector<8x64xf32>
    %6 = tpu.matmul %4, %5, %cst {dimension_numbers = #tpu.dot_dimension_numbers<[1], [0], [0], [1], [0, 0, 1, 1], [], []>} : vector<8x32xbf16>, vector<32x64xbf16>, vector<8x64xf32> -> vector<8x64xf32>
    %c0_4 = arith.constant 0 : index
    %c0_5 = arith.constant 0 : index
    %7 = vector.load %arg4[%c0_4, %c0_5] : memref<1x64xf32, #tpu.memory_space<vmem>>, vector<1x64xf32>
    %8 = vector.broadcast %7 : vector<1x64xf32> to vector<8x64xf32>
    %9 = arith.addf %6, %8 : vector<8x64xf32>
    %cst_6 = arith.constant 0.000000e+00 : f32
    %10 = vector.broadcast %cst_6 : f32 to vector<8x64xf32>
    %11 = arith.maximumf %9, %10 : vector<8x64xf32>
    %c0_7 = arith.constant 0 : index
    %c0_8 = arith.constant 0 : index
    %12 = vector.load %arg10[%c0_7, %c0_8] : memref<8x32xf32, #tpu.memory_space<vmem>>, vector<8x32xf32>
    %13 = arith.truncf %11 : vector<8x64xf32> to vector<8x64xbf16>
    %c0_9 = arith.constant 0 : index
    %c0_10 = arith.constant 0 : index
    %14 = vector.load %arg5[%c0_9, %c0_10] : memref<64x32xbf16, #tpu.memory_space<vmem>>, vector<64x32xbf16>
    %cst_11 = arith.constant dense<0.000000e+00> : vector<8x32xf32>
    %15 = tpu.matmul %13, %14, %cst_11 {dimension_numbers = #tpu.dot_dimension_numbers<[1], [0], [0], [1], [0, 0, 1, 1], [], []>} : vector<8x64xbf16>, vector<64x32xbf16>, vector<8x32xf32> -> vector<8x32xf32>
    %16 = arith.addf %12, %15 : vector<8x32xf32>
    %c0_12 = arith.constant 0 : index
    %c0_13 = arith.constant 0 : index
    %17 = vector.load %arg10[%c0_12, %c0_13] : memref<8x32xf32, #tpu.memory_space<vmem>>, vector<8x32xf32>
    tpu.vector_store %arg10[%c0_12, %c0_13], %16 {strides = array<i32>} : memref<8x32xf32, #tpu.memory_space<vmem>>, vector<8x32xf32>,
    %c0_i32_14 = arith.constant 0 : i32
    %18 = arith.cmpi eq, %arg1, %c0_i32_14 : i32
    %19 = arith.extui %18 : i1 to i32
    %c0_i32_15 = arith.constant 0 : i32
    %20 = arith.cmpi ne, %19, %c0_i32_15 : i32
    scf.if %20 {
      %c0_16 = arith.constant 0 : index
      %c0_17 = arith.constant 0 : index
      %21 = vector.load %arg10[%c0_16, %c0_17] : memref<8x32xf32, #tpu.memory_space<vmem>>, vector<8x32xf32>
      %c0_18 = arith.constant 0 : index
      %c0_19 = arith.constant 0 : index
      %22 = vector.load %arg6[%c0_18, %c0_19] : memref<1x32xf32, #tpu.memory_space<vmem>>, vector<1x32xf32>
      %23 = vector.broadcast %22 : vector<1x32xf32> to vector<8x32xf32>
      %24 = arith.addf %21, %23 : vector<8x32xf32>
      %25 = arith.addf %3, %24 : vector<8x32xf32>
      %c0_20 = arith.constant 0 : index
      %c0_21 = arith.constant 0 : index
      %26 = vector.load %arg7[%c0_20, %c0_21] : memref<1x32xf32, #tpu.memory_space<vmem>>, vector<1x32xf32>
      %c0_22 = arith.constant 0 : index
      %c0_23 = arith.constant 0 : index
      %27 = vector.load %arg8[%c0_22, %c0_23] : memref<1x32xf32, #tpu.memory_space<vmem>>, vector<1x32xf32>
      %cst_24 = arith.constant dense<0.000000e+00> : vector<8xf32>
      %28 = vector.multi_reduction <add>, %25, %cst_24 [1] : vector<8x32xf32> to vector<8xf32>
      %29 = vector.shape_cast %28 : vector<8xf32> to vector<8x1xf32>
      %cst_25 = arith.constant 3.200000e+01 : f32
      %30 = vector.broadcast %cst_25 : f32 to vector<8x1xf32>
      %31 = arith.divf %29, %30 : vector<8x1xf32>
      %32 = vector.broadcast %31 : vector<8x1xf32> to vector<8x32xf32>
      %33 = arith.subf %25, %32 : vector<8x32xf32>
      %34 = arith.mulf %33, %33 : vector<8x32xf32>
      %cst_26 = arith.constant dense<0.000000e+00> : vector<8xf32>
      %35 = vector.multi_reduction <add>, %34, %cst_26 [1] : vector<8x32xf32> to vector<8xf32>
      %36 = vector.shape_cast %35 : vector<8xf32> to vector<8x1xf32>
      %cst_27 = arith.constant 3.200000e+01 : f32
      %37 = vector.broadcast %cst_27 : f32 to vector<8x1xf32>
      %38 = arith.divf %36, %37 : vector<8x1xf32>
      %39 = vector.broadcast %31 : vector<8x1xf32> to vector<8x32xf32>
      %40 = arith.subf %25, %39 : vector<8x32xf32>
      %cst_28 = arith.constant 9.99999974E-6 : f32
      %41 = vector.broadcast %cst_28 : f32 to vector<8x1xf32>
      %42 = arith.addf %38, %41 : vector<8x1xf32>
      %43 = math.rsqrt %42 : vector<8x1xf32>
      %44 = vector.broadcast %43 : vector<8x1xf32> to vector<8x32xf32>
      %45 = arith.mulf %40, %44 : vector<8x32xf32>
      %46 = vector.broadcast %26 : vector<1x32xf32> to vector<8x32xf32>
      %47 = arith.mulf %45, %46 : vector<8x32xf32>
      %48 = vector.broadcast %27 : vector<1x32xf32> to vector<8x32xf32>
      %49 = arith.addf %47, %48 : vector<8x32xf32>
      %c0_29 = arith.constant 0 : index
      %c0_30 = arith.constant 0 : index
      %50 = vector.load %arg9[%c0_29, %c0_30] : memref<8x32xf32, #tpu.memory_space<vmem>>, vector<8x32xf32>
      tpu.vector_store %arg9[%c0_29, %c0_30], %49 {strides = array<i32>} : memref<8x32xf32, #tpu.memory_space<vmem>>, vector<8x32xf32>,
    } else {
    }
    return
  }
  func.func @transform_0(%arg0: i32, %arg1: i32) -> (i32, i32) {
    %c0_i32 = arith.constant 0 : i32
    %c0_i32_0 = arith.constant 0 : i32
    return %arg0, %c0_i32 : i32, i32
  }
  func.func @transform_1(%arg0: i32, %arg1: i32) -> (i32, i32) {
    %c0_i32 = arith.constant 0 : i32
    %c0_i32_0 = arith.constant 0 : i32
    return %c0_i32, %arg1 : i32, i32
  }
  func.func @transform_2(%arg0: i32, %arg1: i32) -> (i32, i32) {
    %c0_i32 = arith.constant 0 : i32
    %c0_i32_0 = arith.constant 0 : i32
    return %c0_i32, %arg1 : i32, i32
  }
  func.func @transform_3(%arg0: i32, %arg1: i32) -> (i32, i32) {
    %c0_i32 = arith.constant 0 : i32
    %c0_i32_0 = arith.constant 0 : i32
    return %arg1, %c0_i32 : i32, i32
  }
  func.func @transform_4(%arg0: i32, %arg1: i32) -> (i32, i32) {
    %c0_i32 = arith.constant 0 : i32
    %c0_i32_0 = arith.constant 0 : i32
    %c0_i32_1 = arith.constant 0 : i32
    return %c0_i32, %c0_i32_0 : i32, i32
  }
  func.func @transform_5(%arg0: i32, %arg1: i32) -> (i32, i32) {
    %c0_i32 = arith.constant 0 : i32
    %c0_i32_0 = arith.constant 0 : i32
    %c0_i32_1 = arith.constant 0 : i32
    return %c0_i32, %c0_i32_0 : i32, i32
  }
  func.func @transform_6(%arg0: i32, %arg1: i32) -> (i32, i32) {
    %c0_i32 = arith.constant 0 : i32
    %c0_i32_0 = arith.constant 0 : i32
    %c0_i32_1 = arith.constant 0 : i32
    return %c0_i32, %c0_i32_0 : i32, i32
  }
  func.func @transform_7(%arg0: i32, %arg1: i32) -> (i32, i32) {
    %c0_i32 = arith.constant 0 : i32
    %c0_i32_0 = arith.constant 0 : i32
    return %arg0, %c0_i32 : i32, i32
  }
}

</mosaic_0001>

<llo_original>
// kernel: decoder_forward.16
$region0: #{decoder_forward.16}
  #allocation0 [shape = 'u32[]', space=smem, size = 0x4, offset = 0x4, fixed_abs, tag = 'smem constant byte address 0x4 - core index']
  #allocation1 [shape = 'u32[144,128]{1,0:T(1,128)}', space=vmem, size = 0x12000, scoped, tag = 'internal scratch']
  %s0 = inlined_call_operand.vmem [shape: f32[16,32], index: 0, kind: input, shape index: {}]
  %s1 = inlined_call_operand.vmem [shape: bf16[32,96], index: 1, kind: input, shape index: {}]
  %s2 = inlined_call_operand.vmem [shape: f32[1,96], index: 2, kind: input, shape index: {}]
  %s3 = inlined_call_operand.vmem [shape: f32[16,96], index: 3, kind: output, shape index: {}]
  %s4 = sld [smem:[#allocation0]]
  $region45: #{decoder_forward.16} parent=0
    _
  %s6 = ssub.s32 1, %s4
  %s7 = scalar_select 0, %s6, %s4
  loop: start=0, step=1, limit=4
  $region2: #{decoder_forward.16} parent=0 // loop_pre_header
    _
  $region3: #{decoder_forward.16} parent=0 // loop_header
    %s9 = sphi 0, %s13
    %p10 = scmp.ge.s32.totalorder %s9, 4
    %s19 = sphi 0, %s21
    %s22 = sphi 0, %s19
    %s23 = sphi 0, %s22
    %s39 = sphi 0, %s23
    %s43 = sphi 0, %s43
    %s45 = sphi 0, %s43
    %s46 = sphi 0, %s45
    %s60 = sphi 0, %s46
    %s64 = sphi 0, %s64
    %s66 = sphi 0, %s64
    %s67 = sphi 0, %s66
    %s81 = sphi 0, %s67
    %s87 = sphi 0, %s89
    %s90 = sphi 0, %s87
    %s91 = sphi 0, %s90
    %s107 = sphi 0, %s91
  $region4: #{decoder_forward.16} parent=0 // loop_header_branch
    %12 = sbr.rel (%p10) target = $region8
  $region5: #{decoder_forward.16} parent=0 // loop_body
    %s14 = ssub.s32 %s9, 1
    %s15 = ssub.s32 %s9, 2
    %s16 = sadd.s32 %s9, 1
    %s17 = ssub.s32 %s9, %s16
    %p18 = scmp.eq.s32.totalorder %s17, 0
    %s20 = sadd.s32 %s19, 1
    %s21 = scalar_select %p18, %s19, %s20
    %p24 = pneg %p18
    %p25 = scmp.eq.s32.totalorder %s9, 1
    %p26 = por %p24, %p25
    %p27 = scmp.ne.s32.totalorder %s19, %s22
    %p28 = scmp.eq.s32.totalorder %s9, 0
    %p29 = por %p27, %p28
    %p30 = scmp.ne.s32.totalorder %s19, %s22
    %p31 = scmp.eq.s32.totalorder %s14, 1
    %p32 = por %p30, %p31
    %p33 = scmp.ne.s32.totalorder %s22, %s23
    %p34 = scmp.eq.s32.totalorder %s14, 0
    %p35 = por %p33, %p34
    %p36 = scmp.ne.s32.totalorder %s22, %s23
    %p37 = scmp.eq.s32.totalorder %s15, 1
    %p38 = por %p36, %p37
    %p40 = scmp.ne.s32.totalorder %s23, %s39
    %p41 = scmp.eq.s32.totalorder %s15, 0
    %p42 = por %p40, %p41
    %s44 = sadd.s32 %s43, 1
    %p47 = scmp.eq.s32.totalorder %s9, 1
    %p48 = scmp.ne.s32.totalorder %s43, %s45
    %p49 = scmp.eq.s32.totalorder %s9, 0
    %p50 = por %p48, %p49
    %p51 = scmp.ne.s32.totalorder %s43, %s45
    %p52 = scmp.eq.s32.totalorder %s14, 1
    %p53 = por %p51, %p52
    %p54 = scmp.ne.s32.totalorder %s45, %s46
    %p55 = scmp.eq.s32.totalorder %s14, 0
    %p56 = por %p54, %p55
    %p57 = scmp.ne.s32.totalorder %s45, %s46
    %p58 = scmp.eq.s32.totalorder %s15, 1
    %p59 = por %p57, %p58
    %p61 = scmp.ne.s32.totalorder %s46, %s60
    %p62 = scmp.eq.s32.totalorder %s15, 0
    %p63 = por %p61, %p62
    %s65 = sadd.s32 %s64, 1
    %p68 = scmp.eq.s32.totalorder %s9, 1
    %p69 = scmp.ne.s32.totalorder %s64, %s66
    %p70 = scmp.eq.s32.totalorder %s9, 0
    %p71 = por %p69, %p70
    %p72 = scmp.ne.s32.totalorder %s64, %s66
    %p73 = scmp.eq.s32.totalorder %s14, 1
    %p74 = por %p72, %p73
    %p75 = scmp.ne.s32.totalorder %s66, %s67
    %p76 = scmp.eq.s32.totalorder %s14, 0
    %p77 = por %p75, %p76
    %p78 = scmp.ne.s32.totalorder %s66, %s67
    %p79 = scmp.eq.s32.totalorder %s15, 1
    %p80 = por %p78, %p79
    %p82 = scmp.ne.s32.totalorder %s67, %s81
    %p83 = scmp.eq.s32.totalorder %s15, 0
    %p84 = por %p82, %p83
    %s85 = ssub.s32 %s9, %s16
    %p86 = scmp.eq.s32.totalorder %s85, 0
    %s88 = sadd.s32 %s87, 1
    %s89 = scalar_select %p86, %s87, %s88
    %p92 = pneg %p86
    %p93 = scmp.eq.s32.totalorder %s9, 1
    %p94 = por %p92, %p93
    %p95 = scmp.ne.s32.totalorder %s87, %s90
    %p96 = scmp.eq.s32.totalorder %s9, 0
    %p97 = por %p95, %p96
    %p98 = scmp.ne.s32.totalorder %s87, %s90
    %p99 = scmp.eq.s32.totalorder %s14, 1
    %p100 = por %p98, %p99
    %p101 = scmp.ne.s32.totalorder %s90, %s91
    %p102 = scmp.eq.s32.totalorder %s14, 0
    %p103 = por %p101, %p102
    %p104 = scmp.ne.s32.totalorder %s90, %s91
    %p105 = scmp.eq.s32.totalorder %s15, 1
    %p106 = por %p104, %p105
    %p108 = scmp.ne.s32.totalorder %s91, %s107
    %p109 = scmp.eq.s32.totalorder %s15, 0
    %p110 = por %p108, %p109
    %p111 = scmp.le.s32.totalorder 1, %s9
    %p112 = scmp.lt.s32.totalorder %s9, 3
    %p113 = pnand %p111, %p112
    %p114 = pneg %p113
    // Predicated region
    $region9: #{decoder_forward.16} parent=5 // pred_check
      _
    $region10: #{decoder_forward.16} parent=5 // pred_check_branch
      %116 = sbr.rel (%p113) target = $region12
    $region11: #{decoder_forward.16} parent=5 // pred_region
      %s117 = ssub.s32 %s9, 1
      // Predicated region
      $region13: #{decoder_forward.16} parent=11 // pred_check
        %p118 = pneg %p56
      $region14: #{decoder_forward.16} parent=11 // pred_check_branch
        %120 = sbr.rel (%p118) target = $region16
      $region15: #{decoder_forward.16} parent=11 // pred_region
        _
      $region16: #{decoder_forward.16} parent=11 // pred_fallthru
        _
      // Predicated region
      $region17: #{decoder_forward.16} parent=11 // pred_check
        %p121 = pneg %p77
      $region18: #{decoder_forward.16} parent=11 // pred_check_branch
        %123 = sbr.rel (%p121) target = $region20
      $region19: #{decoder_forward.16} parent=11 // pred_region
        _
      $region20: #{decoder_forward.16} parent=11 // pred_fallthru
        _
    $region12: #{decoder_forward.16} parent=5 // pred_fallthru
      _
    %p124 = scmp.lt.s32.totalorder %s9, 2
    // Predicated region
    $region21: #{decoder_forward.16} parent=5 // pred_check
      %p125 = pneg %p124
    $region22: #{decoder_forward.16} parent=5 // pred_check_branch
      %127 = sbr.rel (%p125) target = $region24
    $region23: #{decoder_forward.16} parent=5 // pred_region
      // Predicated region
      $region25: #{decoder_forward.16} parent=23 // pred_check
        %p128 = pneg %p29
      $region26: #{decoder_forward.16} parent=23 // pred_check_branch
        %130 = sbr.rel (%p128) target = $region28
      $region27: #{decoder_forward.16} parent=23 // pred_region
        %p131 = scmp.lt.s32.totalorder %s9, 1
        %s132 = scalar_select %p131, %s9, 1
        %s133 = smul.addr %s132, 8
        %s134 = scalar_lea.vmem %s0, %s133
      $region28: #{decoder_forward.16} parent=23 // pred_fallthru
        _
    $region24: #{decoder_forward.16} parent=5 // pred_fallthru
      _
    %p135 = scmp.le.s32.totalorder 1, %s9
    %p136 = scmp.lt.s32.totalorder %s9, 3
    %p137 = pnand %p135, %p136
    %p138 = pneg %p137
    // Predicated region
    $region29: #{decoder_forward.16} parent=5 // pred_check
      _
    $region30: #{decoder_forward.16} parent=5 // pred_check_branch
      %140 = sbr.rel (%p137) target = $region32
    $region31: #{decoder_forward.16} parent=5 // pred_region
      %s141 = ssub.s32 %s9, 1
      %p142 = scmp.lt.s32.totalorder %s14, 1
      %s143 = scalar_select %p142, %s14, 1
      %s144 = smul.addr %s143, 8
      %s145 = scalar_lea.vmem %s0, %s144
      %p146 = pneg %p35
      %p147 = pneg %p32
      %p148 = pneg %p56
      %p149 = pneg %p53
      %p150 = pneg %p77
      %p151 = pneg %p74
      %p152 = pneg %p103
      %p153 = pneg %p100
      %p154 = scmp.lt.s32.totalorder %s14, 1
      %s155 = scalar_select %p154, %s14, 1
      %s156 = smul.addr %s155, 8
      %s157 = scalar_lea.vmem %s3, %s156
      %p158 = scmp.lt.s32.totalorder %s14, 1
      %s159 = scalar_select %p158, %s14, 1
      %s160 = smul.addr %s159, 8
      %s161 = scalar_lea.vmem %s0, %s160
      %p162 = scmp.lt.s32.totalorder %s14, 1
      %s163 = scalar_select %p162, %s14, 1
      %s164 = smul.addr %s163, 8
      %s165 = scalar_lea.vmem %s3, %s164
      %v167 = vld [vmem:[%s161] sm:$0xff]
      %v168 = vpack.c.bf16 %v167, %v167
      %v169 = vld [vmem:[%s1] sm:$0xf]
      %v170 = vld [vmem:[%s1 + $0x4] sm:$0xf]
      %v171 = vld [vmem:[%s1 + $0x8] sm:$0xf]
      %v172 = vld [vmem:[%s1 + $0xc] sm:$0xf]
      %v173 = vld [vmem:[%s2] sm:$0x1]
      %v175 = vlaneseq
      %v176 = vshrl.u32 %v175, 7
      %v177 = vsub.s32 0, %v176
      %v178 = vrot.slane %v173, %v177
      %v184 = vunpack.c.l.b16 %v169
      %v185 = vunpack.c.l.b16 %v170
      %v186 = vunpack.c.l.b16 %v171
      %v187 = vunpack.c.l.b16 %v172
      %v188 = vpack.c.b16 %v185, %v184
      %v189 = vpack.c.b16 %v187, %v186
      %vm192 = vcmask 261120
      %v194 = vsel %vm192, %v168, 0
      %196 = vmatprep.subr.bf16.mxu0 0
      %197 = vmatpush1.bf16.msra.mxu0 %v188
      %198 = vmatprep.subr.bf16.mxu0 0
      %199 = vmatpush1.bf16.msra.mxu0 %v189
      %200 = vmatprep.subr.bf16.mxu0 0
      %201 = vmatpush1.bf16.msra.mxu0 0
      %202 = vmatprep.subr.bf16.mxu0 0
      %203 = vmatpush1.bf16.msra.mxu0 0
      %204 = vmatprep.subr.bf16.mxu0 0
      %205 = vmatpush1.bf16.msra.mxu0 0
      %206 = vmatprep.subr.bf16.mxu0 0
      %207 = vmatpush1.bf16.msra.mxu0 0
      %208 = vmatprep.subr.bf16.mxu0 0
      %209 = vmatpush1.bf16.msra.mxu0 0
      %210 = vmatprep.subr.bf16.mxu0 0
      %211 = vmatpush1.bf16.msra.mxu0 0
      %212 = vmatprep.subr.bf16.mxu0 0
      %213 = vmatpush1.bf16.msra.mxu0 0
      %214 = vmatprep.subr.bf16.mxu0 0
      %215 = vmatpush1.bf16.msra.mxu0 0
      %216 = vmatprep.subr.bf16.mxu0 0
      %217 = vmatpush1.bf16.msra.mxu0 0
      %218 = vmatprep.subr.bf16.mxu0 0
      %219 = vmatpush1.bf16.msra.mxu0 0
      %220 = vmatprep.subr.bf16.mxu0 0
      %221 = vmatpush1.bf16.msra.mxu0 0
      %222 = vmatprep.subr.bf16.mxu0 0
      %223 = vmatpush1.bf16.msra.mxu0 0
      %224 = vmatprep.subr.bf16.mxu0 0
      %225 = vmatpush1.bf16.msra.mxu0 0
      %226 = vmatprep.subr.bf16.mxu0 0
      %227 = vmatpush1.bf16.msra.mxu0 0
      %228 = vmatprep.mubr.bf16.mxu0 0
      %229 = vmatmul.mubr.bf16.gmra.mrb[0].mxu0 %v194
      %v230 = vpop.f32.mrb[0].mxu0
      %v231 = vadd.f32 %v178, %v230
      %v232 = vpop.f32.mrb[0].mxu0
      %v233 = vpop.f32.mrb[0].mxu0
      %v234 = vpop.f32.mrb[0].mxu0
      %235 = vdwg.mxu0
      %vm236 = vcmask 785408
      %237 = vst.msk [vmem:[%s165] sm:$0xff] %vm236, %v231
      %p238 = scmp.lt.s32.totalorder %s14, 1
      %s239 = scalar_select %p238, %s14, 1
      %s240 = smul.addr %s239, 8
      %s241 = scalar_lea.vmem %s3, %s240
      // Predicated region
      $region33: #{decoder_forward.16} parent=31 // pred_check
        %p242 = pneg %p100
      $region34: #{decoder_forward.16} parent=31 // pred_check_branch
        %244 = sbr.rel (%p242) target = $region36
      $region35: #{decoder_forward.16} parent=31 // pred_region
        _
      $region36: #{decoder_forward.16} parent=31 // pred_fallthru
        _
    $region32: #{decoder_forward.16} parent=5 // pred_fallthru
      _
    %p245 = scmp.le.s32.totalorder 2, %s9
    // Predicated region
    $region37: #{decoder_forward.16} parent=5 // pred_check
      %p246 = pneg %p245
    $region38: #{decoder_forward.16} parent=5 // pred_check_branch
      %248 = sbr.rel (%p246) target = $region40
    $region39: #{decoder_forward.16} parent=5 // pred_region
      %s249 = ssub.s32 %s9, 2
      // Predicated region
      $region41: #{decoder_forward.16} parent=39 // pred_check
        %p250 = pneg %p106
      $region42: #{decoder_forward.16} parent=39 // pred_check_branch
        %252 = sbr.rel (%p250) target = $region44
      $region43: #{decoder_forward.16} parent=39 // pred_region
        %p253 = scmp.lt.s32.totalorder %s15, 1
        %s254 = scalar_select %p253, %s15, 1
        %s255 = smul.addr %s254, 8
        %s256 = scalar_lea.vmem %s3, %s255
      $region44: #{decoder_forward.16} parent=39 // pred_fallthru
        _
    $region40: #{decoder_forward.16} parent=5 // pred_fallthru
      _
  $region6: #{decoder_forward.16} parent=0 // loop_footer
    %s13 = sadd.s32 1, %s9
  $region7: #{decoder_forward.16} parent=0 // loop_footer_branch
    %8 = sbr.rel target = $region3
  $region8: #{decoder_forward.16} parent=0 // loop_exit
    _

// kernel: decoder_forward.19
$region0: #{decoder_forward.19}
  #allocation0 [shape = 'u32[]', space=smem, size = 0x4, offset = 0x4, fixed_abs, tag = 'smem constant byte address 0x4 - core index']
  #allocation1 [shape = 'u32[144,128]{1,0:T(1,128)}', space=vmem, size = 0x12000, scoped, tag = 'internal scratch']
  %s0 = inlined_call_operand.vmem [shape: f32[16,32], index: 0, kind: input, shape index: {}]
  %s1 = inlined_call_operand.vmem [shape: bf16[32,32], index: 1, kind: input, shape index: {}]
  %s2 = inlined_call_operand.vmem [shape: f32[1,32], index: 2, kind: input, shape index: {}]
  %s3 = inlined_call_operand.vmem [shape: f32[16,32], index: 3, kind: output, shape index: {}]
  %s4 = sld [smem:[#allocation0]]
  $region45: #{decoder_forward.19} parent=0
    _
  %s6 = ssub.s32 1, %s4
  %s7 = scalar_select 0, %s6, %s4
  loop: start=0, step=1, limit=4
  $region2: #{decoder_forward.19} parent=0 // loop_pre_header
    _
  $region3: #{decoder_forward.19} parent=0 // loop_header
    %s9 = sphi 0, %s13
    %p10 = scmp.ge.s32.totalorder %s9, 4
    %s19 = sphi 0, %s21
    %s22 = sphi 0, %s19
    %s23 = sphi 0, %s22
    %s39 = sphi 0, %s23
    %s43 = sphi 0, %s43
    %s45 = sphi 0, %s43
    %s46 = sphi 0, %s45
    %s60 = sphi 0, %s46
    %s64 = sphi 0, %s64
    %s66 = sphi 0, %s64
    %s67 = sphi 0, %s66
    %s81 = sphi 0, %s67
    %s87 = sphi 0, %s89
    %s90 = sphi 0, %s87
    %s91 = sphi 0, %s90
    %s107 = sphi 0, %s91
  $region4: #{decoder_forward.19} parent=0 // loop_header_branch
    %12 = sbr.rel (%p10) target = $region8
  $region5: #{decoder_forward.19} parent=0 // loop_body
    %s14 = ssub.s32 %s9, 1
    %s15 = ssub.s32 %s9, 2
    %s16 = sadd.s32 %s9, 1
    %s17 = ssub.s32 %s9, %s16
    %p18 = scmp.eq.s32.totalorder %s17, 0
    %s20 = sadd.s32 %s19, 1
    %s21 = scalar_select %p18, %s19, %s20
    %p24 = pneg %p18
    %p25 = scmp.eq.s32.totalorder %s9, 1
    %p26 = por %p24, %p25
    %p27 = scmp.ne.s32.totalorder %s19, %s22
    %p28 = scmp.eq.s32.totalorder %s9, 0
    %p29 = por %p27, %p28
    %p30 = scmp.ne.s32.totalorder %s19, %s22
    %p31 = scmp.eq.s32.totalorder %s14, 1
    %p32 = por %p30, %p31
    %p33 = scmp.ne.s32.totalorder %s22, %s23
    %p34 = scmp.eq.s32.totalorder %s14, 0
    %p35 = por %p33, %p34
    %p36 = scmp.ne.s32.totalorder %s22, %s23
    %p37 = scmp.eq.s32.totalorder %s15, 1
    %p38 = por %p36, %p37
    %p40 = scmp.ne.s32.totalorder %s23, %s39
    %p41 = scmp.eq.s32.totalorder %s15, 0
    %p42 = por %p40, %p41
    %s44 = sadd.s32 %s43, 1
    %p47 = scmp.eq.s32.totalorder %s9, 1
    %p48 = scmp.ne.s32.totalorder %s43, %s45
    %p49 = scmp.eq.s32.totalorder %s9, 0
    %p50 = por %p48, %p49
    %p51 = scmp.ne.s32.totalorder %s43, %s45
    %p52 = scmp.eq.s32.totalorder %s14, 1
    %p53 = por %p51, %p52
    %p54 = scmp.ne.s32.totalorder %s45, %s46
    %p55 = scmp.eq.s32.totalorder %s14, 0
    %p56 = por %p54, %p55
    %p57 = scmp.ne.s32.totalorder %s45, %s46
    %p58 = scmp.eq.s32.totalorder %s15, 1
    %p59 = por %p57, %p58
    %p61 = scmp.ne.s32.totalorder %s46, %s60
    %p62 = scmp.eq.s32.totalorder %s15, 0
    %p63 = por %p61, %p62
    %s65 = sadd.s32 %s64, 1
    %p68 = scmp.eq.s32.totalorder %s9, 1
    %p69 = scmp.ne.s32.totalorder %s64, %s66
    %p70 = scmp.eq.s32.totalorder %s9, 0
    %p71 = por %p69, %p70
    %p72 = scmp.ne.s32.totalorder %s64, %s66
    %p73 = scmp.eq.s32.totalorder %s14, 1
    %p74 = por %p72, %p73
    %p75 = scmp.ne.s32.totalorder %s66, %s67
    %p76 = scmp.eq.s32.totalorder %s14, 0
    %p77 = por %p75, %p76
    %p78 = scmp.ne.s32.totalorder %s66, %s67
    %p79 = scmp.eq.s32.totalorder %s15, 1
    %p80 = por %p78, %p79
    %p82 = scmp.ne.s32.totalorder %s67, %s81
    %p83 = scmp.eq.s32.totalorder %s15, 0
    %p84 = por %p82, %p83
    %s85 = ssub.s32 %s9, %s16
    %p86 = scmp.eq.s32.totalorder %s85, 0
    %s88 = sadd.s32 %s87, 1
    %s89 = scalar_select %p86, %s87, %s88
    %p92 = pneg %p86
    %p93 = scmp.eq.s32.totalorder %s9, 1
    %p94 = por %p92, %p93
    %p95 = scmp.ne.s32.totalorder %s87, %s90
    %p96 = scmp.eq.s32.totalorder %s9, 0
    %p97 = por %p95, %p96
    %p98 = scmp.ne.s32.totalorder %s87, %s90
    %p99 = scmp.eq.s32.totalorder %s14, 1
    %p100 = por %p98, %p99
    %p101 = scmp.ne.s32.totalorder %s90, %s91
    %p102 = scmp.eq.s32.totalorder %s14, 0
    %p103 = por %p101, %p102
    %p104 = scmp.ne.s32.totalorder %s90, %s91
    %p105 = scmp.eq.s32.totalorder %s15, 1
    %p106 = por %p104, %p105
    %p108 = scmp.ne.s32.totalorder %s91, %s107
    %p109 = scmp.eq.s32.totalorder %s15, 0
    %p110 = por %p108, %p109
    %p111 = scmp.le.s32.totalorder 1, %s9
    %p112 = scmp.lt.s32.totalorder %s9, 3
    %p113 = pnand %p111, %p112
    %p114 = pneg %p113
    // Predicated region
    $region9: #{decoder_forward.19} parent=5 // pred_check
      _
    $region10: #{decoder_forward.19} parent=5 // pred_check_branch
      %116 = sbr.rel (%p113) target = $region12
    $region11: #{decoder_forward.19} parent=5 // pred_region
      %s117 = ssub.s32 %s9, 1
      // Predicated region
      $region13: #{decoder_forward.19} parent=11 // pred_check
        %p118 = pneg %p56
      $region14: #{decoder_forward.19} parent=11 // pred_check_branch
        %120 = sbr.rel (%p118) target = $region16
      $region15: #{decoder_forward.19} parent=11 // pred_region
        _
      $region16: #{decoder_forward.19} parent=11 // pred_fallthru
        _
      // Predicated region
      $region17: #{decoder_forward.19} parent=11 // pred_check
        %p121 = pneg %p77
      $region18: #{decoder_forward.19} parent=11 // pred_check_branch
        %123 = sbr.rel (%p121) target = $region20
      $region19: #{decoder_forward.19} parent=11 // pred_region
        _
      $region20: #{decoder_forward.19} parent=11 // pred_fallthru
        _
    $region12: #{decoder_forward.19} parent=5 // pred_fallthru
      _
    %p124 = scmp.lt.s32.totalorder %s9, 2
    // Predicated region
    $region21: #{decoder_forward.19} parent=5 // pred_check
      %p125 = pneg %p124
    $region22: #{decoder_forward.19} parent=5 // pred_check_branch
      %127 = sbr.rel (%p125) target = $region24
    $region23: #{decoder_forward.19} parent=5 // pred_region
      // Predicated region
      $region25: #{decoder_forward.19} parent=23 // pred_check
        %p128 = pneg %p29
      $region26: #{decoder_forward.19} parent=23 // pred_check_branch
        %130 = sbr.rel (%p128) target = $region28
      $region27: #{decoder_forward.19} parent=23 // pred_region
        %p131 = scmp.lt.s32.totalorder %s9, 1
        %s132 = scalar_select %p131, %s9, 1
        %s133 = smul.addr %s132, 8
        %s134 = scalar_lea.vmem %s0, %s133
      $region28: #{decoder_forward.19} parent=23 // pred_fallthru
        _
    $region24: #{decoder_forward.19} parent=5 // pred_fallthru
      _
    %p135 = scmp.le.s32.totalorder 1, %s9
    %p136 = scmp.lt.s32.totalorder %s9, 3
    %p137 = pnand %p135, %p136
    %p138 = pneg %p137
    // Predicated region
    $region29: #{decoder_forward.19} parent=5 // pred_check
      _
    $region30: #{decoder_forward.19} parent=5 // pred_check_branch
      %140 = sbr.rel (%p137) target = $region32
    $region31: #{decoder_forward.19} parent=5 // pred_region
      %s141 = ssub.s32 %s9, 1
      %p142 = scmp.lt.s32.totalorder %s14, 1
      %s143 = scalar_select %p142, %s14, 1
      %s144 = smul.addr %s143, 8
      %s145 = scalar_lea.vmem %s0, %s144
      %p146 = pneg %p35
      %p147 = pneg %p32
      %p148 = pneg %p56
      %p149 = pneg %p53
      %p150 = pneg %p77
      %p151 = pneg %p74
      %p152 = pneg %p103
      %p153 = pneg %p100
      %p154 = scmp.lt.s32.totalorder %s14, 1
      %s155 = scalar_select %p154, %s14, 1
      %s156 = smul.addr %s155, 8
      %s157 = scalar_lea.vmem %s3, %s156
      %p158 = scmp.lt.s32.totalorder %s14, 1
      %s159 = scalar_select %p158, %s14, 1
      %s160 = smul.addr %s159, 8
      %s161 = scalar_lea.vmem %s0, %s160
      %p162 = scmp.lt.s32.totalorder %s14, 1
      %s163 = scalar_select %p162, %s14, 1
      %s164 = smul.addr %s163, 8
      %s165 = scalar_lea.vmem %s3, %s164
      %v167 = vld [vmem:[%s161] sm:$0xff]
      %v168 = vpack.c.bf16 %v167, %v167
      %v169 = vld [vmem:[%s1] sm:$0xf]
      %v170 = vld [vmem:[%s1 + $0x4] sm:$0xf]
      %v171 = vld [vmem:[%s1 + $0x8] sm:$0xf]
      %v172 = vld [vmem:[%s1 + $0xc] sm:$0xf]
      %v173 = vld [vmem:[%s2] sm:$0x1]
      %v175 = vlaneseq
      %v176 = vshrl.u32 %v175, 7
      %v177 = vsub.s32 0, %v176
      %v178 = vrot.slane %v173, %v177
      %v184 = vunpack.c.l.b16 %v169
      %v185 = vunpack.c.l.b16 %v170
      %v186 = vunpack.c.l.b16 %v171
      %v187 = vunpack.c.l.b16 %v172
      %v188 = vpack.c.b16 %v185, %v184
      %v189 = vpack.c.b16 %v187, %v186
      %vm192 = vcmask 261120
      %v194 = vsel %vm192, %v168, 0
      %196 = vmatprep.subr.bf16.mxu0 0
      %197 = vmatpush1.bf16.msra.mxu0 %v188
      %198 = vmatprep.subr.bf16.mxu0 0
      %199 = vmatpush1.bf16.msra.mxu0 %v189
      %200 = vmatprep.subr.bf16.mxu0 0
      %201 = vmatpush1.bf16.msra.mxu0 0
      %202 = vmatprep.subr.bf16.mxu0 0
      %203 = vmatpush1.bf16.msra.mxu0 0
      %204 = vmatprep.subr.bf16.mxu0 0
      %205 = vmatpush1.bf16.msra.mxu0 0
      %206 = vmatprep.subr.bf16.mxu0 0
      %207 = vmatpush1.bf16.msra.mxu0 0
      %208 = vmatprep.subr.bf16.mxu0 0
      %209 = vmatpush1.bf16.msra.mxu0 0
      %210 = vmatprep.subr.bf16.mxu0 0
      %211 = vmatpush1.bf16.msra.mxu0 0
      %212 = vmatprep.subr.bf16.mxu0 0
      %213 = vmatpush1.bf16.msra.mxu0 0
      %214 = vmatprep.subr.bf16.mxu0 0
      %215 = vmatpush1.bf16.msra.mxu0 0
      %216 = vmatprep.subr.bf16.mxu0 0
      %217 = vmatpush1.bf16.msra.mxu0 0
      %218 = vmatprep.subr.bf16.mxu0 0
      %219 = vmatpush1.bf16.msra.mxu0 0
      %220 = vmatprep.subr.bf16.mxu0 0
      %221 = vmatpush1.bf16.msra.mxu0 0
      %222 = vmatprep.subr.bf16.mxu0 0
      %223 = vmatpush1.bf16.msra.mxu0 0
      %224 = vmatprep.subr.bf16.mxu0 0
      %225 = vmatpush1.bf16.msra.mxu0 0
      %226 = vmatprep.subr.bf16.mxu0 0
      %227 = vmatpush1.bf16.msra.mxu0 0
      %228 = vmatprep.mubr.bf16.mxu0 0
      %229 = vmatmul.mubr.bf16.gmra.mrb[0].mxu0 %v194
      %v230 = vpop.f32.mrb[0].mxu0
      %v231 = vadd.f32 %v178, %v230
      %v232 = vpop.f32.mrb[0].mxu0
      %v233 = vpop.f32.mrb[0].mxu0
      %v234 = vpop.f32.mrb[0].mxu0
      %235 = vdwg.mxu0
      %236 = vst.msk [vmem:[%s165] sm:$0xff] %vm192, %v231
      %p237 = scmp.lt.s32.totalorder %s14, 1
      %s238 = scalar_select %p237, %s14, 1
      %s239 = smul.addr %s238, 8
      %s240 = scalar_lea.vmem %s3, %s239
      // Predicated region
      $region33: #{decoder_forward.19} parent=31 // pred_check
        %p241 = pneg %p100
      $region34: #{decoder_forward.19} parent=31 // pred_check_branch
        %243 = sbr.rel (%p241) target = $region36
      $region35: #{decoder_forward.19} parent=31 // pred_region
        _
      $region36: #{decoder_forward.19} parent=31 // pred_fallthru
        _
    $region32: #{decoder_forward.19} parent=5 // pred_fallthru
      _
    %p244 = scmp.le.s32.totalorder 2, %s9
    // Predicated region
    $region37: #{decoder_forward.19} parent=5 // pred_check
      %p245 = pneg %p244
    $region38: #{decoder_forward.19} parent=5 // pred_check_branch
      %247 = sbr.rel (%p245) target = $region40
    $region39: #{decoder_forward.19} parent=5 // pred_region
      %s248 = ssub.s32 %s9, 2
      // Predicated region
      $region41: #{decoder_forward.19} parent=39 // pred_check
        %p249 = pneg %p106
      $region42: #{decoder_forward.19} parent=39 // pred_check_branch
        %251 = sbr.rel (%p249) target = $region44
      $region43: #{decoder_forward.19} parent=39 // pred_region
        %p252 = scmp.lt.s32.totalorder %s15, 1
        %s253 = scalar_select %p252, %s15, 1
        %s254 = smul.addr %s253, 8
        %s255 = scalar_lea.vmem %s3, %s254
      $region44: #{decoder_forward.19} parent=39 // pred_fallthru
        _
    $region40: #{decoder_forward.19} parent=5 // pred_fallthru
      _
  $region6: #{decoder_forward.19} parent=0 // loop_footer
    %s13 = sadd.s32 1, %s9
  $region7: #{decoder_forward.19} parent=0 // loop_footer_branch
    %8 = sbr.rel target = $region3
  $region8: #{decoder_forward.19} parent=0 // loop_exit
    _

// kernel: decoder_forward.18
$region0: #{decoder_forward.18}
  #allocation0 [shape = 'u32[]', space=smem, size = 0x4, offset = 0x4, fixed_abs, tag = 'smem constant byte address 0x4 - core index']
  #allocation1 [shape = 'u32[144,128]{1,0:T(1,128)}', space=vmem, size = 0x12000, scoped, tag = 'internal scratch']
  %s0 = inlined_call_operand.vmem [shape: f32[16,32], index: 0, kind: input, shape index: {}]
  %s1 = inlined_call_operand.vmem [shape: f32[16,32], index: 1, kind: input, shape index: {}]
  %s2 = inlined_call_operand.vmem [shape: bf16[32,32], index: 2, kind: input, shape index: {}]
  %s3 = inlined_call_operand.vmem [shape: f32[1,32], index: 3, kind: input, shape index: {}]
  %s4 = inlined_call_operand.vmem [shape: f32[1,32], index: 4, kind: input, shape index: {}]
  %s5 = inlined_call_operand.vmem [shape: f32[1,32], index: 5, kind: input, shape index: {}]
  %s6 = inlined_call_operand.vmem [shape: f32[16,32], index: 6, kind: output, shape index: {}]
  %s7 = sld [smem:[#allocation0]]
  $region57: #{decoder_forward.18} parent=0
    _
  %s9 = ssub.s32 1, %s7
  %s10 = scalar_select 0, %s9, %s7
  loop: start=0, step=1, limit=4
  $region2: #{decoder_forward.18} parent=0 // loop_pre_header
    _
  $region3: #{decoder_forward.18} parent=0 // loop_header
    %s12 = sphi 0, %s16
    %p13 = scmp.ge.s32.totalorder %s12, 4
    %s22 = sphi 0, %s24
    %s25 = sphi 0, %s22
    %s26 = sphi 0, %s25
    %s42 = sphi 0, %s26
    %s48 = sphi 0, %s50
    %s51 = sphi 0, %s48
    %s52 = sphi 0, %s51
    %s68 = sphi 0, %s52
    %s72 = sphi 0, %s72
    %s74 = sphi 0, %s72
    %s75 = sphi 0, %s74
    %s89 = sphi 0, %s75
    %s93 = sphi 0, %s93
    %s95 = sphi 0, %s93
    %s96 = sphi 0, %s95
    %s110 = sphi 0, %s96
    %s114 = sphi 0, %s114
    %s116 = sphi 0, %s114
    %s117 = sphi 0, %s116
    %s131 = sphi 0, %s117
    %s135 = sphi 0, %s135
    %s137 = sphi 0, %s135
    %s138 = sphi 0, %s137
    %s152 = sphi 0, %s138
    %s158 = sphi 0, %s160
    %s161 = sphi 0, %s158
    %s162 = sphi 0, %s161
    %s178 = sphi 0, %s162
  $region4: #{decoder_forward.18} parent=0 // loop_header_branch
    %15 = sbr.rel (%p13) target = $region8
  $region5: #{decoder_forward.18} parent=0 // loop_body
    %s17 = ssub.s32 %s12, 1
    %s18 = ssub.s32 %s12, 2
    %s19 = sadd.s32 %s12, 1
    %s20 = ssub.s32 %s12, %s19
    %p21 = scmp.eq.s32.totalorder %s20, 0
    %s23 = sadd.s32 %s22, 1
    %s24 = scalar_select %p21, %s22, %s23
    %p27 = pneg %p21
    %p28 = scmp.eq.s32.totalorder %s12, 1
    %p29 = por %p27, %p28
    %p30 = scmp.ne.s32.totalorder %s22, %s25
    %p31 = scmp.eq.s32.totalorder %s12, 0
    %p32 = por %p30, %p31
    %p33 = scmp.ne.s32.totalorder %s22, %s25
    %p34 = scmp.eq.s32.totalorder %s17, 1
    %p35 = por %p33, %p34
    %p36 = scmp.ne.s32.totalorder %s25, %s26
    %p37 = scmp.eq.s32.totalorder %s17, 0
    %p38 = por %p36, %p37
    %p39 = scmp.ne.s32.totalorder %s25, %s26
    %p40 = scmp.eq.s32.totalorder %s18, 1
    %p41 = por %p39, %p40
    %p43 = scmp.ne.s32.totalorder %s26, %s42
    %p44 = scmp.eq.s32.totalorder %s18, 0
    %p45 = por %p43, %p44
    %s46 = ssub.s32 %s12, %s19
    %p47 = scmp.eq.s32.totalorder %s46, 0
    %s49 = sadd.s32 %s48, 1
    %s50 = scalar_select %p47, %s48, %s49
    %p53 = pneg %p47
    %p54 = scmp.eq.s32.totalorder %s12, 1
    %p55 = por %p53, %p54
    %p56 = scmp.ne.s32.totalorder %s48, %s51
    %p57 = scmp.eq.s32.totalorder %s12, 0
    %p58 = por %p56, %p57
    %p59 = scmp.ne.s32.totalorder %s48, %s51
    %p60 = scmp.eq.s32.totalorder %s17, 1
    %p61 = por %p59, %p60
    %p62 = scmp.ne.s32.totalorder %s51, %s52
    %p63 = scmp.eq.s32.totalorder %s17, 0
    %p64 = por %p62, %p63
    %p65 = scmp.ne.s32.totalorder %s51, %s52
    %p66 = scmp.eq.s32.totalorder %s18, 1
    %p67 = por %p65, %p66
    %p69 = scmp.ne.s32.totalorder %s52, %s68
    %p70 = scmp.eq.s32.totalorder %s18, 0
    %p71 = por %p69, %p70
    %s73 = sadd.s32 %s72, 1
    %p76 = scmp.eq.s32.totalorder %s12, 1
    %p77 = scmp.ne.s32.totalorder %s72, %s74
    %p78 = scmp.eq.s32.totalorder %s12, 0
    %p79 = por %p77, %p78
    %p80 = scmp.ne.s32.totalorder %s72, %s74
    %p81 = scmp.eq.s32.totalorder %s17, 1
    %p82 = por %p80, %p81
    %p83 = scmp.ne.s32.totalorder %s74, %s75
    %p84 = scmp.eq.s32.totalorder %s17, 0
    %p85 = por %p83, %p84
    %p86 = scmp.ne.s32.totalorder %s74, %s75
    %p87 = scmp.eq.s32.totalorder %s18, 1
    %p88 = por %p86, %p87
    %p90 = scmp.ne.s32.totalorder %s75, %s89
    %p91 = scmp.eq.s32.totalorder %s18, 0
    %p92 = por %p90, %p91
    %s94 = sadd.s32 %s93, 1
    %p97 = scmp.eq.s32.totalorder %s12, 1
    %p98 = scmp.ne.s32.totalorder %s93, %s95
    %p99 = scmp.eq.s32.totalorder %s12, 0
    %p100 = por %p98, %p99
    %p101 = scmp.ne.s32.totalorder %s93, %s95
    %p102 = scmp.eq.s32.totalorder %s17, 1
    %p103 = por %p101, %p102
    %p104 = scmp.ne.s32.totalorder %s95, %s96
    %p105 = scmp.eq.s32.totalorder %s17, 0
    %p106 = por %p104, %p105
    %p107 = scmp.ne.s32.totalorder %s95, %s96
    %p108 = scmp.eq.s32.totalorder %s18, 1
    %p109 = por %p107, %p108
    %p111 = scmp.ne.s32.totalorder %s96, %s110
    %p112 = scmp.eq.s32.totalorder %s18, 0
    %p113 = por %p111, %p112
    %s115 = sadd.s32 %s114, 1
    %p118 = scmp.eq.s32.totalorder %s12, 1
    %p119 = scmp.ne.s32.totalorder %s114, %s116
    %p120 = scmp.eq.s32.totalorder %s12, 0
    %p121 = por %p119, %p120
    %p122 = scmp.ne.s32.totalorder %s114, %s116
    %p123 = scmp.eq.s32.totalorder %s17, 1
    %p124 = por %p122, %p123
    %p125 = scmp.ne.s32.totalorder %s116, %s117
    %p126 = scmp.eq.s32.totalorder %s17, 0
    %p127 = por %p125, %p126
    %p128 = scmp.ne.s32.totalorder %s116, %s117
    %p129 = scmp.eq.s32.totalorder %s18, 1
    %p130 = por %p128, %p129
    %p132 = scmp.ne.s32.totalorder %s117, %s131
    %p133 = scmp.eq.s32.totalorder %s18, 0
    %p134 = por %p132, %p133
    %s136 = sadd.s32 %s135, 1
    %p139 = scmp.eq.s32.totalorder %s12, 1
    %p140 = scmp.ne.s32.totalorder %s135, %s137
    %p141 = scmp.eq.s32.totalorder %s12, 0
    %p142 = por %p140, %p141
    %p143 = scmp.ne.s32.totalorder %s135, %s137
    %p144 = scmp.eq.s32.totalorder %s17, 1
    %p145 = por %p143, %p144
    %p146 = scmp.ne.s32.totalorder %s137, %s138
    %p147 = scmp.eq.s32.totalorder %s17, 0
    %p148 = por %p146, %p147
    %p149 = scmp.ne.s32.totalorder %s137, %s138
    %p150 = scmp.eq.s32.totalorder %s18, 1
    %p151 = por %p149, %p150
    %p153 = scmp.ne.s32.totalorder %s138, %s152
    %p154 = scmp.eq.s32.totalorder %s18, 0
    %p155 = por %p153, %p154
    %s156 = ssub.s32 %s12, %s19
    %p157 = scmp.eq.s32.totalorder %s156, 0
    %s159 = sadd.s32 %s158, 1
    %s160 = scalar_select %p157, %s158, %s159
    %p163 = pneg %p157
    %p164 = scmp.eq.s32.totalorder %s12, 1
    %p165 = por %p163, %p164
    %p166 = scmp.ne.s32.totalorder %s158, %s161
    %p167 = scmp.eq.s32.totalorder %s12, 0
    %p168 = por %p166, %p167
    %p169 = scmp.ne.s32.totalorder %s158, %s161
    %p170 = scmp.eq.s32.totalorder %s17, 1
    %p171 = por %p169, %p170
    %p172 = scmp.ne.s32.totalorder %s161, %s162
    %p173 = scmp.eq.s32.totalorder %s17, 0
    %p174 = por %p172, %p173
    %p175 = scmp.ne.s32.totalorder %s161, %s162
    %p176 = scmp.eq.s32.totalorder %s18, 1
    %p177 = por %p175, %p176
    %p179 = scmp.ne.s32.totalorder %s162, %s178
    %p180 = scmp.eq.s32.totalorder %s18, 0
    %p181 = por %p179, %p180
    %p182 = scmp.le.s32.totalorder 1, %s12
    %p183 = scmp.lt.s32.totalorder %s12, 3
    %p184 = pnand %p182, %p183
    %p185 = pneg %p184
    // Predicated region
    $region9: #{decoder_forward.18} parent=5 // pred_check
      _
    $region10: #{decoder_forward.18} parent=5 // pred_check_branch
      %187 = sbr.rel (%p184) target = $region12
    $region11: #{decoder_forward.18} parent=5 // pred_region
      %s188 = ssub.s32 %s12, 1
      // Predicated region
      $region13: #{decoder_forward.18} parent=11 // pred_check
        %p189 = pneg %p85
      $region14: #{decoder_forward.18} parent=11 // pred_check_branch
        %191 = sbr.rel (%p189) target = $region16
      $region15: #{decoder_forward.18} parent=11 // pred_region
        _
      $region16: #{decoder_forward.18} parent=11 // pred_fallthru
        _
      // Predicated region
      $region17: #{decoder_forward.18} parent=11 // pred_check
        %p192 = pneg %p106
      $region18: #{decoder_forward.18} parent=11 // pred_check_branch
        %194 = sbr.rel (%p192) target = $region20
      $region19: #{decoder_forward.18} parent=11 // pred_region
        _
      $region20: #{decoder_forward.18} parent=11 // pred_fallthru
        _
      // Predicated region
      $region21: #{decoder_forward.18} parent=11 // pred_check
        %p195 = pneg %p127
      $region22: #{decoder_forward.18} parent=11 // pred_check_branch
        %197 = sbr.rel (%p195) target = $region24
      $region23: #{decoder_forward.18} parent=11 // pred_region
        _
      $region24: #{decoder_forward.18} parent=11 // pred_fallthru
        _
      // Predicated region
      $region25: #{decoder_forward.18} parent=11 // pred_check
        %p198 = pneg %p148
      $region26: #{decoder_forward.18} parent=11 // pred_check_branch
        %200 = sbr.rel (%p198) target = $region28
      $region27: #{decoder_forward.18} parent=11 // pred_region
        _
      $region28: #{decoder_forward.18} parent=11 // pred_fallthru
        _
    $region12: #{decoder_forward.18} parent=5 // pred_fallthru
      _
    %p201 = scmp.lt.s32.totalorder %s12, 2
    // Predicated region
    $region29: #{decoder_forward.18} parent=5 // pred_check
      %p202 = pneg %p201
    $region30: #{decoder_forward.18} parent=5 // pred_check_branch
      %204 = sbr.rel (%p202) target = $region32
    $region31: #{decoder_forward.18} parent=5 // pred_region
      // Predicated region
      $region33: #{decoder_forward.18} parent=31 // pred_check
        %p205 = pneg %p32
      $region34: #{decoder_forward.18} parent=31 // pred_check_branch
        %207 = sbr.rel (%p205) target = $region36
      $region35: #{decoder_forward.18} parent=31 // pred_region
        %p208 = scmp.lt.s32.totalorder %s12, 1
        %s209 = scalar_select %p208, %s12, 1
        %s210 = smul.addr %s209, 8
        %s211 = scalar_lea.vmem %s0, %s210
      $region36: #{decoder_forward.18} parent=31 // pred_fallthru
        _
      // Predicated region
      $region37: #{decoder_forward.18} parent=31 // pred_check
        %p212 = pneg %p58
      $region38: #{decoder_forward.18} parent=31 // pred_check_branch
        %214 = sbr.rel (%p212) target = $region40
      $region39: #{decoder_forward.18} parent=31 // pred_region
        %p215 = scmp.lt.s32.totalorder %s12, 1
        %s216 = scalar_select %p215, %s12, 1
        %s217 = smul.addr %s216, 8
        %s218 = scalar_lea.vmem %s1, %s217
      $region40: #{decoder_forward.18} parent=31 // pred_fallthru
        _
    $region32: #{decoder_forward.18} parent=5 // pred_fallthru
      _
    %p219 = scmp.le.s32.totalorder 1, %s12
    %p220 = scmp.lt.s32.totalorder %s12, 3
    %p221 = pnand %p219, %p220
    %p222 = pneg %p221
    // Predicated region
    $region41: #{decoder_forward.18} parent=5 // pred_check
      _
    $region42: #{decoder_forward.18} parent=5 // pred_check_branch
      %224 = sbr.rel (%p221) target = $region44
    $region43: #{decoder_forward.18} parent=5 // pred_region
      %s225 = ssub.s32 %s12, 1
      %p226 = scmp.lt.s32.totalorder %s17, 1
      %s227 = scalar_select %p226, %s17, 1
      %s228 = smul.addr %s227, 8
      %s229 = scalar_lea.vmem %s0, %s228
      %p230 = pneg %p38
      %p231 = pneg %p35
      %p232 = scmp.lt.s32.totalorder %s17, 1
      %s233 = scalar_select %p232, %s17, 1
      %s234 = smul.addr %s233, 8
      %s235 = scalar_lea.vmem %s1, %s234
      %p236 = pneg %p64
      %p237 = pneg %p61
      %p238 = pneg %p85
      %p239 = pneg %p82
      %p240 = pneg %p106
      %p241 = pneg %p103
      %p242 = pneg %p127
      %p243 = pneg %p124
      %p244 = pneg %p148
      %p245 = pneg %p145
      %p246 = pneg %p174
      %p247 = pneg %p171
      %p248 = scmp.lt.s32.totalorder %s17, 1
      %s249 = scalar_select %p248, %s17, 1
      %s250 = smul.addr %s249, 8
      %s251 = scalar_lea.vmem %s6, %s250
      %p252 = scmp.lt.s32.totalorder %s17, 1
      %s253 = scalar_select %p252, %s17, 1
      %s254 = smul.addr %s253, 8
      %s255 = scalar_lea.vmem %s0, %s254
      %p256 = scmp.lt.s32.totalorder %s17, 1
      %s257 = scalar_select %p256, %s17, 1
      %s258 = smul.addr %s257, 8
      %s259 = scalar_lea.vmem %s1, %s258
      %p260 = scmp.lt.s32.totalorder %s17, 1
      %s261 = scalar_select %p260, %s17, 1
      %s262 = smul.addr %s261, 8
      %s263 = scalar_lea.vmem %s6, %s262
      %v265 = vld [vmem:[%s255] sm:$0xff]
      %v266 = vpack.c.bf16 %v265, %v265
      %v267 = vld [vmem:[%s2] sm:$0xf]
      %v268 = vld [vmem:[%s2 + $0x4] sm:$0xf]
      %v269 = vld [vmem:[%s2 + $0x8] sm:$0xf]
      %v270 = vld [vmem:[%s2 + $0xc] sm:$0xf]
      %v271 = vld [vmem:[%s3] sm:$0x1]
      %v273 = vlaneseq
      %v274 = vshrl.u32 %v273, 7
      %v275 = vsub.s32 0, %v274
      %v276 = vrot.slane %v271, %v275
      %v282 = vunpack.c.l.b16 %v267
      %v283 = vunpack.c.l.b16 %v268
      %v284 = vunpack.c.l.b16 %v269
      %v285 = vunpack.c.l.b16 %v270
      %v286 = vpack.c.b16 %v283, %v282
      %v287 = vpack.c.b16 %v285, %v284
      %vm290 = vcmask 261120
      %v292 = vsel %vm290, %v266, 0
      %294 = vmatprep.subr.bf16.mxu0 0
      %295 = vmatpush1.bf16.msra.mxu0 %v286
      %296 = vmatprep.subr.bf16.mxu0 0
      %297 = vmatpush1.bf16.msra.mxu0 %v287
      %298 = vmatprep.subr.bf16.mxu0 0
      %299 = vmatpush1.bf16.msra.mxu0 0
      %300 = vmatprep.subr.bf16.mxu0 0
      %301 = vmatpush1.bf16.msra.mxu0 0
      %302 = vmatprep.subr.bf16.mxu0 0
      %303 = vmatpush1.bf16.msra.mxu0 0
      %304 = vmatprep.subr.bf16.mxu0 0
      %305 = vmatpush1.bf16.msra.mxu0 0
      %306 = vmatprep.subr.bf16.mxu0 0
      %307 = vmatpush1.bf16.msra.mxu0 0
      %308 = vmatprep.subr.bf16.mxu0 0
      %309 = vmatpush1.bf16.msra.mxu0 0
      %310 = vmatprep.subr.bf16.mxu0 0
      %311 = vmatpush1.bf16.msra.mxu0 0
      %312 = vmatprep.subr.bf16.mxu0 0
      %313 = vmatpush1.bf16.msra.mxu0 0
      %314 = vmatprep.subr.bf16.mxu0 0
      %315 = vmatpush1.bf16.msra.mxu0 0
      %316 = vmatprep.subr.bf16.mxu0 0
      %317 = vmatpush1.bf16.msra.mxu0 0
      %318 = vmatprep.subr.bf16.mxu0 0
      %319 = vmatpush1.bf16.msra.mxu0 0
      %320 = vmatprep.subr.bf16.mxu0 0
      %321 = vmatpush1.bf16.msra.mxu0 0
      %322 = vmatprep.subr.bf16.mxu0 0
      %323 = vmatpush1.bf16.msra.mxu0 0
      %324 = vmatprep.subr.bf16.mxu0 0
      %325 = vmatpush1.bf16.msra.mxu0 0
      %326 = vmatprep.mubr.bf16.mxu0 0
      %327 = vmatmul.mubr.bf16.gmra.mrb[0].mxu0 %v292
      %v328 = vpop.f32.mrb[0].mxu0
      %v329 = vadd.f32 %v276, %v328
      %v330 = vpop.f32.mrb[0].mxu0
      %v331 = vpop.f32.mrb[0].mxu0
      %v332 = vpop.f32.mrb[0].mxu0
      %333 = vdwg.mxu0
      %v334 = vld [vmem:[%s259] sm:$0xff]
      %v335 = vadd.f32 %v334, %v329
      %v336 = vld [vmem:[%s4] sm:$0x1]
      %v337 = vld [vmem:[%s5] sm:$0x1]
      %v338 = vsel %vm290, %v335, 0.0
      %339 = vadd.xlane.f32.xlu0 %v338
      %v340 = vpop.xlane.xlu0 %339
      %v341 = vrcp.pop 32.0
      %v342 = vmul.f32 %v340, %v341
      %v343 = vsub.f32 %v335, %v342
      %v344 = vmul.f32 %v343, %v343
      %v345 = vsel %vm290, %v344, 0.0
      %346 = vadd.xlane.f32.xlu0 %v345
      %v347 = vpop.xlane.xlu0 %346
      %v348 = vmul.f32 %v347, %v341
      %v349 = vadd.f32 %v348, 1e-05
      %v350 = vrsqrt.pop %v349
      %v351 = vmul.f32 %v343, %v350
      %v353 = vlaneseq
      %v354 = vshrl.u32 %v353, 7
      %v355 = vsub.s32 0, %v354
      %v356 = vrot.slane %v336, %v355
      %v358 = vmul.f32 %v351, %v356
      %v360 = vlaneseq
      %v361 = vshrl.u32 %v360, 7
      %v362 = vsub.s32 0, %v361
      %v363 = vrot.slane %v337, %v362
      %v365 = vadd.f32 %v358, %v363
      %366 = vst.msk [vmem:[%s263] sm:$0xff] %vm290, %v365
      %p367 = scmp.lt.s32.totalorder %s17, 1
      %s368 = scalar_select %p367, %s17, 1
      %s369 = smul.addr %s368, 8
      %s370 = scalar_lea.vmem %s6, %s369
      // Predicated region
      $region45: #{decoder_forward.18} parent=43 // pred_check
        %p371 = pneg %p171
      $region46: #{decoder_forward.18} parent=43 // pred_check_branch
        %373 = sbr.rel (%p371) target = $region48
      $region47: #{decoder_forward.18} parent=43 // pred_region
        _
      $region48: #{decoder_forward.18} parent=43 // pred_fallthru
        _
    $region44: #{decoder_forward.18} parent=5 // pred_fallthru
      _
    %p374 = scmp.le.s32.totalorder 2, %s12
    // Predicated region
    $region49: #{decoder_forward.18} parent=5 // pred_check
      %p375 = pneg %p374
    $region50: #{decoder_forward.18} parent=5 // pred_check_branch
      %377 = sbr.rel (%p375) target = $region52
    $region51: #{decoder_forward.18} parent=5 // pred_region
      %s378 = ssub.s32 %s12, 2
      // Predicated region
      $region53: #{decoder_forward.18} parent=51 // pred_check
        %p379 = pneg %p177
      $region54: #{decoder_forward.18} parent=51 // pred_check_branch
        %381 = sbr.rel (%p379) target = $region56
      $region55: #{decoder_forward.18} parent=51 // pred_region
        %p382 = scmp.lt.s32.totalorder %s18, 1
        %s383 = scalar_select %p382, %s18, 1
        %s384 = smul.addr %s383, 8
        %s385 = scalar_lea.vmem %s6, %s384
      $region56: #{decoder_forward.18} parent=51 // pred_fallthru
        _
    $region52: #{decoder_forward.18} parent=5 // pred_fallthru
      _
  $region6: #{decoder_forward.18} parent=0 // loop_footer
    %s16 = sadd.s32 1, %s12
  $region7: #{decoder_forward.18} parent=0 // loop_footer_branch
    %11 = sbr.rel target = $region3
  $region8: #{decoder_forward.18} parent=0 // loop_exit
    _

// kernel: decoder_forward.17
$region0: #{decoder_forward.17}
  #allocation0 [shape = 'u32[]', space=smem, size = 0x4, offset = 0x4, fixed_abs, tag = 'smem constant byte address 0x4 - core index']
  #allocation1 [shape = 'u32[144,128]{1,0:T(1,128)}', space=vmem, size = 0x12000, scoped, tag = 'internal scratch']
  %s0 = inlined_call_operand.vmem [shape: f32[2,8,96], index: 0, kind: input, shape index: {}]
  %s1 = inlined_call_operand.vmem [shape: f32[2,1,8], index: 1, kind: input, shape index: {}]
  %s2 = inlined_call_operand.vmem [shape: f32[2,8,32], index: 2, kind: output, shape index: {}]
  %s3 = sld [smem:[#allocation0]]
  $region41: #{decoder_forward.17} parent=0
    _
  %s5 = ssub.s32 1, %s3
  %s6 = scalar_select 0, %s5, %s3
  loop: start=0, step=1, limit=4
  $region2: #{decoder_forward.17} parent=0 // loop_pre_header
    _
  $region3: #{decoder_forward.17} parent=0 // loop_header
    %s8 = sphi 0, %s12
    %p9 = scmp.ge.s32.totalorder %s8, 4
    %s18 = sphi 0, %s20
    %s21 = sphi 0, %s18
    %s22 = sphi 0, %s21
    %s38 = sphi 0, %s22
    %s44 = sphi 0, %s46
    %s47 = sphi 0, %s44
    %s48 = sphi 0, %s47
    %s64 = sphi 0, %s48
    %s70 = sphi 0, %s72
    %s73 = sphi 0, %s70
    %s74 = sphi 0, %s73
    %s90 = sphi 0, %s74
  $region4: #{decoder_forward.17} parent=0 // loop_header_branch
    %11 = sbr.rel (%p9) target = $region8
  $region5: #{decoder_forward.17} parent=0 // loop_body
    %s13 = ssub.s32 %s8, 1
    %s14 = ssub.s32 %s8, 2
    %s15 = sadd.s32 %s8, 1
    %s16 = ssub.s32 %s8, %s15
    %p17 = scmp.eq.s32.totalorder %s16, 0
    %s19 = sadd.s32 %s18, 1
    %s20 = scalar_select %p17, %s18, %s19
    %p23 = pneg %p17
    %p24 = scmp.eq.s32.totalorder %s8, 1
    %p25 = por %p23, %p24
    %p26 = scmp.ne.s32.totalorder %s18, %s21
    %p27 = scmp.eq.s32.totalorder %s8, 0
    %p28 = por %p26, %p27
    %p29 = scmp.ne.s32.totalorder %s18, %s21
    %p30 = scmp.eq.s32.totalorder %s13, 1
    %p31 = por %p29, %p30
    %p32 = scmp.ne.s32.totalorder %s21, %s22
    %p33 = scmp.eq.s32.totalorder %s13, 0
    %p34 = por %p32, %p33
    %p35 = scmp.ne.s32.totalorder %s21, %s22
    %p36 = scmp.eq.s32.totalorder %s14, 1
    %p37 = por %p35, %p36
    %p39 = scmp.ne.s32.totalorder %s22, %s38
    %p40 = scmp.eq.s32.totalorder %s14, 0
    %p41 = por %p39, %p40
    %s42 = ssub.s32 %s8, %s15
    %p43 = scmp.eq.s32.totalorder %s42, 0
    %s45 = sadd.s32 %s44, 1
    %s46 = scalar_select %p43, %s44, %s45
    %p49 = pneg %p43
    %p50 = scmp.eq.s32.totalorder %s8, 1
    %p51 = por %p49, %p50
    %p52 = scmp.ne.s32.totalorder %s44, %s47
    %p53 = scmp.eq.s32.totalorder %s8, 0
    %p54 = por %p52, %p53
    %p55 = scmp.ne.s32.totalorder %s44, %s47
    %p56 = scmp.eq.s32.totalorder %s13, 1
    %p57 = por %p55, %p56
    %p58 = scmp.ne.s32.totalorder %s47, %s48
    %p59 = scmp.eq.s32.totalorder %s13, 0
    %p60 = por %p58, %p59
    %p61 = scmp.ne.s32.totalorder %s47, %s48
    %p62 = scmp.eq.s32.totalorder %s14, 1
    %p63 = por %p61, %p62
    %p65 = scmp.ne.s32.totalorder %s48, %s64
    %p66 = scmp.eq.s32.totalorder %s14, 0
    %p67 = por %p65, %p66
    %s68 = ssub.s32 %s8, %s15
    %p69 = scmp.eq.s32.totalorder %s68, 0
    %s71 = sadd.s32 %s70, 1
    %s72 = scalar_select %p69, %s70, %s71
    %p75 = pneg %p69
    %p76 = scmp.eq.s32.totalorder %s8, 1
    %p77 = por %p75, %p76
    %p78 = scmp.ne.s32.totalorder %s70, %s73
    %p79 = scmp.eq.s32.totalorder %s8, 0
    %p80 = por %p78, %p79
    %p81 = scmp.ne.s32.totalorder %s70, %s73
    %p82 = scmp.eq.s32.totalorder %s13, 1
    %p83 = por %p81, %p82
    %p84 = scmp.ne.s32.totalorder %s73, %s74
    %p85 = scmp.eq.s32.totalorder %s13, 0
    %p86 = por %p84, %p85
    %p87 = scmp.ne.s32.totalorder %s73, %s74
    %p88 = scmp.eq.s32.totalorder %s14, 1
    %p89 = por %p87, %p88
    %p91 = scmp.ne.s32.totalorder %s74, %s90
    %p92 = scmp.eq.s32.totalorder %s14, 0
    %p93 = por %p91, %p92
    %p94 = scmp.le.s32.totalorder 1, %s8
    %p95 = scmp.lt.s32.totalorder %s8, 3
    %p96 = pnand %p94, %p95
    %p97 = pneg %p96
    // Predicated region
    $region9: #{decoder_forward.17} parent=5 // pred_check
      _
    $region10: #{decoder_forward.17} parent=5 // pred_check_branch
      %99 = sbr.rel (%p96) target = $region12
    $region11: #{decoder_forward.17} parent=5 // pred_region
      %s100 = ssub.s32 %s8, 1
    $region12: #{decoder_forward.17} parent=5 // pred_fallthru
      _
    %p101 = scmp.lt.s32.totalorder %s8, 2
    // Predicated region
    $region13: #{decoder_forward.17} parent=5 // pred_check
      %p102 = pneg %p101
    $region14: #{decoder_forward.17} parent=5 // pred_check_branch
      %104 = sbr.rel (%p102) target = $region16
    $region15: #{decoder_forward.17} parent=5 // pred_region
      // Predicated region
      $region17: #{decoder_forward.17} parent=15 // pred_check
        %p105 = pneg %p28
      $region18: #{decoder_forward.17} parent=15 // pred_check_branch
        %107 = sbr.rel (%p105) target = $region20
      $region19: #{decoder_forward.17} parent=15 // pred_region
        %p108 = scmp.lt.s32.totalorder %s8, 1
        %s109 = scalar_select %p108, %s8, 1
        %s110 = smul.addr %s109, 8
        %s111 = scalar_lea.vmem %s0, %s110
      $region20: #{decoder_forward.17} parent=15 // pred_fallthru
        _
      // Predicated region
      $region21: #{decoder_forward.17} parent=15 // pred_check
        %p112 = pneg %p54
      $region22: #{decoder_forward.17} parent=15 // pred_check_branch
        %114 = sbr.rel (%p112) target = $region24
      $region23: #{decoder_forward.17} parent=15 // pred_region
        %p115 = scmp.lt.s32.totalorder %s8, 1
        %s116 = scalar_select %p115, %s8, 1
        %s117 = scalar_lea.vmem %s1, %s116
      $region24: #{decoder_forward.17} parent=15 // pred_fallthru
        _
    $region16: #{decoder_forward.17} parent=5 // pred_fallthru
      _
    %p118 = scmp.le.s32.totalorder 1, %s8
    %p119 = scmp.lt.s32.totalorder %s8, 3
    %p120 = pnand %p118, %p119
    %p121 = pneg %p120
    // Predicated region
    $region25: #{decoder_forward.17} parent=5 // pred_check
      _
    $region26: #{decoder_forward.17} parent=5 // pred_check_branch
      %123 = sbr.rel (%p120) target = $region28
    $region27: #{decoder_forward.17} parent=5 // pred_region
      %s124 = ssub.s32 %s8, 1
      %p125 = scmp.lt.s32.totalorder %s13, 1
      %s126 = scalar_select %p125, %s13, 1
      %s127 = smul.addr %s126, 8
      %s128 = scalar_lea.vmem %s0, %s127
      %p129 = pneg %p34
      %p130 = pneg %p31
      %p131 = scmp.lt.s32.totalorder %s13, 1
      %s132 = scalar_select %p131, %s13, 1
      %s133 = scalar_lea.vmem %s1, %s132
      %p134 = pneg %p60
      %p135 = pneg %p57
      %p136 = pneg %p86
      %p137 = pneg %p83
      %p138 = scmp.lt.s32.totalorder %s13, 1
      %s139 = scalar_select %p138, %s13, 1
      %s140 = smul.addr %s139, 8
      %s141 = scalar_lea.vmem %s2, %s140
      %p142 = scmp.lt.s32.totalorder %s13, 1
      %s143 = scalar_select %p142, %s13, 1
      %s144 = smul.addr %s143, 8
      %s145 = scalar_lea.vmem %s0, %s144
      %p146 = scmp.lt.s32.totalorder %s13, 1
      %s147 = scalar_select %p146, %s13, 1
      %s148 = scalar_lea.vmem %s1, %s147
      %p149 = scmp.lt.s32.totalorder %s13, 1
      %s150 = scalar_select %p149, %s13, 1
      %s151 = smul.addr %s150, 8
      %s152 = scalar_lea.vmem %s2, %s151
      %v154 = vld [vmem:[%s145] sm:$0xff]
      %v155 = vlaneseq
      %v156 = vshrl.u32 %v155, 7
      %v157 = vlaneseq
      %v158 = vand.u32 %v157, 127
      %vm159 = vcmp.gt.s32.totalorder %v158, %v156
      %v160 = vsel %vm159, -1e+30, 0.0
      %v161 = vld [vmem:[%s148] sm:$0x1]
      %v163 = vlaneseq
      %v164 = vshrl.u32 %v163, 7
      %v165 = vsub.s32 0, %v164
      %v166 = vrot.slane %v161, %v165
      %v168 = vadd.f32 %v160, %v166
      %v169 = vpack.c.bf16 %v154, %v154
      %171 = vrot.lane.b32.xlu0 %v169, 96
      %v172 = vpop.permute.xlu0 %171
      %vm173 = vcmask 64512
      %v175 = vsel %vm173, %v169, 0
      %v178 = vsel %vm173, %v172, 0
      %180 = vmatprep.subr.bf16.mxu0 0
      %181 = vmatpush1.bf16.xpose.msra.mxu0 %v178
      %182 = vmatprep.subr.bf16.mxu0 0
      %183 = vmatpush1.bf16.xpose.msra.mxu0 0
      %184 = vmatprep.subr.bf16.mxu0 0
      %185 = vmatpush1.bf16.xpose.msra.mxu0 0
      %186 = vmatprep.subr.bf16.mxu0 0
      %187 = vmatpush1.bf16.xpose.msra.mxu0 0
      %188 = vmatprep.subr.bf16.mxu0 0
      %189 = vmatpush1.bf16.xpose.msra.mxu0 0
      %190 = vmatprep.subr.bf16.mxu0 0
      %191 = vmatpush1.bf16.xpose.msra.mxu0 0
      %192 = vmatprep.subr.bf16.mxu0 0
      %193 = vmatpush1.bf16.xpose.msra.mxu0 0
      %194 = vmatprep.subr.bf16.mxu0 0
      %195 = vmatpush1.bf16.xpose.msra.mxu0 0
      %196 = vmatprep.subr.bf16.mxu0 0
      %197 = vmatpush1.bf16.xpose.msra.mxu0 0
      %198 = vmatprep.subr.bf16.mxu0 0
      %199 = vmatpush1.bf16.xpose.msra.mxu0 0
      %200 = vmatprep.subr.bf16.mxu0 0
      %201 = vmatpush1.bf16.xpose.msra.mxu0 0
      %202 = vmatprep.subr.bf16.mxu0 0
      %203 = vmatpush1.bf16.xpose.msra.mxu0 0
      %204 = vmatprep.subr.bf16.mxu0 0
      %205 = vmatpush1.bf16.xpose.msra.mxu0 0
      %206 = vmatprep.subr.bf16.mxu0 0
      %207 = vmatpush1.bf16.xpose.msra.mxu0 0
      %208 = vmatprep.subr.bf16.mxu0 0
      %209 = vmatpush1.bf16.xpose.msra.mxu0 0
      %210 = vmatprep.subr.bf16.mxu0 0
      %211 = vmatpush1.bf16.xpose.msra.mxu0 0
      %212 = vmatprep.mubr.bf16.mxu0 0
      %213 = vmatmul.mubr.bf16.gmra.mrb[0].mxu0 %v175
      %v214 = vpop.f32.mrb[0].mxu0
      %v215 = vadd.f32 %v168, %v214
      %v216 = vpop.f32.mrb[0].mxu0
      %v217 = vpop.f32.mrb[0].mxu0
      %v218 = vpop.f32.mrb[0].mxu0
      %219 = vdwg.mxu0
      %v220 = vsel %vm173, %v215, -inf
      %221 = vmax.xlane.f32.xlu0 %v220
      %v222 = vpop.xlane.xlu0 %221
      %v223 = vsub.f32 %v215, %v222
      %v224 = vmul.f32 %v223, 1.442695
      %v225 = vpow.pop %v224
      %v226 = vsel %vm173, %v225, 0.0
      %227 = vadd.xlane.f32.xlu0 %v226
      %v228 = vpop.xlane.xlu0 %227
      %v229 = vrcp.pop %v228
      %v230 = vmul.f32 %v225, %v229
      %v231 = vpack.c.bf16 %v230, %v230
      %232 = vrot.lane.b32.xlu0 %v169, 64
      %v233 = vpop.permute.xlu0 %232
      %v235 = vsel %vm173, %v231, 0
      %vm237 = vcmask 1043456
      %v239 = vsel %vm237, %v233, 0
      %241 = vmatprep.subr.bf16.mxu0 0
      %242 = vmatpush1.bf16.msra.mxu0 %v239
      %243 = vmatprep.subr.bf16.mxu0 0
      %244 = vmatpush1.bf16.msra.mxu0 0
      %245 = vmatprep.subr.bf16.mxu0 0
      %246 = vmatpush1.bf16.msra.mxu0 0
      %247 = vmatprep.subr.bf16.mxu0 0
      %248 = vmatpush1.bf16.msra.mxu0 0
      %249 = vmatprep.subr.bf16.mxu0 0
      %250 = vmatpush1.bf16.msra.mxu0 0
      %251 = vmatprep.subr.bf16.mxu0 0
      %252 = vmatpush1.bf16.msra.mxu0 0
      %253 = vmatprep.subr.bf16.mxu0 0
      %254 = vmatpush1.bf16.msra.mxu0 0
      %255 = vmatprep.subr.bf16.mxu0 0
      %256 = vmatpush1.bf16.msra.mxu0 0
      %257 = vmatprep.subr.bf16.mxu0 0
      %258 = vmatpush1.bf16.msra.mxu0 0
      %259 = vmatprep.subr.bf16.mxu0 0
      %260 = vmatpush1.bf16.msra.mxu0 0
      %261 = vmatprep.subr.bf16.mxu0 0
      %262 = vmatpush1.bf16.msra.mxu0 0
      %263 = vmatprep.subr.bf16.mxu0 0
      %264 = vmatpush1.bf16.msra.mxu0 0
      %265 = vmatprep.subr.bf16.mxu0 0
      %266 = vmatpush1.bf16.msra.mxu0 0
      %267 = vmatprep.subr.bf16.mxu0 0
      %268 = vmatpush1.bf16.msra.mxu0 0
      %269 = vmatprep.subr.bf16.mxu0 0
      %270 = vmatpush1.bf16.msra.mxu0 0
      %271 = vmatprep.subr.bf16.mxu0 0
      %272 = vmatpush1.bf16.msra.mxu0 0
      %273 = vmatprep.mubr.bf16.mxu0 0
      %274 = vmatmul.mubr.bf16.gmra.mrb[0].mxu0 %v235
      %v275 = vpop.f32.mrb[0].mxu0
      %v276 = vadd.f32 0.0, %v275
      %v277 = vpop.f32.mrb[0].mxu0
      %v278 = vpop.f32.mrb[0].mxu0
      %v279 = vpop.f32.mrb[0].mxu0
      %280 = vdwg.mxu0
      %281 = vst.msk [vmem:[%s152] sm:$0xff] %vm173, %v276
      %282 = vrot.lane.b32.xlu0 %v169, 120
      %v283 = vpop.permute.xlu0 %282
      %284 = vrot.lane.b32.xlu0 %v169, 88
      %v285 = vpop.permute.xlu0 %284
      %v287 = vsel %vm173, %v283, 0
      %v290 = vsel %vm173, %v285, 0
      %292 = vmatprep.subr.bf16.mxu0 0
      %293 = vmatpush1.bf16.xpose.msra.mxu0 %v290
      %294 = vmatprep.subr.bf16.mxu0 0
      %295 = vmatpush1.bf16.xpose.msra.mxu0 0
      %296 = vmatprep.subr.bf16.mxu0 0
      %297 = vmatpush1.bf16.xpose.msra.mxu0 0
      %298 = vmatprep.subr.bf16.mxu0 0
      %299 = vmatpush1.bf16.xpose.msra.mxu0 0
      %300 = vmatprep.subr.bf16.mxu0 0
      %301 = vmatpush1.bf16.xpose.msra.mxu0 0
      %302 = vmatprep.subr.bf16.mxu0 0
      %303 = vmatpush1.bf16.xpose.msra.mxu0 0
      %304 = vmatprep.subr.bf16.mxu0 0
      %305 = vmatpush1.bf16.xpose.msra.mxu0 0
      %306 = vmatprep.subr.bf16.mxu0 0
      %307 = vmatpush1.bf16.xpose.msra.mxu0 0
      %308 = vmatprep.subr.bf16.mxu0 0
      %309 = vmatpush1.bf16.xpose.msra.mxu0 0
      %310 = vmatprep.subr.bf16.mxu0 0
      %311 = vmatpush1.bf16.xpose.msra.mxu0 0
      %312 = vmatprep.subr.bf16.mxu0 0
      %313 = vmatpush1.bf16.xpose.msra.mxu0 0
      %314 = vmatprep.subr.bf16.mxu0 0
      %315 = vmatpush1.bf16.xpose.msra.mxu0 0
      %316 = vmatprep.subr.bf16.mxu0 0
      %317 = vmatpush1.bf16.xpose.msra.mxu0 0
      %318 = vmatprep.subr.bf16.mxu0 0
      %319 = vmatpush1.bf16.xpose.msra.mxu0 0
      %320 = vmatprep.subr.bf16.mxu0 0
      %321 = vmatpush1.bf16.xpose.msra.mxu0 0
      %322 = vmatprep.subr.bf16.mxu0 0
      %323 = vmatpush1.bf16.xpose.msra.mxu0 0
      %324 = vmatprep.mubr.bf16.mxu0 0
      %325 = vmatmul.mubr.bf16.gmra.mrb[0].mxu0 %v287
      %v326 = vpop.f32.mrb[0].mxu0
      %v327 = vadd.f32 %v168, %v326
      %v328 = vpop.f32.mrb[0].mxu0
      %v329 = vpop.f32.mrb[0].mxu0
      %v330 = vpop.f32.mrb[0].mxu0
      %331 = vdwg.mxu0
      %v332 = vsel %vm173, %v327, -inf
      %333 = vmax.xlane.f32.xlu0 %v332
      %v334 = vpop.xlane.xlu0 %333
      %v335 = vsub.f32 %v327, %v334
      %v336 = vmul.f32 %v335, 1.442695
      %v337 = vpow.pop %v336
      %v338 = vsel %vm173, %v337, 0.0
      %339 = vadd.xlane.f32.xlu0 %v338
      %v340 = vpop.xlane.xlu0 %339
      %v341 = vrcp.pop %v340
      %v342 = vmul.f32 %v337, %v341
      %v343 = vpack.c.bf16 %v342, %v342
      %344 = vrot.lane.b32.xlu0 %v169, 56
      %v345 = vpop.permute.xlu0 %344
      %v347 = vsel %vm173, %v343, 0
      %v350 = vsel %vm237, %v345, 0
      %352 = vmatprep.subr.bf16.mxu0 0
      %353 = vmatpush1.bf16.msra.mxu0 %v350
      %354 = vmatprep.subr.bf16.mxu0 0
      %355 = vmatpush1.bf16.msra.mxu0 0
      %356 = vmatprep.subr.bf16.mxu0 0
      %357 = vmatpush1.bf16.msra.mxu0 0
      %358 = vmatprep.subr.bf16.mxu0 0
      %359 = vmatpush1.bf16.msra.mxu0 0
      %360 = vmatprep.subr.bf16.mxu0 0
      %361 = vmatpush1.bf16.msra.mxu0 0
      %362 = vmatprep.subr.bf16.mxu0 0
      %363 = vmatpush1.bf16.msra.mxu0 0
      %364 = vmatprep.subr.bf16.mxu0 0
      %365 = vmatpush1.bf16.msra.mxu0 0
      %366 = vmatprep.subr.bf16.mxu0 0
      %367 = vmatpush1.bf16.msra.mxu0 0
      %368 = vmatprep.subr.bf16.mxu0 0
      %369 = vmatpush1.bf16.msra.mxu0 0
      %370 = vmatprep.subr.bf16.mxu0 0
      %371 = vmatpush1.bf16.msra.mxu0 0
      %372 = vmatprep.subr.bf16.mxu0 0
      %373 = vmatpush1.bf16.msra.mxu0 0
      %374 = vmatprep.subr.bf16.mxu0 0
      %375 = vmatpush1.bf16.msra.mxu0 0
      %376 = vmatprep.subr.bf16.mxu0 0
      %377 = vmatpush1.bf16.msra.mxu0 0
      %378 = vmatprep.subr.bf16.mxu0 0
      %379 = vmatpush1.bf16.msra.mxu0 0
      %380 = vmatprep.subr.bf16.mxu0 0
      %381 = vmatpush1.bf16.msra.mxu0 0
      %382 = vmatprep.subr.bf16.mxu0 0
      %383 = vmatpush1.bf16.msra.mxu0 0
      %384 = vmatprep.mubr.bf16.mxu0 0
      %385 = vmatmul.mubr.bf16.gmra.mrb[0].mxu0 %v347
      %v386 = vpop.f32.mrb[0].mxu0
      %v387 = vadd.f32 0.0, %v386
      %v388 = vpop.f32.mrb[0].mxu0
      %v389 = vpop.f32.mrb[0].mxu0
      %v390 = vpop.f32.mrb[0].mxu0
      %391 = vdwg.mxu0
      %393 = vrot.lane.b32.xlu0 %v387, 8
      %v394 = vpop.permute.xlu0 %393
      %vm396 = vcmask 130112
      %397 = vst.msk [vmem:[%s152] sm:$0xff] %vm396, %v394
      %398 = vrot.lane.b32.xlu0 %v169, 112
      %v399 = vpop.permute.xlu0 %398
      %400 = vrot.lane.b32.xlu0 %v169, 80
      %v401 = vpop.permute.xlu0 %400
      %v403 = vsel %vm173, %v399, 0
      %v406 = vsel %vm173, %v401, 0
      %408 = vmatprep.subr.bf16.mxu0 0
      %409 = vmatpush1.bf16.xpose.msra.mxu0 %v406
      %410 = vmatprep.subr.bf16.mxu0 0
      %411 = vmatpush1.bf16.xpose.msra.mxu0 0
      %412 = vmatprep.subr.bf16.mxu0 0
      %413 = vmatpush1.bf16.xpose.msra.mxu0 0
      %414 = vmatprep.subr.bf16.mxu0 0
      %415 = vmatpush1.bf16.xpose.msra.mxu0 0
      %416 = vmatprep.subr.bf16.mxu0 0
      %417 = vmatpush1.bf16.xpose.msra.mxu0 0
      %418 = vmatprep.subr.bf16.mxu0 0
      %419 = vmatpush1.bf16.xpose.msra.mxu0 0
      %420 = vmatprep.subr.bf16.mxu0 0
      %421 = vmatpush1.bf16.xpose.msra.mxu0 0
      %422 = vmatprep.subr.bf16.mxu0 0
      %423 = vmatpush1.bf16.xpose.msra.mxu0 0
      %424 = vmatprep.subr.bf16.mxu0 0
      %425 = vmatpush1.bf16.xpose.msra.mxu0 0
      %426 = vmatprep.subr.bf16.mxu0 0
      %427 = vmatpush1.bf16.xpose.msra.mxu0 0
      %428 = vmatprep.subr.bf16.mxu0 0
      %429 = vmatpush1.bf16.xpose.msra.mxu0 0
      %430 = vmatprep.subr.bf16.mxu0 0
      %431 = vmatpush1.bf16.xpose.msra.mxu0 0
      %432 = vmatprep.subr.bf16.mxu0 0
      %433 = vmatpush1.bf16.xpose.msra.mxu0 0
      %434 = vmatprep.subr.bf16.mxu0 0
      %435 = vmatpush1.bf16.xpose.msra.mxu0 0
      %436 = vmatprep.subr.bf16.mxu0 0
      %437 = vmatpush1.bf16.xpose.msra.mxu0 0
      %438 = vmatprep.subr.bf16.mxu0 0
      %439 = vmatpush1.bf16.xpose.msra.mxu0 0
      %440 = vmatprep.mubr.bf16.mxu0 0
      %441 = vmatmul.mubr.bf16.gmra.mrb[0].mxu0 %v403
      %v442 = vpop.f32.mrb[0].mxu0
      %v443 = vadd.f32 %v168, %v442
      %v444 = vpop.f32.mrb[0].mxu0
      %v445 = vpop.f32.mrb[0].mxu0
      %v446 = vpop.f32.mrb[0].mxu0
      %447 = vdwg.mxu0
      %v448 = vsel %vm173, %v443, -inf
      %449 = vmax.xlane.f32.xlu0 %v448
      %v450 = vpop.xlane.xlu0 %449
      %v451 = vsub.f32 %v443, %v450
      %v452 = vmul.f32 %v451, 1.442695
      %v453 = vpow.pop %v452
      %v454 = vsel %vm173, %v453, 0.0
      %455 = vadd.xlane.f32.xlu0 %v454
      %v456 = vpop.xlane.xlu0 %455
      %v457 = vrcp.pop %v456
      %v458 = vmul.f32 %v453, %v457
      %v459 = vpack.c.bf16 %v458, %v458
      %460 = vrot.lane.b32.xlu0 %v169, 48
      %v461 = vpop.permute.xlu0 %460
      %v463 = vsel %vm173, %v459, 0
      %v466 = vsel %vm237, %v461, 0
      %468 = vmatprep.subr.bf16.mxu0 0
      %469 = vmatpush1.bf16.msra.mxu0 %v466
      %470 = vmatprep.subr.bf16.mxu0 0
      %471 = vmatpush1.bf16.msra.mxu0 0
      %472 = vmatprep.subr.bf16.mxu0 0
      %473 = vmatpush1.bf16.msra.mxu0 0
      %474 = vmatprep.subr.bf16.mxu0 0
      %475 = vmatpush1.bf16.msra.mxu0 0
      %476 = vmatprep.subr.bf16.mxu0 0
      %477 = vmatpush1.bf16.msra.mxu0 0
      %478 = vmatprep.subr.bf16.mxu0 0
      %479 = vmatpush1.bf16.msra.mxu0 0
      %480 = vmatprep.subr.bf16.mxu0 0
      %481 = vmatpush1.bf16.msra.mxu0 0
      %482 = vmatprep.subr.bf16.mxu0 0
      %483 = vmatpush1.bf16.msra.mxu0 0
      %484 = vmatprep.subr.bf16.mxu0 0
      %485 = vmatpush1.bf16.msra.mxu0 0
      %486 = vmatprep.subr.bf16.mxu0 0
      %487 = vmatpush1.bf16.msra.mxu0 0
      %488 = vmatprep.subr.bf16.mxu0 0
      %489 = vmatpush1.bf16.msra.mxu0 0
      %490 = vmatprep.subr.bf16.mxu0 0
      %491 = vmatpush1.bf16.msra.mxu0 0
      %492 = vmatprep.subr.bf16.mxu0 0
      %493 = vmatpush1.bf16.msra.mxu0 0
      %494 = vmatprep.subr.bf16.mxu0 0
      %495 = vmatpush1.bf16.msra.mxu0 0
      %496 = vmatprep.subr.bf16.mxu0 0
      %497 = vmatpush1.bf16.msra.mxu0 0
      %498 = vmatprep.subr.bf16.mxu0 0
      %499 = vmatpush1.bf16.msra.mxu0 0
      %500 = vmatprep.mubr.bf16.mxu0 0
      %501 = vmatmul.mubr.bf16.gmra.mrb[0].mxu0 %v463
      %v502 = vpop.f32.mrb[0].mxu0
      %v503 = vadd.f32 0.0, %v502
      %v504 = vpop.f32.mrb[0].mxu0
      %v505 = vpop.f32.mrb[0].mxu0
      %v506 = vpop.f32.mrb[0].mxu0
      %507 = vdwg.mxu0
      %509 = vrot.lane.b32.xlu0 %v503, 16
      %v510 = vpop.permute.xlu0 %509
      %vm512 = vcmask 195712
      %513 = vst.msk [vmem:[%s152] sm:$0xff] %vm512, %v510
      %514 = vrot.lane.b32.xlu0 %v169, 104
      %v515 = vpop.permute.xlu0 %514
      %516 = vrot.lane.b32.xlu0 %v169, 72
      %v517 = vpop.permute.xlu0 %516
      %v519 = vsel %vm173, %v515, 0
      %v522 = vsel %vm173, %v517, 0
      %524 = vmatprep.subr.bf16.mxu0 0
      %525 = vmatpush1.bf16.xpose.msra.mxu0 %v522
      %526 = vmatprep.subr.bf16.mxu0 0
      %527 = vmatpush1.bf16.xpose.msra.mxu0 0
      %528 = vmatprep.subr.bf16.mxu0 0
      %529 = vmatpush1.bf16.xpose.msra.mxu0 0
      %530 = vmatprep.subr.bf16.mxu0 0
      %531 = vmatpush1.bf16.xpose.msra.mxu0 0
      %532 = vmatprep.subr.bf16.mxu0 0
      %533 = vmatpush1.bf16.xpose.msra.mxu0 0
      %534 = vmatprep.subr.bf16.mxu0 0
      %535 = vmatpush1.bf16.xpose.msra.mxu0 0
      %536 = vmatprep.subr.bf16.mxu0 0
      %537 = vmatpush1.bf16.xpose.msra.mxu0 0
      %538 = vmatprep.subr.bf16.mxu0 0
      %539 = vmatpush1.bf16.xpose.msra.mxu0 0
      %540 = vmatprep.subr.bf16.mxu0 0
      %541 = vmatpush1.bf16.xpose.msra.mxu0 0
      %542 = vmatprep.subr.bf16.mxu0 0
      %543 = vmatpush1.bf16.xpose.msra.mxu0 0
      %544 = vmatprep.subr.bf16.mxu0 0
      %545 = vmatpush1.bf16.xpose.msra.mxu0 0
      %546 = vmatprep.subr.bf16.mxu0 0
      %547 = vmatpush1.bf16.xpose.msra.mxu0 0
      %548 = vmatprep.subr.bf16.mxu0 0
      %549 = vmatpush1.bf16.xpose.msra.mxu0 0
      %550 = vmatprep.subr.bf16.mxu0 0
      %551 = vmatpush1.bf16.xpose.msra.mxu0 0
      %552 = vmatprep.subr.bf16.mxu0 0
      %553 = vmatpush1.bf16.xpose.msra.mxu0 0
      %554 = vmatprep.subr.bf16.mxu0 0
      %555 = vmatpush1.bf16.xpose.msra.mxu0 0
      %556 = vmatprep.mubr.bf16.mxu0 0
      %557 = vmatmul.mubr.bf16.gmra.mrb[0].mxu0 %v519
      %v558 = vpop.f32.mrb[0].mxu0
      %v559 = vadd.f32 %v168, %v558
      %v560 = vpop.f32.mrb[0].mxu0
      %v561 = vpop.f32.mrb[0].mxu0
      %v562 = vpop.f32.mrb[0].mxu0
      %563 = vdwg.mxu0
      %v564 = vsel %vm173, %v559, -inf
      %565 = vmax.xlane.f32.xlu0 %v564
      %v566 = vpop.xlane.xlu0 %565
      %v567 = vsub.f32 %v559, %v566
      %v568 = vmul.f32 %v567, 1.442695
      %v569 = vpow.pop %v568
      %v570 = vsel %vm173, %v569, 0.0
      %571 = vadd.xlane.f32.xlu0 %v570
      %v572 = vpop.xlane.xlu0 %571
      %v573 = vrcp.pop %v572
      %v574 = vmul.f32 %v569, %v573
      %v575 = vpack.c.bf16 %v574, %v574
      %576 = vrot.lane.b32.xlu0 %v169, 40
      %v577 = vpop.permute.xlu0 %576
      %v579 = vsel %vm173, %v575, 0
      %v582 = vsel %vm237, %v577, 0
      %584 = vmatprep.subr.bf16.mxu0 0
      %585 = vmatpush1.bf16.msra.mxu0 %v582
      %586 = vmatprep.subr.bf16.mxu0 0
      %587 = vmatpush1.bf16.msra.mxu0 0
      %588 = vmatprep.subr.bf16.mxu0 0
      %589 = vmatpush1.bf16.msra.mxu0 0
      %590 = vmatprep.subr.bf16.mxu0 0
      %591 = vmatpush1.bf16.msra.mxu0 0
      %592 = vmatprep.subr.bf16.mxu0 0
      %593 = vmatpush1.bf16.msra.mxu0 0
      %594 = vmatprep.subr.bf16.mxu0 0
      %595 = vmatpush1.bf16.msra.mxu0 0
      %596 = vmatprep.subr.bf16.mxu0 0
      %597 = vmatpush1.bf16.msra.mxu0 0
      %598 = vmatprep.subr.bf16.mxu0 0
      %599 = vmatpush1.bf16.msra.mxu0 0
      %600 = vmatprep.subr.bf16.mxu0 0
      %601 = vmatpush1.bf16.msra.mxu0 0
      %602 = vmatprep.subr.bf16.mxu0 0
      %603 = vmatpush1.bf16.msra.mxu0 0
      %604 = vmatprep.subr.bf16.mxu0 0
      %605 = vmatpush1.bf16.msra.mxu0 0
      %606 = vmatprep.subr.bf16.mxu0 0
      %607 = vmatpush1.bf16.msra.mxu0 0
      %608 = vmatprep.subr.bf16.mxu0 0
      %609 = vmatpush1.bf16.msra.mxu0 0
      %610 = vmatprep.subr.bf16.mxu0 0
      %611 = vmatpush1.bf16.msra.mxu0 0
      %612 = vmatprep.subr.bf16.mxu0 0
      %613 = vmatpush1.bf16.msra.mxu0 0
      %614 = vmatprep.subr.bf16.mxu0 0
      %615 = vmatpush1.bf16.msra.mxu0 0
      %616 = vmatprep.mubr.bf16.mxu0 0
      %617 = vmatmul.mubr.bf16.gmra.mrb[0].mxu0 %v579
      %v618 = vpop.f32.mrb[0].mxu0
      %v619 = vadd.f32 0.0, %v618
      %v620 = vpop.f32.mrb[0].mxu0
      %v621 = vpop.f32.mrb[0].mxu0
      %v622 = vpop.f32.mrb[0].mxu0
      %623 = vdwg.mxu0
      %625 = vrot.lane.b32.xlu0 %v619, 24
      %v626 = vpop.permute.xlu0 %625
      %vm628 = vcmask 261312
      %629 = vst.msk [vmem:[%s152] sm:$0xff] %vm628, %v626
      %p630 = scmp.lt.s32.totalorder %s13, 1
      %s631 = scalar_select %p630, %s13, 1
      %s632 = smul.addr %s631, 8
      %s633 = scalar_lea.vmem %s2, %s632
      // Predicated region
      $region29: #{decoder_forward.17} parent=27 // pred_check
        %p634 = pneg %p83
      $region30: #{decoder_forward.17} parent=27 // pred_check_branch
        %636 = sbr.rel (%p634) target = $region32
      $region31: #{decoder_forward.17} parent=27 // pred_region
        _
      $region32: #{decoder_forward.17} parent=27 // pred_fallthru
        _
    $region28: #{decoder_forward.17} parent=5 // pred_fallthru
      _
    %p637 = scmp.le.s32.totalorder 2, %s8
    // Predicated region
    $region33: #{decoder_forward.17} parent=5 // pred_check
      %p638 = pneg %p637
    $region34: #{decoder_forward.17} parent=5 // pred_check_branch
      %640 = sbr.rel (%p638) target = $region36
    $region35: #{decoder_forward.17} parent=5 // pred_region
      %s641 = ssub.s32 %s8, 2
      // Predicated region
      $region37: #{decoder_forward.17} parent=35 // pred_check
        %p642 = pneg %p89
      $region38: #{decoder_forward.17} parent=35 // pred_check_branch
        %644 = sbr.rel (%p642) target = $region40
      $region39: #{decoder_forward.17} parent=35 // pred_region
        %p645 = scmp.lt.s32.totalorder %s14, 1
        %s646 = scalar_select %p645, %s14, 1
        %s647 = smul.addr %s646, 8
        %s648 = scalar_lea.vmem %s2, %s647
      $region40: #{decoder_forward.17} parent=35 // pred_fallthru
        _
    $region36: #{decoder_forward.17} parent=5 // pred_fallthru
      _
  $region6: #{decoder_forward.17} parent=0 // loop_footer
    %s12 = sadd.s32 1, %s8
  $region7: #{decoder_forward.17} parent=0 // loop_footer_branch
    %7 = sbr.rel target = $region3
  $region8: #{decoder_forward.17} parent=0 // loop_exit
    _

// kernel: decoder_forward.20
$region0: #{decoder_forward.20}
  #allocation0 [shape = 'u32[]', space=smem, size = 0x4, offset = 0x4, fixed_abs, tag = 'smem constant byte address 0x4 - core index']
  #allocation1 [shape = 'u32[144,128]{1,0:T(1,128)}', space=vmem, size = 0x12000, scoped, tag = 'internal scratch']
  %s0 = inlined_call_operand.vmem [shape: f32[32,32], index: 0, kind: input, shape index: {}]
  %s1 = inlined_call_operand.vmem [shape: bf16[32,64], index: 1, kind: input, shape index: {}]
  %s2 = inlined_call_operand.vmem [shape: f32[1,64], index: 2, kind: input, shape index: {}]
  %s3 = inlined_call_operand.vmem [shape: f32[32,64], index: 3, kind: output, shape index: {}]
  %s4 = sld [smem:[#allocation0]]
  $region45: #{decoder_forward.20} parent=0
    _
  %s6 = ssub.s32 1, %s4
  %s7 = scalar_select 0, %s6, %s4
  loop: start=0, step=1, limit=4
  $region2: #{decoder_forward.20} parent=0 // loop_pre_header
    _
  $region3: #{decoder_forward.20} parent=0 // loop_header
    %s9 = sphi 0, %s13
    %p10 = scmp.ge.s32.totalorder %s9, 4
    %s19 = sphi 0, %s21
    %s22 = sphi 0, %s19
    %s23 = sphi 0, %s22
    %s39 = sphi 0, %s23
    %s43 = sphi 0, %s43
    %s45 = sphi 0, %s43
    %s46 = sphi 0, %s45
    %s60 = sphi 0, %s46
    %s64 = sphi 0, %s64
    %s66 = sphi 0, %s64
    %s67 = sphi 0, %s66
    %s81 = sphi 0, %s67
    %s87 = sphi 0, %s89
    %s90 = sphi 0, %s87
    %s91 = sphi 0, %s90
    %s107 = sphi 0, %s91
  $region4: #{decoder_forward.20} parent=0 // loop_header_branch
    %12 = sbr.rel (%p10) target = $region8
  $region5: #{decoder_forward.20} parent=0 // loop_body
    %s14 = ssub.s32 %s9, 1
    %s15 = ssub.s32 %s9, 2
    %s16 = sadd.s32 %s9, 1
    %s17 = ssub.s32 %s9, %s16
    %p18 = scmp.eq.s32.totalorder %s17, 0
    %s20 = sadd.s32 %s19, 1
    %s21 = scalar_select %p18, %s19, %s20
    %p24 = pneg %p18
    %p25 = scmp.eq.s32.totalorder %s9, 1
    %p26 = por %p24, %p25
    %p27 = scmp.ne.s32.totalorder %s19, %s22
    %p28 = scmp.eq.s32.totalorder %s9, 0
    %p29 = por %p27, %p28
    %p30 = scmp.ne.s32.totalorder %s19, %s22
    %p31 = scmp.eq.s32.totalorder %s14, 1
    %p32 = por %p30, %p31
    %p33 = scmp.ne.s32.totalorder %s22, %s23
    %p34 = scmp.eq.s32.totalorder %s14, 0
    %p35 = por %p33, %p34
    %p36 = scmp.ne.s32.totalorder %s22, %s23
    %p37 = scmp.eq.s32.totalorder %s15, 1
    %p38 = por %p36, %p37
    %p40 = scmp.ne.s32.totalorder %s23, %s39
    %p41 = scmp.eq.s32.totalorder %s15, 0
    %p42 = por %p40, %p41
    %s44 = sadd.s32 %s43, 1
    %p47 = scmp.eq.s32.totalorder %s9, 1
    %p48 = scmp.ne.s32.totalorder %s43, %s45
    %p49 = scmp.eq.s32.totalorder %s9, 0
    %p50 = por %p48, %p49
    %p51 = scmp.ne.s32.totalorder %s43, %s45
    %p52 = scmp.eq.s32.totalorder %s14, 1
    %p53 = por %p51, %p52
    %p54 = scmp.ne.s32.totalorder %s45, %s46
    %p55 = scmp.eq.s32.totalorder %s14, 0
    %p56 = por %p54, %p55
    %p57 = scmp.ne.s32.totalorder %s45, %s46
    %p58 = scmp.eq.s32.totalorder %s15, 1
    %p59 = por %p57, %p58
    %p61 = scmp.ne.s32.totalorder %s46, %s60
    %p62 = scmp.eq.s32.totalorder %s15, 0
    %p63 = por %p61, %p62
    %s65 = sadd.s32 %s64, 1
    %p68 = scmp.eq.s32.totalorder %s9, 1
    %p69 = scmp.ne.s32.totalorder %s64, %s66
    %p70 = scmp.eq.s32.totalorder %s9, 0
    %p71 = por %p69, %p70
    %p72 = scmp.ne.s32.totalorder %s64, %s66
    %p73 = scmp.eq.s32.totalorder %s14, 1
    %p74 = por %p72, %p73
    %p75 = scmp.ne.s32.totalorder %s66, %s67
    %p76 = scmp.eq.s32.totalorder %s14, 0
    %p77 = por %p75, %p76
    %p78 = scmp.ne.s32.totalorder %s66, %s67
    %p79 = scmp.eq.s32.totalorder %s15, 1
    %p80 = por %p78, %p79
    %p82 = scmp.ne.s32.totalorder %s67, %s81
    %p83 = scmp.eq.s32.totalorder %s15, 0
    %p84 = por %p82, %p83
    %s85 = ssub.s32 %s9, %s16
    %p86 = scmp.eq.s32.totalorder %s85, 0
    %s88 = sadd.s32 %s87, 1
    %s89 = scalar_select %p86, %s87, %s88
    %p92 = pneg %p86
    %p93 = scmp.eq.s32.totalorder %s9, 1
    %p94 = por %p92, %p93
    %p95 = scmp.ne.s32.totalorder %s87, %s90
    %p96 = scmp.eq.s32.totalorder %s9, 0
    %p97 = por %p95, %p96
    %p98 = scmp.ne.s32.totalorder %s87, %s90
    %p99 = scmp.eq.s32.totalorder %s14, 1
    %p100 = por %p98, %p99
    %p101 = scmp.ne.s32.totalorder %s90, %s91
    %p102 = scmp.eq.s32.totalorder %s14, 0
    %p103 = por %p101, %p102
    %p104 = scmp.ne.s32.totalorder %s90, %s91
    %p105 = scmp.eq.s32.totalorder %s15, 1
    %p106 = por %p104, %p105
    %p108 = scmp.ne.s32.totalorder %s91, %s107
    %p109 = scmp.eq.s32.totalorder %s15, 0
    %p110 = por %p108, %p109
    %p111 = scmp.le.s32.totalorder 1, %s9
    %p112 = scmp.lt.s32.totalorder %s9, 3
    %p113 = pnand %p111, %p112
    %p114 = pneg %p113
    // Predicated region
    $region9: #{decoder_forward.20} parent=5 // pred_check
      _
    $region10: #{decoder_forward.20} parent=5 // pred_check_branch
      %116 = sbr.rel (%p113) target = $region12
    $region11: #{decoder_forward.20} parent=5 // pred_region
      %s117 = ssub.s32 %s9, 1
      // Predicated region
      $region13: #{decoder_forward.20} parent=11 // pred_check
        %p118 = pneg %p56
      $region14: #{decoder_forward.20} parent=11 // pred_check_branch
        %120 = sbr.rel (%p118) target = $region16
      $region15: #{decoder_forward.20} parent=11 // pred_region
        _
      $region16: #{decoder_forward.20} parent=11 // pred_fallthru
        _
      // Predicated region
      $region17: #{decoder_forward.20} parent=11 // pred_check
        %p121 = pneg %p77
      $region18: #{decoder_forward.20} parent=11 // pred_check_branch
        %123 = sbr.rel (%p121) target = $region20
      $region19: #{decoder_forward.20} parent=11 // pred_region
        _
      $region20: #{decoder_forward.20} parent=11 // pred_fallthru
        _
    $region12: #{decoder_forward.20} parent=5 // pred_fallthru
      _
    %p124 = scmp.lt.s32.totalorder %s9, 2
    // Predicated region
    $region21: #{decoder_forward.20} parent=5 // pred_check
      %p125 = pneg %p124
    $region22: #{decoder_forward.20} parent=5 // pred_check_branch
      %127 = sbr.rel (%p125) target = $region24
    $region23: #{decoder_forward.20} parent=5 // pred_region
      // Predicated region
      $region25: #{decoder_forward.20} parent=23 // pred_check
        %p128 = pneg %p29
      $region26: #{decoder_forward.20} parent=23 // pred_check_branch
        %130 = sbr.rel (%p128) target = $region28
      $region27: #{decoder_forward.20} parent=23 // pred_region
        %s131 = smul.u32 2, %s9
        %p132 = scmp.lt.s32.totalorder %s131, 3
        %s133 = scalar_select %p132, %s131, 3
        %s134 = smul.addr %s133, 8
        %s135 = scalar_lea.vmem %s0, %s134
        %s136 = smul.u32 2, %s9
      $region28: #{decoder_forward.20} parent=23 // pred_fallthru
        _
    $region24: #{decoder_forward.20} parent=5 // pred_fallthru
      _
    %p137 = scmp.le.s32.totalorder 1, %s9
    %p138 = scmp.lt.s32.totalorder %s9, 3
    %p139 = pnand %p137, %p138
    %p140 = pneg %p139
    // Predicated region
    $region29: #{decoder_forward.20} parent=5 // pred_check
      _
    $region30: #{decoder_forward.20} parent=5 // pred_check_branch
      %142 = sbr.rel (%p139) target = $region32
    $region31: #{decoder_forward.20} parent=5 // pred_region
      %s143 = ssub.s32 %s9, 1
      %s144 = smul.u32 2, %s14
      %p145 = scmp.lt.s32.totalorder %s144, 3
      %s146 = scalar_select %p145, %s144, 3
      %s147 = smul.addr %s146, 8
      %s148 = scalar_lea.vmem %s0, %s147
      %p149 = pneg %p35
      %p150 = pneg %p32
      %p151 = pneg %p56
      %p152 = pneg %p53
      %p153 = pneg %p77
      %p154 = pneg %p74
      %p155 = pneg %p103
      %p156 = pneg %p100
      %s157 = smul.u32 2, %s14
      %p158 = scmp.lt.s32.totalorder %s157, 3
      %s159 = scalar_select %p158, %s157, 3
      %s160 = smul.addr %s159, 8
      %s161 = scalar_lea.vmem %s3, %s160
      %s162 = smul.u32 2, %s14
      %p163 = scmp.lt.s32.totalorder %s162, 3
      %s164 = scalar_select %p163, %s162, 3
      %s165 = smul.addr %s164, 8
      %s166 = scalar_lea.vmem %s0, %s165
      %s167 = smul.u32 2, %s14
      %s168 = smul.u32 2, %s14
      %p169 = scmp.lt.s32.totalorder %s168, 3
      %s170 = scalar_select %p169, %s168, 3
      %s171 = smul.addr %s170, 8
      %s172 = scalar_lea.vmem %s3, %s171
      %s173 = smul.u32 2, %s14
      %v175 = vld [vmem:[%s166] sm:$0xff]
      %v176 = vld [vmem:[%s166 + $0x8] sm:$0xff]
      %v177 = vpack.c.bf16 %v176, %v175
      %v178 = vld [vmem:[%s1] sm:$0xf]
      %v179 = vld [vmem:[%s1 + $0x4] sm:$0xf]
      %v180 = vld [vmem:[%s1 + $0x8] sm:$0xf]
      %v181 = vld [vmem:[%s1 + $0xc] sm:$0xf]
      %v182 = vld [vmem:[%s2] sm:$0x1]
      %v184 = vlaneseq
      %v185 = vshrl.u32 %v184, 7
      %v186 = vsub.s32 0, %v185
      %v187 = vrot.slane %v182, %v186
      %v193 = vunpack.c.l.b16 %v178
      %v194 = vunpack.c.l.b16 %v179
      %v195 = vunpack.c.l.b16 %v180
      %v196 = vunpack.c.l.b16 %v181
      %v197 = vpack.c.b16 %v194, %v193
      %v198 = vpack.c.b16 %v196, %v195
      %vm201 = vcmask 261120
      %v203 = vsel %vm201, %v177, 0
      %205 = vmatprep.subr.bf16.mxu0 0
      %206 = vmatpush1.bf16.msra.mxu0 %v197
      %207 = vmatprep.subr.bf16.mxu0 0
      %208 = vmatpush1.bf16.msra.mxu0 %v198
      %209 = vmatprep.subr.bf16.mxu0 0
      %210 = vmatpush1.bf16.msra.mxu0 0
      %211 = vmatprep.subr.bf16.mxu0 0
      %212 = vmatpush1.bf16.msra.mxu0 0
      %213 = vmatprep.subr.bf16.mxu0 0
      %214 = vmatpush1.bf16.msra.mxu0 0
      %215 = vmatprep.subr.bf16.mxu0 0
      %216 = vmatpush1.bf16.msra.mxu0 0
      %217 = vmatprep.subr.bf16.mxu0 0
      %218 = vmatpush1.bf16.msra.mxu0 0
      %219 = vmatprep.subr.bf16.mxu0 0
      %220 = vmatpush1.bf16.msra.mxu0 0
      %221 = vmatprep.subr.bf16.mxu0 0
      %222 = vmatpush1.bf16.msra.mxu0 0
      %223 = vmatprep.subr.bf16.mxu0 0
      %224 = vmatpush1.bf16.msra.mxu0 0
      %225 = vmatprep.subr.bf16.mxu0 0
      %226 = vmatpush1.bf16.msra.mxu0 0
      %227 = vmatprep.subr.bf16.mxu0 0
      %228 = vmatpush1.bf16.msra.mxu0 0
      %229 = vmatprep.subr.bf16.mxu0 0
      %230 = vmatpush1.bf16.msra.mxu0 0
      %231 = vmatprep.subr.bf16.mxu0 0
      %232 = vmatpush1.bf16.msra.mxu0 0
      %233 = vmatprep.subr.bf16.mxu0 0
      %234 = vmatpush1.bf16.msra.mxu0 0
      %235 = vmatprep.subr.bf16.mxu0 0
      %236 = vmatpush1.bf16.msra.mxu0 0
      %237 = vmatprep.mubr.bf16.mxu0 0
      %238 = vmatmul.mubr.bf16.gmra.mrb[0].mxu0 %v203
      %v239 = vpop.f32.mrb[0].mxu0
      %v240 = vadd.f32 %v187, %v239
      %v241 = vpop.f32.mrb[0].mxu0
      %v242 = vpop.f32.mrb[0].mxu0
      %v243 = vadd.f32 %v187, %v242
      %v244 = vpop.f32.mrb[0].mxu0
      %245 = vdwg.mxu0
      %vm246 = vcmask 523264
      %247 = vst.msk [vmem:[%s172] sm:$0xff] %vm246, %v240
      %248 = vst.msk [vmem:[%s172 + $0x8] sm:$0xff] %vm246, %v243
      %s249 = smul.u32 2, %s14
      %p250 = scmp.lt.s32.totalorder %s249, 3
      %s251 = scalar_select %p250, %s249, 3
      %s252 = smul.addr %s251, 8
      %s253 = scalar_lea.vmem %s3, %s252
      // Predicated region
      $region33: #{decoder_forward.20} parent=31 // pred_check
        %p254 = pneg %p100
      $region34: #{decoder_forward.20} parent=31 // pred_check_branch
        %256 = sbr.rel (%p254) target = $region36
      $region35: #{decoder_forward.20} parent=31 // pred_region
        %s257 = smul.u32 2, %s14
      $region36: #{decoder_forward.20} parent=31 // pred_fallthru
        _
    $region32: #{decoder_forward.20} parent=5 // pred_fallthru
      _
    %p258 = scmp.le.s32.totalorder 2, %s9
    // Predicated region
    $region37: #{decoder_forward.20} parent=5 // pred_check
      %p259 = pneg %p258
    $region38: #{decoder_forward.20} parent=5 // pred_check_branch
      %261 = sbr.rel (%p259) target = $region40
    $region39: #{decoder_forward.20} parent=5 // pred_region
      %s262 = ssub.s32 %s9, 2
      // Predicated region
      $region41: #{decoder_forward.20} parent=39 // pred_check
        %p263 = pneg %p106
      $region42: #{decoder_forward.20} parent=39 // pred_check_branch
        %265 = sbr.rel (%p263) target = $region44
      $region43: #{decoder_forward.20} parent=39 // pred_region
        %s266 = smul.u32 2, %s15
        %p267 = scmp.lt.s32.totalorder %s266, 3
        %s268 = scalar_select %p267, %s266, 3
        %s269 = smul.addr %s268, 8
        %s270 = scalar_lea.vmem %s3, %s269
      $region44: #{decoder_forward.20} parent=39 // pred_fallthru
        _
    $region40: #{decoder_forward.20} parent=5 // pred_fallthru
      _
  $region6: #{decoder_forward.20} parent=0 // loop_footer
    %s13 = sadd.s32 1, %s9
  $region7: #{decoder_forward.20} parent=0 // loop_footer_branch
    %8 = sbr.rel target = $region3
  $region8: #{decoder_forward.20} parent=0 // loop_exit
    _

// kernel: decoder_forward.21
$region0: #{decoder_forward.21}
  #allocation0 [shape = 'u32[]', space=smem, size = 0x4, offset = 0x4, fixed_abs, tag = 'smem constant byte address 0x4 - core index']
  #allocation1 [shape = 'u32[144,128]{1,0:T(1,128)}', space=vmem, size = 0x12000, scoped, tag = 'internal scratch']
  %s0 = inlined_call_operand.vmem [shape: f32[2,8,32], index: 0, kind: input, shape index: {}]
  %s1 = inlined_call_operand.vmem [shape: f32[2,16,64], index: 1, kind: input, shape index: {}]
  %s2 = inlined_call_operand.vmem [shape: f32[2,8,32], index: 2, kind: output, shape index: {0}]
  %s3 = inlined_call_operand.vmem [shape: f32[2,4,8,16], index: 3, kind: output, shape index: {1}]
  %4 = xla_tuple %s2, %s3
  %s5 = sld [smem:[#allocation0]]
  $region49: #{decoder_forward.21} parent=0
    _
  %s7 = ssub.s32 1, %s5
  %s8 = scalar_select 0, %s7, %s5
  loop: start=0, step=1, limit=4
  $region2: #{decoder_forward.21} parent=0 // loop_pre_header
    _
  $region3: #{decoder_forward.21} parent=0 // loop_header
    %s10 = sphi 0, %s14
    %p11 = scmp.ge.s32.totalorder %s10, 4
    %s20 = sphi 0, %s22
    %s23 = sphi 0, %s20
    %s24 = sphi 0, %s23
    %s40 = sphi 0, %s24
    %s46 = sphi 0, %s48
    %s49 = sphi 0, %s46
    %s50 = sphi 0, %s49
    %s66 = sphi 0, %s50
    %s72 = sphi 0, %s74
    %s75 = sphi 0, %s72
    %s76 = sphi 0, %s75
    %s92 = sphi 0, %s76
    %s98 = sphi 0, %s100
    %s101 = sphi 0, %s98
    %s102 = sphi 0, %s101
    %s118 = sphi 0, %s102
  $region4: #{decoder_forward.21} parent=0 // loop_header_branch
    %13 = sbr.rel (%p11) target = $region8
  $region5: #{decoder_forward.21} parent=0 // loop_body
    %s15 = ssub.s32 %s10, 1
    %s16 = ssub.s32 %s10, 2
    %s17 = sadd.s32 %s10, 1
    %s18 = ssub.s32 %s10, %s17
    %p19 = scmp.eq.s32.totalorder %s18, 0
    %s21 = sadd.s32 %s20, 1
    %s22 = scalar_select %p19, %s20, %s21
    %p25 = pneg %p19
    %p26 = scmp.eq.s32.totalorder %s10, 1
    %p27 = por %p25, %p26
    %p28 = scmp.ne.s32.totalorder %s20, %s23
    %p29 = scmp.eq.s32.totalorder %s10, 0
    %p30 = por %p28, %p29
    %p31 = scmp.ne.s32.totalorder %s20, %s23
    %p32 = scmp.eq.s32.totalorder %s15, 1
    %p33 = por %p31, %p32
    %p34 = scmp.ne.s32.totalorder %s23, %s24
    %p35 = scmp.eq.s32.totalorder %s15, 0
    %p36 = por %p34, %p35
    %p37 = scmp.ne.s32.totalorder %s23, %s24
    %p38 = scmp.eq.s32.totalorder %s16, 1
    %p39 = por %p37, %p38
    %p41 = scmp.ne.s32.totalorder %s24, %s40
    %p42 = scmp.eq.s32.totalorder %s16, 0
    %p43 = por %p41, %p42
    %s44 = ssub.s32 %s10, %s17
    %p45 = scmp.eq.s32.totalorder %s44, 0
    %s47 = sadd.s32 %s46, 1
    %s48 = scalar_select %p45, %s46, %s47
    %p51 = pneg %p45
    %p52 = scmp.eq.s32.totalorder %s10, 1
    %p53 = por %p51, %p52
    %p54 = scmp.ne.s32.totalorder %s46, %s49
    %p55 = scmp.eq.s32.totalorder %s10, 0
    %p56 = por %p54, %p55
    %p57 = scmp.ne.s32.totalorder %s46, %s49
    %p58 = scmp.eq.s32.totalorder %s15, 1
    %p59 = por %p57, %p58
    %p60 = scmp.ne.s32.totalorder %s49, %s50
    %p61 = scmp.eq.s32.totalorder %s15, 0
    %p62 = por %p60, %p61
    %p63 = scmp.ne.s32.totalorder %s49, %s50
    %p64 = scmp.eq.s32.totalorder %s16, 1
    %p65 = por %p63, %p64
    %p67 = scmp.ne.s32.totalorder %s50, %s66
    %p68 = scmp.eq.s32.totalorder %s16, 0
    %p69 = por %p67, %p68
    %s70 = ssub.s32 %s10, %s17
    %p71 = scmp.eq.s32.totalorder %s70, 0
    %s73 = sadd.s32 %s72, 1
    %s74 = scalar_select %p71, %s72, %s73
    %p77 = pneg %p71
    %p78 = scmp.eq.s32.totalorder %s10, 1
    %p79 = por %p77, %p78
    %p80 = scmp.ne.s32.totalorder %s72, %s75
    %p81 = scmp.eq.s32.totalorder %s10, 0
    %p82 = por %p80, %p81
    %p83 = scmp.ne.s32.totalorder %s72, %s75
    %p84 = scmp.eq.s32.totalorder %s15, 1
    %p85 = por %p83, %p84
    %p86 = scmp.ne.s32.totalorder %s75, %s76
    %p87 = scmp.eq.s32.totalorder %s15, 0
    %p88 = por %p86, %p87
    %p89 = scmp.ne.s32.totalorder %s75, %s76
    %p90 = scmp.eq.s32.totalorder %s16, 1
    %p91 = por %p89, %p90
    %p93 = scmp.ne.s32.totalorder %s76, %s92
    %p94 = scmp.eq.s32.totalorder %s16, 0
    %p95 = por %p93, %p94
    %s96 = ssub.s32 %s10, %s17
    %p97 = scmp.eq.s32.totalorder %s96, 0
    %s99 = sadd.s32 %s98, 1
    %s100 = scalar_select %p97, %s98, %s99
    %p103 = pneg %p97
    %p104 = scmp.eq.s32.totalorder %s10, 1
    %p105 = por %p103, %p104
    %p106 = scmp.ne.s32.totalorder %s98, %s101
    %p107 = scmp.eq.s32.totalorder %s10, 0
    %p108 = por %p106, %p107
    %p109 = scmp.ne.s32.totalorder %s98, %s101
    %p110 = scmp.eq.s32.totalorder %s15, 1
    %p111 = por %p109, %p110
    %p112 = scmp.ne.s32.totalorder %s101, %s102
    %p113 = scmp.eq.s32.totalorder %s15, 0
    %p114 = por %p112, %p113
    %p115 = scmp.ne.s32.totalorder %s101, %s102
    %p116 = scmp.eq.s32.totalorder %s16, 1
    %p117 = por %p115, %p116
    %p119 = scmp.ne.s32.totalorder %s102, %s118
    %p120 = scmp.eq.s32.totalorder %s16, 0
    %p121 = por %p119, %p120
    %p122 = scmp.le.s32.totalorder 1, %s10
    %p123 = scmp.lt.s32.totalorder %s10, 3
    %p124 = pnand %p122, %p123
    %p125 = pneg %p124
    // Predicated region
    $region9: #{decoder_forward.21} parent=5 // pred_check
      _
    $region10: #{decoder_forward.21} parent=5 // pred_check_branch
      %127 = sbr.rel (%p124) target = $region12
    $region11: #{decoder_forward.21} parent=5 // pred_region
      %s128 = ssub.s32 %s10, 1
    $region12: #{decoder_forward.21} parent=5 // pred_fallthru
      _
    %p129 = scmp.lt.s32.totalorder %s10, 2
    // Predicated region
    $region13: #{decoder_forward.21} parent=5 // pred_check
      %p130 = pneg %p129
    $region14: #{decoder_forward.21} parent=5 // pred_check_branch
      %132 = sbr.rel (%p130) target = $region16
    $region15: #{decoder_forward.21} parent=5 // pred_region
      // Predicated region
      $region17: #{decoder_forward.21} parent=15 // pred_check
        %p133 = pneg %p30
      $region18: #{decoder_forward.21} parent=15 // pred_check_branch
        %135 = sbr.rel (%p133) target = $region20
      $region19: #{decoder_forward.21} parent=15 // pred_region
        %p136 = scmp.lt.s32.totalorder %s10, 1
        %s137 = scalar_select %p136, %s10, 1
        %s138 = smul.addr %s137, 8
        %s139 = scalar_lea.vmem %s0, %s138
      $region20: #{decoder_forward.21} parent=15 // pred_fallthru
        _
      // Predicated region
      $region21: #{decoder_forward.21} parent=15 // pred_check
        %p140 = pneg %p56
      $region22: #{decoder_forward.21} parent=15 // pred_check_branch
        %142 = sbr.rel (%p140) target = $region24
      $region23: #{decoder_forward.21} parent=15 // pred_region
        %p143 = scmp.lt.s32.totalorder %s10, 1
        %s144 = scalar_select %p143, %s10, 1
        %s145 = smul.addr %s144, 2
        %s146 = smul.addr %s145, 8
        %s147 = scalar_lea.vmem %s1, %s146
      $region24: #{decoder_forward.21} parent=15 // pred_fallthru
        _
    $region16: #{decoder_forward.21} parent=5 // pred_fallthru
      _
    %p148 = scmp.le.s32.totalorder 1, %s10
    %p149 = scmp.lt.s32.totalorder %s10, 3
    %p150 = pnand %p148, %p149
    %p151 = pneg %p150
    // Predicated region
    $region25: #{decoder_forward.21} parent=5 // pred_check
      _
    $region26: #{decoder_forward.21} parent=5 // pred_check_branch
      %153 = sbr.rel (%p150) target = $region28
    $region27: #{decoder_forward.21} parent=5 // pred_region
      %s154 = ssub.s32 %s10, 1
      %p155 = scmp.lt.s32.totalorder %s15, 1
      %s156 = scalar_select %p155, %s15, 1
      %s157 = smul.addr %s156, 8
      %s158 = scalar_lea.vmem %s0, %s157
      %p159 = pneg %p36
      %p160 = pneg %p33
      %p161 = scmp.lt.s32.totalorder %s15, 1
      %s162 = scalar_select %p161, %s15, 1
      %s163 = smul.addr %s162, 2
      %s164 = smul.addr %s163, 8
      %s165 = scalar_lea.vmem %s1, %s164
      %p166 = pneg %p62
      %p167 = pneg %p59
      %p168 = pneg %p88
      %p169 = pneg %p85
      %p170 = scmp.lt.s32.totalorder %s15, 1
      %s171 = scalar_select %p170, %s15, 1
      %s172 = smul.addr %s171, 8
      %s173 = scalar_lea.vmem %s2, %s172
      %p174 = pneg %p114
      %p175 = pneg %p111
      %p176 = scmp.lt.s32.totalorder %s15, 1
      %s177 = scalar_select %p176, %s15, 1
      %s178 = smul.addr %s177, 4
      %s179 = smul.addr %s178, 8
      %s180 = scalar_lea.vmem %s3, %s179
      %p181 = scmp.lt.s32.totalorder %s15, 1
      %s182 = scalar_select %p181, %s15, 1
      %s183 = smul.addr %s182, 8
      %s184 = scalar_lea.vmem %s0, %s183
      %p185 = scmp.lt.s32.totalorder %s15, 1
      %s186 = scalar_select %p185, %s15, 1
      %s187 = smul.addr %s186, 2
      %s188 = smul.addr %s187, 8
      %s189 = scalar_lea.vmem %s1, %s188
      %p190 = scmp.lt.s32.totalorder %s15, 1
      %s191 = scalar_select %p190, %s15, 1
      %s192 = smul.addr %s191, 8
      %s193 = scalar_lea.vmem %s2, %s192
      %p194 = scmp.lt.s32.totalorder %s15, 1
      %s195 = scalar_select %p194, %s15, 1
      %s196 = smul.addr %s195, 4
      %s197 = smul.addr %s196, 8
      %s198 = scalar_lea.vmem %s3, %s197
      %v200 = vld [vmem:[%s184] sm:$0xff]
      %v201 = vld [vmem:[%s189] sm:$0xff]
      %v202 = vld [vmem:[%s189 + $0x8] sm:$0xff]
      %v203 = vpack.c.bf16 %v200, %v200
      %v204 = vpack.c.bf16 %v202, %v201
      %vm205 = vcmask 64512
      %v207 = vsel %vm205, %v203, 0
      %v210 = vsel %vm205, %v204, 0
      %212 = vmatprep.subr.bf16.mxu0 0
      %213 = vmatpush1.bf16.xpose.msra.mxu0 %v210
      %214 = vmatprep.subr.bf16.mxu0 0
      %215 = vmatpush1.bf16.xpose.msra.mxu0 0
      %216 = vmatprep.subr.bf16.mxu0 0
      %217 = vmatpush1.bf16.xpose.msra.mxu0 0
      %218 = vmatprep.subr.bf16.mxu0 0
      %219 = vmatpush1.bf16.xpose.msra.mxu0 0
      %220 = vmatprep.subr.bf16.mxu0 0
      %221 = vmatpush1.bf16.xpose.msra.mxu0 0
      %222 = vmatprep.subr.bf16.mxu0 0
      %223 = vmatpush1.bf16.xpose.msra.mxu0 0
      %224 = vmatprep.subr.bf16.mxu0 0
      %225 = vmatpush1.bf16.xpose.msra.mxu0 0
      %226 = vmatprep.subr.bf16.mxu0 0
      %227 = vmatpush1.bf16.xpose.msra.mxu0 0
      %228 = vmatprep.subr.bf16.mxu0 0
      %229 = vmatpush1.bf16.xpose.msra.mxu0 0
      %230 = vmatprep.subr.bf16.mxu0 0
      %231 = vmatpush1.bf16.xpose.msra.mxu0 0
      %232 = vmatprep.subr.bf16.mxu0 0
      %233 = vmatpush1.bf16.xpose.msra.mxu0 0
      %234 = vmatprep.subr.bf16.mxu0 0
      %235 = vmatpush1.bf16.xpose.msra.mxu0 0
      %236 = vmatprep.subr.bf16.mxu0 0
      %237 = vmatpush1.bf16.xpose.msra.mxu0 0
      %238 = vmatprep.subr.bf16.mxu0 0
      %239 = vmatpush1.bf16.xpose.msra.mxu0 0
      %240 = vmatprep.subr.bf16.mxu0 0
      %241 = vmatpush1.bf16.xpose.msra.mxu0 0
      %242 = vmatprep.subr.bf16.mxu0 0
      %243 = vmatpush1.bf16.xpose.msra.mxu0 0
      %244 = vmatprep.mubr.bf16.mxu0 0
      %245 = vmatmul.mubr.bf16.gmra.mrb[0].mxu0 %v207
      %v246 = vpop.f32.mrb[0].mxu0
      %v247 = vadd.f32 0.0, %v246
      %v248 = vpop.f32.mrb[0].mxu0
      %v249 = vpop.f32.mrb[0].mxu0
      %v250 = vpop.f32.mrb[0].mxu0
      %251 = vdwg.mxu0
      %vm252 = vcmask 130048
      %v253 = vsel %vm252, %v247, -inf
      %254 = vmax.xlane.f32.xlu0 %v253
      %v255 = vpop.xlane.xlu0 %254
      %v256 = vsub.f32 %v247, %v255
      %v257 = vmul.f32 %v256, 1.442695
      %v258 = vpow.pop %v257
      %v259 = vsel %vm252, %v258, 0.0
      %260 = vadd.xlane.f32.xlu0 %v259
      %v261 = vpop.xlane.xlu0 %260
      %v262 = vrcp.pop %v261
      %v263 = vmul.f32 %v258, %v262
      %264 = vst.msk [vmem:[%s198] sm:$0xff] %vm252, %v263
      %v265 = vpack.c.bf16 %v263, %v263
      %267 = vrot.lane.b32.xlu0 %v204, 96
      %v268 = vpop.permute.xlu0 %267
      %v271 = vsel %vm252, %v265, 0
      %273 = vmatprep.subr.bf16.mxu0 0
      %274 = vmatpush1.bf16.msra.mxu0 %v268
      %275 = vmatprep.subr.bf16.mxu0 0
      %276 = vmatpush1.bf16.msra.mxu0 0
      %277 = vmatprep.subr.bf16.mxu0 0
      %278 = vmatpush1.bf16.msra.mxu0 0
      %279 = vmatprep.subr.bf16.mxu0 0
      %280 = vmatpush1.bf16.msra.mxu0 0
      %281 = vmatprep.subr.bf16.mxu0 0
      %282 = vmatpush1.bf16.msra.mxu0 0
      %283 = vmatprep.subr.bf16.mxu0 0
      %284 = vmatpush1.bf16.msra.mxu0 0
      %285 = vmatprep.subr.bf16.mxu0 0
      %286 = vmatpush1.bf16.msra.mxu0 0
      %287 = vmatprep.subr.bf16.mxu0 0
      %288 = vmatpush1.bf16.msra.mxu0 0
      %289 = vmatprep.subr.bf16.mxu0 0
      %290 = vmatpush1.bf16.msra.mxu0 0
      %291 = vmatprep.subr.bf16.mxu0 0
      %292 = vmatpush1.bf16.msra.mxu0 0
      %293 = vmatprep.subr.bf16.mxu0 0
      %294 = vmatpush1.bf16.msra.mxu0 0
      %295 = vmatprep.subr.bf16.mxu0 0
      %296 = vmatpush1.bf16.msra.mxu0 0
      %297 = vmatprep.subr.bf16.mxu0 0
      %298 = vmatpush1.bf16.msra.mxu0 0
      %299 = vmatprep.subr.bf16.mxu0 0
      %300 = vmatpush1.bf16.msra.mxu0 0
      %301 = vmatprep.subr.bf16.mxu0 0
      %302 = vmatpush1.bf16.msra.mxu0 0
      %303 = vmatprep.subr.bf16.mxu0 0
      %304 = vmatpush1.bf16.msra.mxu0 0
      %305 = vmatprep.mubr.bf16.mxu0 0
      %306 = vmatmul.mubr.bf16.gmra.mrb[0].mxu0 %v271
      %v307 = vpop.f32.mrb[0].mxu0
      %v308 = vadd.f32 0.0, %v307
      %v309 = vpop.f32.mrb[0].mxu0
      %v310 = vpop.f32.mrb[0].mxu0
      %v311 = vpop.f32.mrb[0].mxu0
      %312 = vdwg.mxu0
      %313 = vst.msk [vmem:[%s193] sm:$0xff] %vm205, %v308
      %315 = vrot.lane.b32.xlu0 %v203, 120
      %v316 = vpop.permute.xlu0 %315
      %317 = vrot.lane.b32.xlu0 %v204, 120
      %v318 = vpop.permute.xlu0 %317
      %v320 = vsel %vm205, %v316, 0
      %v323 = vsel %vm205, %v318, 0
      %325 = vmatprep.subr.bf16.mxu0 0
      %326 = vmatpush1.bf16.xpose.msra.mxu0 %v323
      %327 = vmatprep.subr.bf16.mxu0 0
      %328 = vmatpush1.bf16.xpose.msra.mxu0 0
      %329 = vmatprep.subr.bf16.mxu0 0
      %330 = vmatpush1.bf16.xpose.msra.mxu0 0
      %331 = vmatprep.subr.bf16.mxu0 0
      %332 = vmatpush1.bf16.xpose.msra.mxu0 0
      %333 = vmatprep.subr.bf16.mxu0 0
      %334 = vmatpush1.bf16.xpose.msra.mxu0 0
      %335 = vmatprep.subr.bf16.mxu0 0
      %336 = vmatpush1.bf16.xpose.msra.mxu0 0
      %337 = vmatprep.subr.bf16.mxu0 0
      %338 = vmatpush1.bf16.xpose.msra.mxu0 0
      %339 = vmatprep.subr.bf16.mxu0 0
      %340 = vmatpush1.bf16.xpose.msra.mxu0 0
      %341 = vmatprep.subr.bf16.mxu0 0
      %342 = vmatpush1.bf16.xpose.msra.mxu0 0
      %343 = vmatprep.subr.bf16.mxu0 0
      %344 = vmatpush1.bf16.xpose.msra.mxu0 0
      %345 = vmatprep.subr.bf16.mxu0 0
      %346 = vmatpush1.bf16.xpose.msra.mxu0 0
      %347 = vmatprep.subr.bf16.mxu0 0
      %348 = vmatpush1.bf16.xpose.msra.mxu0 0
      %349 = vmatprep.subr.bf16.mxu0 0
      %350 = vmatpush1.bf16.xpose.msra.mxu0 0
      %351 = vmatprep.subr.bf16.mxu0 0
      %352 = vmatpush1.bf16.xpose.msra.mxu0 0
      %353 = vmatprep.subr.bf16.mxu0 0
      %354 = vmatpush1.bf16.xpose.msra.mxu0 0
      %355 = vmatprep.subr.bf16.mxu0 0
      %356 = vmatpush1.bf16.xpose.msra.mxu0 0
      %357 = vmatprep.mubr.bf16.mxu0 0
      %358 = vmatmul.mubr.bf16.gmra.mrb[0].mxu0 %v320
      %v359 = vpop.f32.mrb[0].mxu0
      %v360 = vadd.f32 0.0, %v359
      %v361 = vpop.f32.mrb[0].mxu0
      %v362 = vpop.f32.mrb[0].mxu0
      %v363 = vpop.f32.mrb[0].mxu0
      %364 = vdwg.mxu0
      %v365 = vsel %vm252, %v360, -inf
      %366 = vmax.xlane.f32.xlu0 %v365
      %v367 = vpop.xlane.xlu0 %366
      %v368 = vsub.f32 %v360, %v367
      %v369 = vmul.f32 %v368, 1.442695
      %v370 = vpow.pop %v369
      %v371 = vsel %vm252, %v370, 0.0
      %372 = vadd.xlane.f32.xlu0 %v371
      %v373 = vpop.xlane.xlu0 %372
      %v374 = vrcp.pop %v373
      %v375 = vmul.f32 %v370, %v374
      %s376 = scalar_lea.vmem %s198, 8
      %377 = vst.msk [vmem:[%s376] sm:$0xff] %vm252, %v375
      %v378 = vpack.c.bf16 %v375, %v375
      %379 = vrot.lane.b32.xlu0 %v204, 88
      %v380 = vpop.permute.xlu0 %379
      %v383 = vsel %vm252, %v378, 0
      %385 = vmatprep.subr.bf16.mxu0 0
      %386 = vmatpush1.bf16.msra.mxu0 %v380
      %387 = vmatprep.subr.bf16.mxu0 0
      %388 = vmatpush1.bf16.msra.mxu0 0
      %389 = vmatprep.subr.bf16.mxu0 0
      %390 = vmatpush1.bf16.msra.mxu0 0
      %391 = vmatprep.subr.bf16.mxu0 0
      %392 = vmatpush1.bf16.msra.mxu0 0
      %393 = vmatprep.subr.bf16.mxu0 0
      %394 = vmatpush1.bf16.msra.mxu0 0
      %395 = vmatprep.subr.bf16.mxu0 0
      %396 = vmatpush1.bf16.msra.mxu0 0
      %397 = vmatprep.subr.bf16.mxu0 0
      %398 = vmatpush1.bf16.msra.mxu0 0
      %399 = vmatprep.subr.bf16.mxu0 0
      %400 = vmatpush1.bf16.msra.mxu0 0
      %401 = vmatprep.subr.bf16.mxu0 0
      %402 = vmatpush1.bf16.msra.mxu0 0
      %403 = vmatprep.subr.bf16.mxu0 0
      %404 = vmatpush1.bf16.msra.mxu0 0
      %405 = vmatprep.subr.bf16.mxu0 0
      %406 = vmatpush1.bf16.msra.mxu0 0
      %407 = vmatprep.subr.bf16.mxu0 0
      %408 = vmatpush1.bf16.msra.mxu0 0
      %409 = vmatprep.subr.bf16.mxu0 0
      %410 = vmatpush1.bf16.msra.mxu0 0
      %411 = vmatprep.subr.bf16.mxu0 0
      %412 = vmatpush1.bf16.msra.mxu0 0
      %413 = vmatprep.subr.bf16.mxu0 0
      %414 = vmatpush1.bf16.msra.mxu0 0
      %415 = vmatprep.subr.bf16.mxu0 0
      %416 = vmatpush1.bf16.msra.mxu0 0
      %417 = vmatprep.mubr.bf16.mxu0 0
      %418 = vmatmul.mubr.bf16.gmra.mrb[0].mxu0 %v383
      %v419 = vpop.f32.mrb[0].mxu0
      %v420 = vadd.f32 0.0, %v419
      %v421 = vpop.f32.mrb[0].mxu0
      %v422 = vpop.f32.mrb[0].mxu0
      %v423 = vpop.f32.mrb[0].mxu0
      %424 = vdwg.mxu0
      %426 = vrot.lane.b32.xlu0 %v420, 8
      %v427 = vpop.permute.xlu0 %426
      %vm429 = vcmask 130112
      %430 = vst.msk [vmem:[%s193] sm:$0xff] %vm429, %v427
      %431 = vrot.lane.b32.xlu0 %v203, 112
      %v432 = vpop.permute.xlu0 %431
      %433 = vrot.lane.b32.xlu0 %v204, 112
      %v434 = vpop.permute.xlu0 %433
      %v436 = vsel %vm205, %v432, 0
      %v439 = vsel %vm205, %v434, 0
      %441 = vmatprep.subr.bf16.mxu0 0
      %442 = vmatpush1.bf16.xpose.msra.mxu0 %v439
      %443 = vmatprep.subr.bf16.mxu0 0
      %444 = vmatpush1.bf16.xpose.msra.mxu0 0
      %445 = vmatprep.subr.bf16.mxu0 0
      %446 = vmatpush1.bf16.xpose.msra.mxu0 0
      %447 = vmatprep.subr.bf16.mxu0 0
      %448 = vmatpush1.bf16.xpose.msra.mxu0 0
      %449 = vmatprep.subr.bf16.mxu0 0
      %450 = vmatpush1.bf16.xpose.msra.mxu0 0
      %451 = vmatprep.subr.bf16.mxu0 0
      %452 = vmatpush1.bf16.xpose.msra.mxu0 0
      %453 = vmatprep.subr.bf16.mxu0 0
      %454 = vmatpush1.bf16.xpose.msra.mxu0 0
      %455 = vmatprep.subr.bf16.mxu0 0
      %456 = vmatpush1.bf16.xpose.msra.mxu0 0
      %457 = vmatprep.subr.bf16.mxu0 0
      %458 = vmatpush1.bf16.xpose.msra.mxu0 0
      %459 = vmatprep.subr.bf16.mxu0 0
      %460 = vmatpush1.bf16.xpose.msra.mxu0 0
      %461 = vmatprep.subr.bf16.mxu0 0
      %462 = vmatpush1.bf16.xpose.msra.mxu0 0
      %463 = vmatprep.subr.bf16.mxu0 0
      %464 = vmatpush1.bf16.xpose.msra.mxu0 0
      %465 = vmatprep.subr.bf16.mxu0 0
      %466 = vmatpush1.bf16.xpose.msra.mxu0 0
      %467 = vmatprep.subr.bf16.mxu0 0
      %468 = vmatpush1.bf16.xpose.msra.mxu0 0
      %469 = vmatprep.subr.bf16.mxu0 0
      %470 = vmatpush1.bf16.xpose.msra.mxu0 0
      %471 = vmatprep.subr.bf16.mxu0 0
      %472 = vmatpush1.bf16.xpose.msra.mxu0 0
      %473 = vmatprep.mubr.bf16.mxu0 0
      %474 = vmatmul.mubr.bf16.gmra.mrb[0].mxu0 %v436
      %v475 = vpop.f32.mrb[0].mxu0
      %v476 = vadd.f32 0.0, %v475
      %v477 = vpop.f32.mrb[0].mxu0
      %v478 = vpop.f32.mrb[0].mxu0
      %v479 = vpop.f32.mrb[0].mxu0
      %480 = vdwg.mxu0
      %v481 = vsel %vm252, %v476, -inf
      %482 = vmax.xlane.f32.xlu0 %v481
      %v483 = vpop.xlane.xlu0 %482
      %v484 = vsub.f32 %v476, %v483
      %v485 = vmul.f32 %v484, 1.442695
      %v486 = vpow.pop %v485
      %v487 = vsel %vm252, %v486, 0.0
      %488 = vadd.xlane.f32.xlu0 %v487
      %v489 = vpop.xlane.xlu0 %488
      %v490 = vrcp.pop %v489
      %v491 = vmul.f32 %v486, %v490
      %s492 = scalar_lea.vmem %s198, 16
      %493 = vst.msk [vmem:[%s492] sm:$0xff] %vm252, %v491
      %v494 = vpack.c.bf16 %v491, %v491
      %495 = vrot.lane.b32.xlu0 %v204, 80
      %v496 = vpop.permute.xlu0 %495
      %v499 = vsel %vm252, %v494, 0
      %501 = vmatprep.subr.bf16.mxu0 0
      %502 = vmatpush1.bf16.msra.mxu0 %v496
      %503 = vmatprep.subr.bf16.mxu0 0
      %504 = vmatpush1.bf16.msra.mxu0 0
      %505 = vmatprep.subr.bf16.mxu0 0
      %506 = vmatpush1.bf16.msra.mxu0 0
      %507 = vmatprep.subr.bf16.mxu0 0
      %508 = vmatpush1.bf16.msra.mxu0 0
      %509 = vmatprep.subr.bf16.mxu0 0
      %510 = vmatpush1.bf16.msra.mxu0 0
      %511 = vmatprep.subr.bf16.mxu0 0
      %512 = vmatpush1.bf16.msra.mxu0 0
      %513 = vmatprep.subr.bf16.mxu0 0
      %514 = vmatpush1.bf16.msra.mxu0 0
      %515 = vmatprep.subr.bf16.mxu0 0
      %516 = vmatpush1.bf16.msra.mxu0 0
      %517 = vmatprep.subr.bf16.mxu0 0
      %518 = vmatpush1.bf16.msra.mxu0 0
      %519 = vmatprep.subr.bf16.mxu0 0
      %520 = vmatpush1.bf16.msra.mxu0 0
      %521 = vmatprep.subr.bf16.mxu0 0
      %522 = vmatpush1.bf16.msra.mxu0 0
      %523 = vmatprep.subr.bf16.mxu0 0
      %524 = vmatpush1.bf16.msra.mxu0 0
      %525 = vmatprep.subr.bf16.mxu0 0
      %526 = vmatpush1.bf16.msra.mxu0 0
      %527 = vmatprep.subr.bf16.mxu0 0
      %528 = vmatpush1.bf16.msra.mxu0 0
      %529 = vmatprep.subr.bf16.mxu0 0
      %530 = vmatpush1.bf16.msra.mxu0 0
      %531 = vmatprep.subr.bf16.mxu0 0
      %532 = vmatpush1.bf16.msra.mxu0 0
      %533 = vmatprep.mubr.bf16.mxu0 0
      %534 = vmatmul.mubr.bf16.gmra.mrb[0].mxu0 %v499
      %v535 = vpop.f32.mrb[0].mxu0
      %v536 = vadd.f32 0.0, %v535
      %v537 = vpop.f32.mrb[0].mxu0
      %v538 = vpop.f32.mrb[0].mxu0
      %v539 = vpop.f32.mrb[0].mxu0
      %540 = vdwg.mxu0
      %542 = vrot.lane.b32.xlu0 %v536, 16
      %v543 = vpop.permute.xlu0 %542
      %vm545 = vcmask 195712
      %546 = vst.msk [vmem:[%s193] sm:$0xff] %vm545, %v543
      %547 = vrot.lane.b32.xlu0 %v203, 104
      %v548 = vpop.permute.xlu0 %547
      %549 = vrot.lane.b32.xlu0 %v204, 104
      %v550 = vpop.permute.xlu0 %549
      %v552 = vsel %vm205, %v548, 0
      %v555 = vsel %vm205, %v550, 0
      %557 = vmatprep.subr.bf16.mxu0 0
      %558 = vmatpush1.bf16.xpose.msra.mxu0 %v555
      %559 = vmatprep.subr.bf16.mxu0 0
      %560 = vmatpush1.bf16.xpose.msra.mxu0 0
      %561 = vmatprep.subr.bf16.mxu0 0
      %562 = vmatpush1.bf16.xpose.msra.mxu0 0
      %563 = vmatprep.subr.bf16.mxu0 0
      %564 = vmatpush1.bf16.xpose.msra.mxu0 0
      %565 = vmatprep.subr.bf16.mxu0 0
      %566 = vmatpush1.bf16.xpose.msra.mxu0 0
      %567 = vmatprep.subr.bf16.mxu0 0
      %568 = vmatpush1.bf16.xpose.msra.mxu0 0
      %569 = vmatprep.subr.bf16.mxu0 0
      %570 = vmatpush1.bf16.xpose.msra.mxu0 0
      %571 = vmatprep.subr.bf16.mxu0 0
      %572 = vmatpush1.bf16.xpose.msra.mxu0 0
      %573 = vmatprep.subr.bf16.mxu0 0
      %574 = vmatpush1.bf16.xpose.msra.mxu0 0
      %575 = vmatprep.subr.bf16.mxu0 0
      %576 = vmatpush1.bf16.xpose.msra.mxu0 0
      %577 = vmatprep.subr.bf16.mxu0 0
      %578 = vmatpush1.bf16.xpose.msra.mxu0 0
      %579 = vmatprep.subr.bf16.mxu0 0
      %580 = vmatpush1.bf16.xpose.msra.mxu0 0
      %581 = vmatprep.subr.bf16.mxu0 0
      %582 = vmatpush1.bf16.xpose.msra.mxu0 0
      %583 = vmatprep.subr.bf16.mxu0 0
      %584 = vmatpush1.bf16.xpose.msra.mxu0 0
      %585 = vmatprep.subr.bf16.mxu0 0
      %586 = vmatpush1.bf16.xpose.msra.mxu0 0
      %587 = vmatprep.subr.bf16.mxu0 0
      %588 = vmatpush1.bf16.xpose.msra.mxu0 0
      %589 = vmatprep.mubr.bf16.mxu0 0
      %590 = vmatmul.mubr.bf16.gmra.mrb[0].mxu0 %v552
      %v591 = vpop.f32.mrb[0].mxu0
      %v592 = vadd.f32 0.0, %v591
      %v593 = vpop.f32.mrb[0].mxu0
      %v594 = vpop.f32.mrb[0].mxu0
      %v595 = vpop.f32.mrb[0].mxu0
      %596 = vdwg.mxu0
      %v597 = vsel %vm252, %v592, -inf
      %598 = vmax.xlane.f32.xlu0 %v597
      %v599 = vpop.xlane.xlu0 %598
      %v600 = vsub.f32 %v592, %v599
      %v601 = vmul.f32 %v600, 1.442695
      %v602 = vpow.pop %v601
      %v603 = vsel %vm252, %v602, 0.0
      %604 = vadd.xlane.f32.xlu0 %v603
      %v605 = vpop.xlane.xlu0 %604
      %v606 = vrcp.pop %v605
      %v607 = vmul.f32 %v602, %v606
      %s608 = scalar_lea.vmem %s198, 24
      %609 = vst.msk [vmem:[%s608] sm:$0xff] %vm252, %v607
      %v610 = vpack.c.bf16 %v607, %v607
      %611 = vrot.lane.b32.xlu0 %v204, 72
      %v612 = vpop.permute.xlu0 %611
      %v615 = vsel %vm252, %v610, 0
      %617 = vmatprep.subr.bf16.mxu0 0
      %618 = vmatpush1.bf16.msra.mxu0 %v612
      %619 = vmatprep.subr.bf16.mxu0 0
      %620 = vmatpush1.bf16.msra.mxu0 0
      %621 = vmatprep.subr.bf16.mxu0 0
      %622 = vmatpush1.bf16.msra.mxu0 0
      %623 = vmatprep.subr.bf16.mxu0 0
      %624 = vmatpush1.bf16.msra.mxu0 0
      %625 = vmatprep.subr.bf16.mxu0 0
      %626 = vmatpush1.bf16.msra.mxu0 0
      %627 = vmatprep.subr.bf16.mxu0 0
      %628 = vmatpush1.bf16.msra.mxu0 0
      %629 = vmatprep.subr.bf16.mxu0 0
      %630 = vmatpush1.bf16.msra.mxu0 0
      %631 = vmatprep.subr.bf16.mxu0 0
      %632 = vmatpush1.bf16.msra.mxu0 0
      %633 = vmatprep.subr.bf16.mxu0 0
      %634 = vmatpush1.bf16.msra.mxu0 0
      %635 = vmatprep.subr.bf16.mxu0 0
      %636 = vmatpush1.bf16.msra.mxu0 0
      %637 = vmatprep.subr.bf16.mxu0 0
      %638 = vmatpush1.bf16.msra.mxu0 0
      %639 = vmatprep.subr.bf16.mxu0 0
      %640 = vmatpush1.bf16.msra.mxu0 0
      %641 = vmatprep.subr.bf16.mxu0 0
      %642 = vmatpush1.bf16.msra.mxu0 0
      %643 = vmatprep.subr.bf16.mxu0 0
      %644 = vmatpush1.bf16.msra.mxu0 0
      %645 = vmatprep.subr.bf16.mxu0 0
      %646 = vmatpush1.bf16.msra.mxu0 0
      %647 = vmatprep.subr.bf16.mxu0 0
      %648 = vmatpush1.bf16.msra.mxu0 0
      %649 = vmatprep.mubr.bf16.mxu0 0
      %650 = vmatmul.mubr.bf16.gmra.mrb[0].mxu0 %v615
      %v651 = vpop.f32.mrb[0].mxu0
      %v652 = vadd.f32 0.0, %v651
      %v653 = vpop.f32.mrb[0].mxu0
      %v654 = vpop.f32.mrb[0].mxu0
      %v655 = vpop.f32.mrb[0].mxu0
      %656 = vdwg.mxu0
      %658 = vrot.lane.b32.xlu0 %v652, 24
      %v659 = vpop.permute.xlu0 %658
      %vm661 = vcmask 261312
      %662 = vst.msk [vmem:[%s193] sm:$0xff] %vm661, %v659
      %p663 = scmp.lt.s32.totalorder %s15, 1
      %s664 = scalar_select %p663, %s15, 1
      %s665 = smul.addr %s664, 8
      %s666 = scalar_lea.vmem %s2, %s665
      %p667 = scmp.lt.s32.totalorder %s15, 1
      %s668 = scalar_select %p667, %s15, 1
      %s669 = smul.addr %s668, 4
      %s670 = smul.addr %s669, 8
      %s671 = scalar_lea.vmem %s3, %s670
      // Predicated region
      $region29: #{decoder_forward.21} parent=27 // pred_check
        %p672 = pneg %p85
      $region30: #{decoder_forward.21} parent=27 // pred_check_branch
        %674 = sbr.rel (%p672) target = $region32
      $region31: #{decoder_forward.21} parent=27 // pred_region
        _
      $region32: #{decoder_forward.21} parent=27 // pred_fallthru
        _
      // Predicated region
      $region33: #{decoder_forward.21} parent=27 // pred_check
        %p675 = pneg %p111
      $region34: #{decoder_forward.21} parent=27 // pred_check_branch
        %677 = sbr.rel (%p675) target = $region36
      $region35: #{decoder_forward.21} parent=27 // pred_region
        _
      $region36: #{decoder_forward.21} parent=27 // pred_fallthru
        _
    $region28: #{decoder_forward.21} parent=5 // pred_fallthru
      _
    %p678 = scmp.le.s32.totalorder 2, %s10
    // Predicated region
    $region37: #{decoder_forward.21} parent=5 // pred_check
      %p679 = pneg %p678
    $region38: #{decoder_forward.21} parent=5 // pred_check_branch
      %681 = sbr.rel (%p679) target = $region40
    $region39: #{decoder_forward.21} parent=5 // pred_region
      %s682 = ssub.s32 %s10, 2
      // Predicated region
      $region41: #{decoder_forward.21} parent=39 // pred_check
        %p683 = pneg %p91
      $region42: #{decoder_forward.21} parent=39 // pred_check_branch
        %685 = sbr.rel (%p683) target = $region44
      $region43: #{decoder_forward.21} parent=39 // pred_region
        %p686 = scmp.lt.s32.totalorder %s16, 1
        %s687 = scalar_select %p686, %s16, 1
        %s688 = smul.addr %s687, 8
        %s689 = scalar_lea.vmem %s2, %s688
      $region44: #{decoder_forward.21} parent=39 // pred_fallthru
        _
      // Predicated region
      $region45: #{decoder_forward.21} parent=39 // pred_check
        %p690 = pneg %p117
      $region46: #{decoder_forward.21} parent=39 // pred_check_branch
        %692 = sbr.rel (%p690) target = $region48
      $region47: #{decoder_forward.21} parent=39 // pred_region
        %p693 = scmp.lt.s32.totalorder %s16, 1
        %s694 = scalar_select %p693, %s16, 1
        %s695 = smul.addr %s694, 4
        %s696 = smul.addr %s695, 8
        %s697 = scalar_lea.vmem %s3, %s696
      $region48: #{decoder_forward.21} parent=39 // pred_fallthru
        _
    $region40: #{decoder_forward.21} parent=5 // pred_fallthru
      _
  $region6: #{decoder_forward.21} parent=0 // loop_footer
    %s14 = sadd.s32 1, %s10
  $region7: #{decoder_forward.21} parent=0 // loop_footer_branch
    %9 = sbr.rel target = $region3
  $region8: #{decoder_forward.21} parent=0 // loop_exit
    _

// kernel: decoder_forward.23
$region0: #{decoder_forward.23}
  #allocation0 [shape = 'u32[]', space=smem, size = 0x4, offset = 0x4, fixed_abs, tag = 'smem constant byte address 0x4 - core index']
  #allocation1 [shape = 'u32[144,128]{1,0:T(1,128)}', space=vmem, size = 0x12000, scoped, tag = 'internal scratch']
  #allocation2 [shape = 'f32[8,32]{1,0:T(8,128)}', space=vmem, size = 0x1000, scoped, tag = 'scratch operand']
  %s0 = inlined_call_operand.vmem [shape: f32[16,32], index: 0, kind: input, shape index: {}]
  %s1 = inlined_call_operand.vmem [shape: bf16[32,64], index: 1, kind: input, shape index: {}]
  %s2 = inlined_call_operand.vmem [shape: f32[1,64], index: 2, kind: input, shape index: {}]
  %s3 = inlined_call_operand.vmem [shape: bf16[64,32], index: 3, kind: input, shape index: {}]
  %s4 = inlined_call_operand.vmem [shape: f32[1,32], index: 4, kind: input, shape index: {}]
  %s5 = inlined_call_operand.vmem [shape: f32[1,32], index: 5, kind: input, shape index: {}]
  %s6 = inlined_call_operand.vmem [shape: f32[1,32], index: 6, kind: input, shape index: {}]
  %s7 = inlined_call_operand.vmem [shape: f32[16,32], index: 7, kind: output, shape index: {}]
  %s8 = sld [smem:[#allocation0]]
  $region69: #{decoder_forward.23} parent=0
    _
  %s10 = ssub.s32 1, %s8
  %s11 = scalar_select 0, %s10, %s8
  loop: start=0, step=1, limit=4
  $region2: #{decoder_forward.23} parent=0 // loop_pre_header
    _
  $region3: #{decoder_forward.23} parent=0 // loop_header
    %s13 = sphi 0, %s17
    %p14 = scmp.ge.s32.totalorder %s13, 4
    %s20 = sphi 0, %s32
    %s21 = sphi 0, %s28
    %s22 = sphi 0, %s20
    %s23 = sphi 0, %s21
    %s24 = sphi 0, %s22
    %s25 = sphi 0, %s23
    %s35 = sphi 0, %s37
    %s38 = sphi 0, %s35
    %s39 = sphi 0, %s38
    %s55 = sphi 0, %s39
    %s61 = sphi 0, %s63
    %s64 = sphi 0, %s61
    %s65 = sphi 0, %s64
    %s81 = sphi 0, %s65
    %s87 = sphi 0, %s89
    %s90 = sphi 0, %s87
    %s91 = sphi 0, %s90
    %s107 = sphi 0, %s91
    %s113 = sphi 0, %s115
    %s116 = sphi 0, %s113
    %s117 = sphi 0, %s116
    %s133 = sphi 0, %s117
    %s137 = sphi 0, %s137
    %s139 = sphi 0, %s137
    %s140 = sphi 0, %s139
    %s154 = sphi 0, %s140
    %s158 = sphi 0, %s158
    %s160 = sphi 0, %s158
    %s161 = sphi 0, %s160
    %s175 = sphi 0, %s161
    %s179 = sphi 0, %s179
    %s181 = sphi 0, %s179
    %s182 = sphi 0, %s181
    %s196 = sphi 0, %s182
    %s202 = sphi 0, %s204
    %s205 = sphi 0, %s202
    %s206 = sphi 0, %s205
    %s222 = sphi 0, %s206
  $region4: #{decoder_forward.23} parent=0 // loop_header_branch
    %16 = sbr.rel (%p14) target = $region8
  $region5: #{decoder_forward.23} parent=0 // loop_body
    %s18 = ssub.s32 %s13, 1
    %s19 = ssub.s32 %s13, 2
    %s26 = sadd.s32 1, %s21
    %p27 = scmp.ge.s32.totalorder %s26, 1
    %s28 = scalar_select %p27, 0, %s26
    %s29 = sadd.s32 1, %s20
    %s30 = scalar_select %p27, %s29, %s20
    %p31 = scmp.ge.s32.totalorder %s30, 2
    %s32 = scalar_select %p31, 0, %s30
    %s33 = ssub.s32 %s20, %s32
    %p34 = scmp.eq.s32.totalorder %s33, 0
    %s36 = sadd.s32 %s35, 1
    %s37 = scalar_select %p34, %s35, %s36
    %p40 = pneg %p34
    %p41 = scmp.eq.s32.totalorder %s13, 1
    %p42 = por %p40, %p41
    %p43 = scmp.ne.s32.totalorder %s35, %s38
    %p44 = scmp.eq.s32.totalorder %s13, 0
    %p45 = por %p43, %p44
    %p46 = scmp.ne.s32.totalorder %s35, %s38
    %p47 = scmp.eq.s32.totalorder %s18, 1
    %p48 = por %p46, %p47
    %p49 = scmp.ne.s32.totalorder %s38, %s39
    %p50 = scmp.eq.s32.totalorder %s18, 0
    %p51 = por %p49, %p50
    %p52 = scmp.ne.s32.totalorder %s38, %s39
    %p53 = scmp.eq.s32.totalorder %s19, 1
    %p54 = por %p52, %p53
    %p56 = scmp.ne.s32.totalorder %s39, %s55
    %p57 = scmp.eq.s32.totalorder %s19, 0
    %p58 = por %p56, %p57
    %s59 = ssub.s32 %s21, %s28
    %p60 = scmp.eq.s32.totalorder %s59, 0
    %s62 = sadd.s32 %s61, 1
    %s63 = scalar_select %p60, %s61, %s62
    %p66 = pneg %p60
    %p67 = scmp.eq.s32.totalorder %s13, 1
    %p68 = por %p66, %p67
    %p69 = scmp.ne.s32.totalorder %s61, %s64
    %p70 = scmp.eq.s32.totalorder %s13, 0
    %p71 = por %p69, %p70
    %p72 = scmp.ne.s32.totalorder %s61, %s64
    %p73 = scmp.eq.s32.totalorder %s18, 1
    %p74 = por %p72, %p73
    %p75 = scmp.ne.s32.totalorder %s64, %s65
    %p76 = scmp.eq.s32.totalorder %s18, 0
    %p77 = por %p75, %p76
    %p78 = scmp.ne.s32.totalorder %s64, %s65
    %p79 = scmp.eq.s32.totalorder %s19, 1
    %p80 = por %p78, %p79
    %p82 = scmp.ne.s32.totalorder %s65, %s81
    %p83 = scmp.eq.s32.totalorder %s19, 0
    %p84 = por %p82, %p83
    %s85 = ssub.s32 %s21, %s28
    %p86 = scmp.eq.s32.totalorder %s85, 0
    %s88 = sadd.s32 %s87, 1
    %s89 = scalar_select %p86, %s87, %s88
    %p92 = pneg %p86
    %p93 = scmp.eq.s32.totalorder %s13, 1
    %p94 = por %p92, %p93
    %p95 = scmp.ne.s32.totalorder %s87, %s90
    %p96 = scmp.eq.s32.totalorder %s13, 0
    %p97 = por %p95, %p96
    %p98 = scmp.ne.s32.totalorder %s87, %s90
    %p99 = scmp.eq.s32.totalorder %s18, 1
    %p100 = por %p98, %p99
    %p101 = scmp.ne.s32.totalorder %s90, %s91
    %p102 = scmp.eq.s32.totalorder %s18, 0
    %p103 = por %p101, %p102
    %p104 = scmp.ne.s32.totalorder %s90, %s91
    %p105 = scmp.eq.s32.totalorder %s19, 1
    %p106 = por %p104, %p105
    %p108 = scmp.ne.s32.totalorder %s91, %s107
    %p109 = scmp.eq.s32.totalorder %s19, 0
    %p110 = por %p108, %p109
    %s111 = ssub.s32 %s21, %s28
    %p112 = scmp.eq.s32.totalorder %s111, 0
    %s114 = sadd.s32 %s113, 1
    %s115 = scalar_select %p112, %s113, %s114
    %p118 = pneg %p112
    %p119 = scmp.eq.s32.totalorder %s13, 1
    %p120 = por %p118, %p119
    %p121 = scmp.ne.s32.totalorder %s113, %s116
    %p122 = scmp.eq.s32.totalorder %s13, 0
    %p123 = por %p121, %p122
    %p124 = scmp.ne.s32.totalorder %s113, %s116
    %p125 = scmp.eq.s32.totalorder %s18, 1
    %p126 = por %p124, %p125
    %p127 = scmp.ne.s32.totalorder %s116, %s117
    %p128 = scmp.eq.s32.totalorder %s18, 0
    %p129 = por %p127, %p128
    %p130 = scmp.ne.s32.totalorder %s116, %s117
    %p131 = scmp.eq.s32.totalorder %s19, 1
    %p132 = por %p130, %p131
    %p134 = scmp.ne.s32.totalorder %s117, %s133
    %p135 = scmp.eq.s32.totalorder %s19, 0
    %p136 = por %p134, %p135
    %s138 = sadd.s32 %s137, 1
    %p141 = scmp.eq.s32.totalorder %s13, 1
    %p142 = scmp.ne.s32.totalorder %s137, %s139
    %p143 = scmp.eq.s32.totalorder %s13, 0
    %p144 = por %p142, %p143
    %p145 = scmp.ne.s32.totalorder %s137, %s139
    %p146 = scmp.eq.s32.totalorder %s18, 1
    %p147 = por %p145, %p146
    %p148 = scmp.ne.s32.totalorder %s139, %s140
    %p149 = scmp.eq.s32.totalorder %s18, 0
    %p150 = por %p148, %p149
    %p151 = scmp.ne.s32.totalorder %s139, %s140
    %p152 = scmp.eq.s32.totalorder %s19, 1
    %p153 = por %p151, %p152
    %p155 = scmp.ne.s32.totalorder %s140, %s154
    %p156 = scmp.eq.s32.totalorder %s19, 0
    %p157 = por %p155, %p156
    %s159 = sadd.s32 %s158, 1
    %p162 = scmp.eq.s32.totalorder %s13, 1
    %p163 = scmp.ne.s32.totalorder %s158, %s160
    %p164 = scmp.eq.s32.totalorder %s13, 0
    %p165 = por %p163, %p164
    %p166 = scmp.ne.s32.totalorder %s158, %s160
    %p167 = scmp.eq.s32.totalorder %s18, 1
    %p168 = por %p166, %p167
    %p169 = scmp.ne.s32.totalorder %s160, %s161
    %p170 = scmp.eq.s32.totalorder %s18, 0
    %p171 = por %p169, %p170
    %p172 = scmp.ne.s32.totalorder %s160, %s161
    %p173 = scmp.eq.s32.totalorder %s19, 1
    %p174 = por %p172, %p173
    %p176 = scmp.ne.s32.totalorder %s161, %s175
    %p177 = scmp.eq.s32.totalorder %s19, 0
    %p178 = por %p176, %p177
    %s180 = sadd.s32 %s179, 1
    %p183 = scmp.eq.s32.totalorder %s13, 1
    %p184 = scmp.ne.s32.totalorder %s179, %s181
    %p185 = scmp.eq.s32.totalorder %s13, 0
    %p186 = por %p184, %p185
    %p187 = scmp.ne.s32.totalorder %s179, %s181
    %p188 = scmp.eq.s32.totalorder %s18, 1
    %p189 = por %p187, %p188
    %p190 = scmp.ne.s32.totalorder %s181, %s182
    %p191 = scmp.eq.s32.totalorder %s18, 0
    %p192 = por %p190, %p191
    %p193 = scmp.ne.s32.totalorder %s181, %s182
    %p194 = scmp.eq.s32.totalorder %s19, 1
    %p195 = por %p193, %p194
    %p197 = scmp.ne.s32.totalorder %s182, %s196
    %p198 = scmp.eq.s32.totalorder %s19, 0
    %p199 = por %p197, %p198
    %s200 = ssub.s32 %s20, %s32
    %p201 = scmp.eq.s32.totalorder %s200, 0
    %s203 = sadd.s32 %s202, 1
    %s204 = scalar_select %p201, %s202, %s203
    %p207 = pneg %p201
    %p208 = scmp.eq.s32.totalorder %s13, 1
    %p209 = por %p207, %p208
    %p210 = scmp.ne.s32.totalorder %s202, %s205
    %p211 = scmp.eq.s32.totalorder %s13, 0
    %p212 = por %p210, %p211
    %p213 = scmp.ne.s32.totalorder %s202, %s205
    %p214 = scmp.eq.s32.totalorder %s18, 1
    %p215 = por %p213, %p214
    %p216 = scmp.ne.s32.totalorder %s205, %s206
    %p217 = scmp.eq.s32.totalorder %s18, 0
    %p218 = por %p216, %p217
    %p219 = scmp.ne.s32.totalorder %s205, %s206
    %p220 = scmp.eq.s32.totalorder %s19, 1
    %p221 = por %p219, %p220
    %p223 = scmp.ne.s32.totalorder %s206, %s222
    %p224 = scmp.eq.s32.totalorder %s19, 0
    %p225 = por %p223, %p224
    %p226 = scmp.le.s32.totalorder 1, %s13
    %p227 = scmp.lt.s32.totalorder %s13, 3
    %p228 = pnand %p226, %p227
    %p229 = pneg %p228
    // Predicated region
    $region9: #{decoder_forward.23} parent=5 // pred_check
      _
    $region10: #{decoder_forward.23} parent=5 // pred_check_branch
      %231 = sbr.rel (%p228) target = $region12
    $region11: #{decoder_forward.23} parent=5 // pred_region
      %s232 = ssub.s32 %s13, 1
      // Predicated region
      $region13: #{decoder_forward.23} parent=11 // pred_check
        %p233 = pneg %p77
      $region14: #{decoder_forward.23} parent=11 // pred_check_branch
        %235 = sbr.rel (%p233) target = $region16
      $region15: #{decoder_forward.23} parent=11 // pred_region
        %p236 = scmp.lt.s32.totalorder %s23, 0
        %s237 = scalar_select %p236, %s23, 0
        %s238 = smul.addr %s237, 4
        %s239 = scalar_lea.vmem %s1, %s238
      $region16: #{decoder_forward.23} parent=11 // pred_fallthru
        _
      // Predicated region
      $region17: #{decoder_forward.23} parent=11 // pred_check
        %p240 = pneg %p103
      $region18: #{decoder_forward.23} parent=11 // pred_check_branch
        %242 = sbr.rel (%p240) target = $region20
      $region19: #{decoder_forward.23} parent=11 // pred_region
        %p243 = scmp.lt.s32.totalorder %s23, 0
        %s244 = scalar_select %p243, %s23, 0
        %s245 = scalar_lea.vmem %s2, %s244
      $region20: #{decoder_forward.23} parent=11 // pred_fallthru
        _
      // Predicated region
      $region21: #{decoder_forward.23} parent=11 // pred_check
        %p246 = pneg %p129
      $region22: #{decoder_forward.23} parent=11 // pred_check_branch
        %248 = sbr.rel (%p246) target = $region24
      $region23: #{decoder_forward.23} parent=11 // pred_region
        %s249 = smul.u32 8, %s23
        %p250 = scmp.lt.s32.totalorder %s249, 7
        %s251 = scalar_select %p250, %s249, 7
        %s252 = smul.addr %s251, 4
        %s253 = scalar_lea.vmem %s3, %s252
        %s254 = smul.u32 8, %s23
      $region24: #{decoder_forward.23} parent=11 // pred_fallthru
        _
      // Predicated region
      $region25: #{decoder_forward.23} parent=11 // pred_check
        %p255 = pneg %p150
      $region26: #{decoder_forward.23} parent=11 // pred_check_branch
        %257 = sbr.rel (%p255) target = $region28
      $region27: #{decoder_forward.23} parent=11 // pred_region
        _
      $region28: #{decoder_forward.23} parent=11 // pred_fallthru
        _
      // Predicated region
      $region29: #{decoder_forward.23} parent=11 // pred_check
        %p258 = pneg %p171
      $region30: #{decoder_forward.23} parent=11 // pred_check_branch
        %260 = sbr.rel (%p258) target = $region32
      $region31: #{decoder_forward.23} parent=11 // pred_region
        _
      $region32: #{decoder_forward.23} parent=11 // pred_fallthru
        _
      // Predicated region
      $region33: #{decoder_forward.23} parent=11 // pred_check
        %p261 = pneg %p192
      $region34: #{decoder_forward.23} parent=11 // pred_check_branch
        %263 = sbr.rel (%p261) target = $region36
      $region35: #{decoder_forward.23} parent=11 // pred_region
        _
      $region36: #{decoder_forward.23} parent=11 // pred_fallthru
        _
    $region12: #{decoder_forward.23} parent=5 // pred_fallthru
      _
    %p264 = scmp.lt.s32.totalorder %s13, 2
    // Predicated region
    $region37: #{decoder_forward.23} parent=5 // pred_check
      %p265 = pneg %p264
    $region38: #{decoder_forward.23} parent=5 // pred_check_branch
      %267 = sbr.rel (%p265) target = $region40
    $region39: #{decoder_forward.23} parent=5 // pred_region
      // Predicated region
      $region41: #{decoder_forward.23} parent=39 // pred_check
        %p268 = pneg %p45
      $region42: #{decoder_forward.23} parent=39 // pred_check_branch
        %270 = sbr.rel (%p268) target = $region44
      $region43: #{decoder_forward.23} parent=39 // pred_region
        %p271 = scmp.lt.s32.totalorder %s20, 1
        %s272 = scalar_select %p271, %s20, 1
        %s273 = smul.addr %s272, 8
        %s274 = scalar_lea.vmem %s0, %s273
      $region44: #{decoder_forward.23} parent=39 // pred_fallthru
        _
    $region40: #{decoder_forward.23} parent=5 // pred_fallthru
      _
    %p275 = scmp.le.s32.totalorder 1, %s13
    %p276 = scmp.lt.s32.totalorder %s13, 3
    %p277 = pnand %p275, %p276
    %p278 = pneg %p277
    // Predicated region
    $region45: #{decoder_forward.23} parent=5 // pred_check
      _
    $region46: #{decoder_forward.23} parent=5 // pred_check_branch
      %280 = sbr.rel (%p277) target = $region48
    $region47: #{decoder_forward.23} parent=5 // pred_region
      %s281 = ssub.s32 %s13, 1
      %p282 = scmp.lt.s32.totalorder %s22, 1
      %s283 = scalar_select %p282, %s22, 1
      %s284 = smul.addr %s283, 8
      %s285 = scalar_lea.vmem %s0, %s284
      %p286 = pneg %p51
      %p287 = pneg %p48
      %p288 = scmp.lt.s32.totalorder %s23, 0
      %s289 = scalar_select %p288, %s23, 0
      %s290 = smul.addr %s289, 4
      %s291 = scalar_lea.vmem %s1, %s290
      %p292 = pneg %p77
      %p293 = pneg %p74
      %p294 = scmp.lt.s32.totalorder %s23, 0
      %s295 = scalar_select %p294, %s23, 0
      %s296 = scalar_lea.vmem %s2, %s295
      %p297 = pneg %p103
      %p298 = pneg %p100
      %s299 = smul.u32 8, %s23
      %p300 = scmp.lt.s32.totalorder %s299, 7
      %s301 = scalar_select %p300, %s299, 7
      %s302 = smul.addr %s301, 4
      %s303 = scalar_lea.vmem %s3, %s302
      %p304 = pneg %p129
      %p305 = pneg %p126
      %p306 = pneg %p150
      %p307 = pneg %p147
      %p308 = pneg %p171
      %p309 = pneg %p168
      %p310 = pneg %p192
      %p311 = pneg %p189
      %p312 = pneg %p218
      %p313 = pneg %p215
      %p314 = scmp.lt.s32.totalorder %s22, 1
      %s315 = scalar_select %p314, %s22, 1
      %s316 = smul.addr %s315, 8
      %s317 = scalar_lea.vmem %s7, %s316
      %p318 = scmp.lt.s32.totalorder %s22, 1
      %s319 = scalar_select %p318, %s22, 1
      %s320 = smul.addr %s319, 8
      %s321 = scalar_lea.vmem %s0, %s320
      %p322 = scmp.lt.s32.totalorder %s23, 0
      %s323 = scalar_select %p322, %s23, 0
      %s324 = smul.addr %s323, 4
      %s325 = scalar_lea.vmem %s1, %s324
      %p326 = scmp.lt.s32.totalorder %s23, 0
      %s327 = scalar_select %p326, %s23, 0
      %s328 = scalar_lea.vmem %s2, %s327
      %s329 = smul.u32 8, %s23
      %p330 = scmp.lt.s32.totalorder %s329, 7
      %s331 = scalar_select %p330, %s329, 7
      %s332 = smul.addr %s331, 4
      %s333 = scalar_lea.vmem %s3, %s332
      %s334 = smul.u32 8, %s23
      %p335 = scmp.lt.s32.totalorder %s22, 1
      %s336 = scalar_select %p335, %s22, 1
      %s337 = smul.addr %s336, 8
      %s338 = scalar_lea.vmem %s7, %s337
      %p340 = scmp.eq.s32.totalorder %s23, 0
      // Predicated region
      $region49: #{decoder_forward.23} parent=47 // pred_check
        %p341 = pneg %p340
      $region50: #{decoder_forward.23} parent=47 // pred_check_branch
        %343 = sbr.rel (%p341) target = $region52
      $region51: #{decoder_forward.23} parent=47 // pred_region
        %vm344 = vcmask 261120
        %345 = vst.msk [vmem:[#allocation2] sm:$0xff] %vm344, 0.0
      $region52: #{decoder_forward.23} parent=47 // pred_fallthru
        _
      %v346 = vld [vmem:[%s321] sm:$0xff]
      %v347 = vpack.c.bf16 %v346, %v346
      %v348 = vld [vmem:[%s325] sm:$0xf]
      %v349 = vld [vmem:[%s325 + $0x4] sm:$0xf]
      %v350 = vld [vmem:[%s325 + $0x8] sm:$0xf]
      %v351 = vld [vmem:[%s325 + $0xc] sm:$0xf]
      %v352 = vld [vmem:[%s328] sm:$0x1]
      %v354 = vlaneseq
      %v355 = vshrl.u32 %v354, 7
      %v356 = vsub.s32 0, %v355
      %v357 = vrot.slane %v352, %v356
      %v363 = vunpack.c.l.b16 %v348
      %v364 = vunpack.c.l.b16 %v349
      %v365 = vunpack.c.l.b16 %v350
      %v366 = vunpack.c.l.b16 %v351
      %v367 = vpack.c.b16 %v364, %v363
      %v368 = vpack.c.b16 %v366, %v365
      %vm371 = vcmask 261120
      %v373 = vsel %vm371, %v347, 0
      %375 = vmatprep.subr.bf16.mxu0 0
      %376 = vmatpush1.bf16.msra.mxu0 %v367
      %377 = vmatprep.subr.bf16.mxu0 0
      %378 = vmatpush1.bf16.msra.mxu0 %v368
      %379 = vmatprep.subr.bf16.mxu0 0
      %380 = vmatpush1.bf16.msra.mxu0 0
      %381 = vmatprep.subr.bf16.mxu0 0
      %382 = vmatpush1.bf16.msra.mxu0 0
      %383 = vmatprep.subr.bf16.mxu0 0
      %384 = vmatpush1.bf16.msra.mxu0 0
      %385 = vmatprep.subr.bf16.mxu0 0
      %386 = vmatpush1.bf16.msra.mxu0 0
      %387 = vmatprep.subr.bf16.mxu0 0
      %388 = vmatpush1.bf16.msra.mxu0 0
      %389 = vmatprep.subr.bf16.mxu0 0
      %390 = vmatpush1.bf16.msra.mxu0 0
      %391 = vmatprep.subr.bf16.mxu0 0
      %392 = vmatpush1.bf16.msra.mxu0 0
      %393 = vmatprep.subr.bf16.mxu0 0
      %394 = vmatpush1.bf16.msra.mxu0 0
      %395 = vmatprep.subr.bf16.mxu0 0
      %396 = vmatpush1.bf16.msra.mxu0 0
      %397 = vmatprep.subr.bf16.mxu0 0
      %398 = vmatpush1.bf16.msra.mxu0 0
      %399 = vmatprep.subr.bf16.mxu0 0
      %400 = vmatpush1.bf16.msra.mxu0 0
      %401 = vmatprep.subr.bf16.mxu0 0
      %402 = vmatpush1.bf16.msra.mxu0 0
      %403 = vmatprep.subr.bf16.mxu0 0
      %404 = vmatpush1.bf16.msra.mxu0 0
      %405 = vmatprep.subr.bf16.mxu0 0
      %406 = vmatpush1.bf16.msra.mxu0 0
      %407 = vmatprep.mubr.bf16.mxu0 0
      %408 = vmatmul.mubr.bf16.gmra.mrb[0].mxu0 %v373
      %v409 = vpop.f32.mrb[0].mxu0
      %v410 = vadd.f32 %v357, %v409
      %v411 = vpop.f32.mrb[0].mxu0
      %v412 = vpop.f32.mrb[0].mxu0
      %v413 = vpop.f32.mrb[0].mxu0
      %414 = vdwg.mxu0
      %v415 = vmax.f32 %v410, 0.0
      %v416 = vld [vmem:[#allocation2] sm:$0xff]
      %v417 = vpack.c.bf16 %v415, %v415
      %v418 = vld [vmem:[%s333] sm:$0xf]
      %v419 = vld [vmem:[%s333 + $0x4] sm:$0xf]
      %v420 = vld [vmem:[%s333 + $0x8] sm:$0xf]
      %v421 = vld [vmem:[%s333 + $0xc] sm:$0xf]
      %v422 = vld [vmem:[%s333 + $0x10] sm:$0xf]
      %v423 = vld [vmem:[%s333 + $0x14] sm:$0xf]
      %v424 = vld [vmem:[%s333 + $0x18] sm:$0xf]
      %v425 = vld [vmem:[%s333 + $0x1c] sm:$0xf]
      %v434 = vunpack.c.l.b16 %v418
      %v435 = vunpack.c.l.b16 %v419
      %v436 = vunpack.c.l.b16 %v420
      %v437 = vunpack.c.l.b16 %v421
      %v438 = vunpack.c.l.b16 %v422
      %v439 = vunpack.c.l.b16 %v423
      %v440 = vunpack.c.l.b16 %v424
      %v441 = vunpack.c.l.b16 %v425
      %v442 = vpack.c.b16 %v435, %v434
      %v443 = vpack.c.b16 %v437, %v436
      %v444 = vpack.c.b16 %v439, %v438
      %v445 = vpack.c.b16 %v441, %v440
      %vm450 = vcmask 523264
      %v452 = vsel %vm450, %v417, 0
      %454 = vmatprep.subr.bf16.mxu0 0
      %455 = vmatpush1.bf16.msra.mxu0 %v442
      %456 = vmatprep.subr.bf16.mxu0 0
      %457 = vmatpush1.bf16.msra.mxu0 %v443
      %458 = vmatprep.subr.bf16.mxu0 0
      %459 = vmatpush1.bf16.msra.mxu0 %v444
      %460 = vmatprep.subr.bf16.mxu0 0
      %461 = vmatpush1.bf16.msra.mxu0 %v445
      %462 = vmatprep.subr.bf16.mxu0 0
      %463 = vmatpush1.bf16.msra.mxu0 0
      %464 = vmatprep.subr.bf16.mxu0 0
      %465 = vmatpush1.bf16.msra.mxu0 0
      %466 = vmatprep.subr.bf16.mxu0 0
      %467 = vmatpush1.bf16.msra.mxu0 0
      %468 = vmatprep.subr.bf16.mxu0 0
      %469 = vmatpush1.bf16.msra.mxu0 0
      %470 = vmatprep.subr.bf16.mxu0 0
      %471 = vmatpush1.bf16.msra.mxu0 0
      %472 = vmatprep.subr.bf16.mxu0 0
      %473 = vmatpush1.bf16.msra.mxu0 0
      %474 = vmatprep.subr.bf16.mxu0 0
      %475 = vmatpush1.bf16.msra.mxu0 0
      %476 = vmatprep.subr.bf16.mxu0 0
      %477 = vmatpush1.bf16.msra.mxu0 0
      %478 = vmatprep.subr.bf16.mxu0 0
      %479 = vmatpush1.bf16.msra.mxu0 0
      %480 = vmatprep.subr.bf16.mxu0 0
      %481 = vmatpush1.bf16.msra.mxu0 0
      %482 = vmatprep.subr.bf16.mxu0 0
      %483 = vmatpush1.bf16.msra.mxu0 0
      %484 = vmatprep.subr.bf16.mxu0 0
      %485 = vmatpush1.bf16.msra.mxu0 0
      %486 = vmatprep.mubr.bf16.mxu0 0
      %487 = vmatmul.mubr.bf16.gmra.mrb[0].mxu0 %v452
      %v488 = vpop.f32.mrb[0].mxu0
      %v489 = vadd.f32 0.0, %v488
      %v490 = vpop.f32.mrb[0].mxu0
      %v491 = vpop.f32.mrb[0].mxu0
      %v492 = vpop.f32.mrb[0].mxu0
      %493 = vdwg.mxu0
      %v494 = vadd.f32 %v416, %v489
      %495 = vst.msk [vmem:[#allocation2] sm:$0xff] %vm371, %v494
      // Predicated region
      $region53: #{decoder_forward.23} parent=47 // pred_check
        %p496 = pneg %p340
      $region54: #{decoder_forward.23} parent=47 // pred_check_branch
        %498 = sbr.rel (%p496) target = $region56
      $region55: #{decoder_forward.23} parent=47 // pred_region
        %v499 = vld [vmem:[#allocation2] sm:$0xff]
        %v500 = vld [vmem:[%s4] sm:$0x1]
        %v502 = vlaneseq
        %v503 = vshrl.u32 %v502, 7
        %v504 = vsub.s32 0, %v503
        %v505 = vrot.slane %v500, %v504
        %v507 = vadd.f32 %v499, %v505
        %v508 = vadd.f32 %v346, %v507
        %v509 = vld [vmem:[%s5] sm:$0x1]
        %v510 = vld [vmem:[%s6] sm:$0x1]
        %v511 = vsel %vm371, %v508, 0.0
        %512 = vadd.xlane.f32.xlu0 %v511
        %v513 = vpop.xlane.xlu0 %512
        %v514 = vrcp.pop 32.0
        %v515 = vmul.f32 %v513, %v514
        %v516 = vsub.f32 %v508, %v515
        %v517 = vmul.f32 %v516, %v516
        %v518 = vsel %vm371, %v517, 0.0
        %519 = vadd.xlane.f32.xlu0 %v518
        %v520 = vpop.xlane.xlu0 %519
        %v521 = vmul.f32 %v520, %v514
        %v522 = vadd.f32 %v521, 1e-05
        %v523 = vrsqrt.pop %v522
        %v524 = vmul.f32 %v516, %v523
        %v526 = vlaneseq
        %v527 = vshrl.u32 %v526, 7
        %v528 = vsub.s32 0, %v527
        %v529 = vrot.slane %v509, %v528
        %v531 = vmul.f32 %v524, %v529
        %v533 = vlaneseq
        %v534 = vshrl.u32 %v533, 7
        %v535 = vsub.s32 0, %v534
        %v536 = vrot.slane %v510, %v535
        %v538 = vadd.f32 %v531, %v536
        %539 = vst.msk [vmem:[%s338] sm:$0xff] %vm371, %v538
      $region56: #{decoder_forward.23} parent=47 // pred_fallthru
        _
      %p540 = scmp.lt.s32.totalorder %s22, 1
      %s541 = scalar_select %p540, %s22, 1
      %s542 = smul.addr %s541, 8
      %s543 = scalar_lea.vmem %s7, %s542
      // Predicated region
      $region57: #{decoder_forward.23} parent=47 // pred_check
        %p544 = pneg %p215
      $region58: #{decoder_forward.23} parent=47 // pred_check_branch
        %546 = sbr.rel (%p544) target = $region60
      $region59: #{decoder_forward.23} parent=47 // pred_region
        _
      $region60: #{decoder_forward.23} parent=47 // pred_fallthru
        _
    $region48: #{decoder_forward.23} parent=5 // pred_fallthru
      _
    %p547 = scmp.le.s32.totalorder 2, %s13
    // Predicated region
    $region61: #{decoder_forward.23} parent=5 // pred_check
      %p548 = pneg %p547
    $region62: #{decoder_forward.23} parent=5 // pred_check_branch
      %550 = sbr.rel (%p548) target = $region64
    $region63: #{decoder_forward.23} parent=5 // pred_region
      %s551 = ssub.s32 %s13, 2
      // Predicated region
      $region65: #{decoder_forward.23} parent=63 // pred_check
        %p552 = pneg %p221
      $region66: #{decoder_forward.23} parent=63 // pred_check_branch
        %554 = sbr.rel (%p552) target = $region68
      $region67: #{decoder_forward.23} parent=63 // pred_region
        %p555 = scmp.lt.s32.totalorder %s24, 1
        %s556 = scalar_select %p555, %s24, 1
        %s557 = smul.addr %s556, 8
        %s558 = scalar_lea.vmem %s7, %s557
      $region68: #{decoder_forward.23} parent=63 // pred_fallthru
        _
    $region64: #{decoder_forward.23} parent=5 // pred_fallthru
      _
  $region6: #{decoder_forward.23} parent=0 // loop_footer
    %s17 = sadd.s32 1, %s13
  $region7: #{decoder_forward.23} parent=0 // loop_footer_branch
    %12 = sbr.rel target = $region3
  $region8: #{decoder_forward.23} parent=0 // loop_exit
    _

</llo_original>
